<compile_context>
chip_gen: v7x
topology: tpu7x:2x2x1
jax: 0.10.0
libtpu: 0.0.40
codegen_flags: <defaults>
</compile_context>

<pallas_src>
import functools

import jax
import jax.numpy as jnp
from jax.experimental import pallas as pl
from jax.experimental.pallas import tpu as pltpu  # TPU backend (kept for future tuning)

EPS = 1e-5            # nn.BatchNorm2d default eps
LANES = 128           # TPU vreg lane width
# Contract the last dim of both operands (a @ b.T), i.e. the flash-attention "NT" pattern.
_NT_DIMS = (((1,), (1,)), ((), ()))


def _conv_bn_relu_kernel(x_ref, w_ref, gamma_ref, beta_ref, mask_ref, o_ref, *,
                         tap_shifts, chunk, n_chunks, m_valid, eps):
    """x_ref:    (S_pad, Cin)   flattened NHWC activation, zero-padded rows at the tail
       w_ref:    (KH*KW, Cout, Cin) one (Cout, Cin) matrix per conv tap
       gamma/beta: (Cout, 1)
       mask_ref: (1, S_out)     1.0 where the flat position is a valid conv output
       o_ref:    (Cout, S_out)  lane-dense output (normalized + ReLU; garbage at masked
                                positions, sliced away by the wrapper)."""
    cout = o_ref.shape[0]
    s1 = jnp.zeros((cout, 1), jnp.float32)   # sum(y)      over valid positions
    s2 = jnp.zeros((cout, 1), jnp.float32)   # sum(y*y)    over valid positions
    accs = []

    # ---- convolution: per 128-wide M chunk, accumulate the 9 taps on the MXU ----
    for m in range(n_chunks):
        base = m * chunk
        acc = None
        for k, s in enumerate(tap_shifts):
            # Sublane-shifted window of the activation slab: rows [base+s, base+s+chunk).
            xs = x_ref[base + s: base + s + chunk, :]                 # (chunk, Cin)
            d = jax.lax.dot_general(w_ref[k], xs, _NT_DIMS,
                                    preferred_element_type=jnp.float32)  # (Cout, chunk)
            acc = d if acc is None else acc + d

        # ---- one-pass masked statistics (sum and sum-of-squares together) ----
        msk = mask_ref[:, base: base + chunk]                         # (1, chunk)
        am = acc * msk
        s1 = s1 + jnp.sum(am, axis=1, keepdims=True)
        s2 = s2 + jnp.sum(am * acc, axis=1, keepdims=True)
        accs.append(acc)

    # ---- fold BN into a single per-channel scale/shift ----
    inv_m = 1.0 / m_valid
    mean = s1 * inv_m
    var = jnp.maximum(s2 * inv_m - mean * mean, 0.0)                  # clamp fp cancellation
    scale = gamma_ref[...] * jax.lax.rsqrt(var + eps)                 # (Cout, 1)
    shift = beta_ref[...] - mean * scale                              # (Cout, 1)

    # ---- normalize + ReLU, lane-aligned full-width stores ----
    for m in range(n_chunks):
        base = m * chunk
        o_ref[:, base: base + chunk] = jnp.maximum(accs[m] * scale + shift, 0.0)


@jax.jit
def conv_bn_relu(x_nchw, w_oihw, gamma, beta):
    N, Cin, H, W = x_nchw.shape
    Cout, _, KH, KW = w_oihw.shape
    OH, OW = H - KH + 1, W - KW + 1

    S = N * H * W                                     # full (n, h, w) flat domain
    chunk = LANES
    S_out = ((S + chunk - 1) // chunk) * chunk        # lane-aligned output width
    n_chunks = S_out // chunk
    max_shift = (KH - 1) * W + (KW - 1)
    S_pad = ((S_out + max_shift + 7) // 8) * 8        # rows needed incl. tap shifts

    # Flatten NHWC -> (S, Cin) (contiguous) and zero-pad the tail rows.
    x_flat = jnp.transpose(x_nchw, (0, 2, 3, 1)).reshape(S, Cin)
    x_flat = jnp.pad(x_flat, ((0, S_pad - S), (0, 0)))

    # One (Cout, Cin) weight matrix per tap, tap order (kh, kw).
    w_taps = jnp.transpose(w_oihw, (2, 3, 0, 1)).reshape(KH * KW, Cout, Cin)
    tap_shifts = tuple(kh * W + kw for kh in range(KH) for kw in range(KW))

    # Validity mask over the flattened full HxW domain (1 where h < OH and w < OW).
    valid_hw = (jnp.arange(H)[:, None] < OH) & (jnp.arange(W)[None, :] < OW)
    mask = jnp.broadcast_to(valid_hw[None], (N, H, W)).reshape(1, S).astype(jnp.float32)
    mask = jnp.pad(mask, ((0, 0), (0, S_out - S)))

    kernel = functools.partial(
        _conv_bn_relu_kernel,
        tap_shifts=tap_shifts, chunk=chunk, n_chunks=n_chunks,
        m_valid=float(N * OH * OW), eps=EPS)

    out_flat = pl.pallas_call(
        kernel,
        out_shape=jax.ShapeDtypeStruct((Cout, S_out), jnp.float32),
        in_specs=[
            pl.BlockSpec((S_pad, Cin), lambda: (0, 0)),
            pl.BlockSpec((KH * KW, Cout, Cin), lambda: (0, 0, 0)),
            pl.BlockSpec((Cout, 1), lambda: (0, 0)),
            pl.BlockSpec((Cout, 1), lambda: (0, 0)),
            pl.BlockSpec((1, S_out), lambda: (0, 0)),
        ],
        out_specs=pl.BlockSpec((Cout, S_out), lambda: (0, 0)),
    )(x_flat, w_taps, gamma.reshape(Cout, 1), beta.reshape(Cout, 1), mask)

    # Back to NCHW: keep only the valid OHxOW window of each image.
    out = out_flat[:, :S].reshape(Cout, N, H, W)[:, :, :OH, :OW]
    return jnp.transpose(out, (1, 0, 2, 3))


def reference(x_nchw, w_oihw, b, gamma, beta):
    y = jax.lax.conv_general_dilated(
        x_nchw, w_oihw, window_strides=(1, 1), padding="VALID",
        dimension_numbers=("NCHW", "OIHW", "NCHW"))
    y = y + b.reshape(1, -1, 1, 1)
    mean = jnp.mean(y, axis=(0, 2, 3), keepdims=True)
    var = jnp.mean((y - mean) ** 2, axis=(0, 2, 3), keepdims=True)
    xhat = (y - mean) * jax.lax.rsqrt(var + EPS)
    out = xhat * gamma.reshape(1, -1, 1, 1) + beta.reshape(1, -1, 1, 1)
    return jnp.maximum(out, 0.0)


if __name__ == "__main__":
    key = jax.random.PRNGKey(0)
    k_x, k_w, k_b = jax.random.split(key, 3)

    N, Cin, H, W = 2, 3, 16, 16
    Cout, KH, KW = 16, 3, 3

    x = jax.random.normal(k_x, (N, Cin, H, W), dtype=jnp.float32)

    # Deterministic parameter init (mimics PyTorch's uniform(-1/sqrt(fan_in), 1/sqrt(fan_in))).
    fan_in = Cin * KH * KW
    bound = 1.0 / jnp.sqrt(fan_in)
    w = jax.random.uniform(k_w, (Cout, Cin, KH, KW), jnp.float32, -bound, bound)
    b = jax.random.uniform(k_b, (Cout,), jnp.float32, -bound, bound)  # reference only: cancels under BN
    gamma = jnp.ones((Cout,), jnp.float32)   # BatchNorm2d weight init
    beta = jnp.zeros((Cout,), jnp.float32)   # BatchNorm2d bias init

    out = conv_bn_relu(x, w, gamma, beta)
    jax.block_until_ready(out)

    ref = reference(x, w, b, gamma, beta)
    assert out.shape == (N, Cout, H - KH + 1, W - KW + 1)
    max_err = float(jnp.max(jnp.abs(out - ref)))
    assert jnp.allclose(out, ref, atol=2e-4, rtol=2e-4), max_err

    print("KERNEL_OK")
</pallas_src>

<mosaic_0001>
module attributes {stable_mosaic.version = 11 : i64} {
  func.func @_conv_bn_relu_kernel(%arg0: memref<552x3xf32, #tpu.memory_space<vmem>>, %arg1: memref<9x16x3xf32, #tpu.memory_space<vmem>>, %arg2: memref<16x1xf32, #tpu.memory_space<vmem>>, %arg3: memref<16x1xf32, #tpu.memory_space<vmem>>, %arg4: memref<1x512xf32, #tpu.memory_space<vmem>>, %arg5: memref<16x512xf32, #tpu.memory_space<vmem>>) attributes {dimension_semantics = [], scalar_prefetch = 0 : i64, scratch_operands = 0 : i64, tpu.core_type = #tpu.core_type<tc>} {
    %cst = arith.constant 0.000000e+00 : f32
    %0 = vector.broadcast %cst : f32 to vector<16x1xf32>
    %cst_0 = arith.constant 0.000000e+00 : f32
    %1 = vector.broadcast %cst_0 : f32 to vector<16x1xf32>
    %c0 = arith.constant 0 : index
    %c0_1 = arith.constant 0 : index
    %2 = vector.load %arg0[%c0, %c0_1] : memref<552x3xf32, #tpu.memory_space<vmem>>, vector<128x3xf32>
    %c0_2 = arith.constant 0 : index
    %c0_3 = arith.constant 0 : index
    %c0_4 = arith.constant 0 : index
    %3 = vector.load %arg1[%c0_2, %c0_3, %c0_4] : memref<9x16x3xf32, #tpu.memory_space<vmem>>, vector<1x16x3xf32>
    %4 = vector.shape_cast %3 : vector<1x16x3xf32> to vector<16x3xf32>
    %cst_5 = arith.constant dense<0.000000e+00> : vector<16x128xf32>
    %5 = tpu.matmul %4, %2, %cst_5 {dimension_numbers = #tpu.dot_dimension_numbers<[1], [1], [0], [0], [0, 0, 1, 0], [], []>} : vector<16x3xf32>, vector<128x3xf32>, vector<16x128xf32> -> vector<16x128xf32>
    %c1 = arith.constant 1 : index
    %c0_6 = arith.constant 0 : index
    %6 = vector.load %arg0[%c1, %c0_6] : memref<552x3xf32, #tpu.memory_space<vmem>>, vector<128x3xf32>
    %c1_7 = arith.constant 1 : index
    %c0_8 = arith.constant 0 : index
    %c0_9 = arith.constant 0 : index
    %7 = vector.load %arg1[%c1_7, %c0_8, %c0_9] : memref<9x16x3xf32, #tpu.memory_space<vmem>>, vector<1x16x3xf32>
    %8 = vector.shape_cast %7 : vector<1x16x3xf32> to vector<16x3xf32>
    %cst_10 = arith.constant dense<0.000000e+00> : vector<16x128xf32>
    %9 = tpu.matmul %8, %6, %cst_10 {dimension_numbers = #tpu.dot_dimension_numbers<[1], [1], [0], [0], [0, 0, 1, 0], [], []>} : vector<16x3xf32>, vector<128x3xf32>, vector<16x128xf32> -> vector<16x128xf32>
    %10 = arith.addf %5, %9 : vector<16x128xf32>
    %c2 = arith.constant 2 : index
    %c0_11 = arith.constant 0 : index
    %11 = vector.load %arg0[%c2, %c0_11] : memref<552x3xf32, #tpu.memory_space<vmem>>, vector<128x3xf32>
    %c2_12 = arith.constant 2 : index
    %c0_13 = arith.constant 0 : index
    %c0_14 = arith.constant 0 : index
    %12 = vector.load %arg1[%c2_12, %c0_13, %c0_14] : memref<9x16x3xf32, #tpu.memory_space<vmem>>, vector<1x16x3xf32>
    %13 = vector.shape_cast %12 : vector<1x16x3xf32> to vector<16x3xf32>
    %cst_15 = arith.constant dense<0.000000e+00> : vector<16x128xf32>
    %14 = tpu.matmul %13, %11, %cst_15 {dimension_numbers = #tpu.dot_dimension_numbers<[1], [1], [0], [0], [0, 0, 1, 0], [], []>} : vector<16x3xf32>, vector<128x3xf32>, vector<16x128xf32> -> vector<16x128xf32>
    %15 = arith.addf %10, %14 : vector<16x128xf32>
    %c16 = arith.constant 16 : index
    %c0_16 = arith.constant 0 : index
    %16 = vector.load %arg0[%c16, %c0_16] : memref<552x3xf32, #tpu.memory_space<vmem>>, vector<128x3xf32>
    %c3 = arith.constant 3 : index
    %c0_17 = arith.constant 0 : index
    %c0_18 = arith.constant 0 : index
    %17 = vector.load %arg1[%c3, %c0_17, %c0_18] : memref<9x16x3xf32, #tpu.memory_space<vmem>>, vector<1x16x3xf32>
    %18 = vector.shape_cast %17 : vector<1x16x3xf32> to vector<16x3xf32>
    %cst_19 = arith.constant dense<0.000000e+00> : vector<16x128xf32>
    %19 = tpu.matmul %18, %16, %cst_19 {dimension_numbers = #tpu.dot_dimension_numbers<[1], [1], [0], [0], [0, 0, 1, 0], [], []>} : vector<16x3xf32>, vector<128x3xf32>, vector<16x128xf32> -> vector<16x128xf32>
    %20 = arith.addf %15, %19 : vector<16x128xf32>
    %c17 = arith.constant 17 : index
    %c0_20 = arith.constant 0 : index
    %21 = vector.load %arg0[%c17, %c0_20] : memref<552x3xf32, #tpu.memory_space<vmem>>, vector<128x3xf32>
    %c4 = arith.constant 4 : index
    %c0_21 = arith.constant 0 : index
    %c0_22 = arith.constant 0 : index
    %22 = vector.load %arg1[%c4, %c0_21, %c0_22] : memref<9x16x3xf32, #tpu.memory_space<vmem>>, vector<1x16x3xf32>
    %23 = vector.shape_cast %22 : vector<1x16x3xf32> to vector<16x3xf32>
    %cst_23 = arith.constant dense<0.000000e+00> : vector<16x128xf32>
    %24 = tpu.matmul %23, %21, %cst_23 {dimension_numbers = #tpu.dot_dimension_numbers<[1], [1], [0], [0], [0, 0, 1, 0], [], []>} : vector<16x3xf32>, vector<128x3xf32>, vector<16x128xf32> -> vector<16x128xf32>
    %25 = arith.addf %20, %24 : vector<16x128xf32>
    %c18 = arith.constant 18 : index
    %c0_24 = arith.constant 0 : index
    %26 = vector.load %arg0[%c18, %c0_24] : memref<552x3xf32, #tpu.memory_space<vmem>>, vector<128x3xf32>
    %c5 = arith.constant 5 : index
    %c0_25 = arith.constant 0 : index
    %c0_26 = arith.constant 0 : index
    %27 = vector.load %arg1[%c5, %c0_25, %c0_26] : memref<9x16x3xf32, #tpu.memory_space<vmem>>, vector<1x16x3xf32>
    %28 = vector.shape_cast %27 : vector<1x16x3xf32> to vector<16x3xf32>
    %cst_27 = arith.constant dense<0.000000e+00> : vector<16x128xf32>
    %29 = tpu.matmul %28, %26, %cst_27 {dimension_numbers = #tpu.dot_dimension_numbers<[1], [1], [0], [0], [0, 0, 1, 0], [], []>} : vector<16x3xf32>, vector<128x3xf32>, vector<16x128xf32> -> vector<16x128xf32>
    %30 = arith.addf %25, %29 : vector<16x128xf32>
    %c32 = arith.constant 32 : index
    %c0_28 = arith.constant 0 : index
    %31 = vector.load %arg0[%c32, %c0_28] : memref<552x3xf32, #tpu.memory_space<vmem>>, vector<128x3xf32>
    %c6 = arith.constant 6 : index
    %c0_29 = arith.constant 0 : index
    %c0_30 = arith.constant 0 : index
    %32 = vector.load %arg1[%c6, %c0_29, %c0_30] : memref<9x16x3xf32, #tpu.memory_space<vmem>>, vector<1x16x3xf32>
    %33 = vector.shape_cast %32 : vector<1x16x3xf32> to vector<16x3xf32>
    %cst_31 = arith.constant dense<0.000000e+00> : vector<16x128xf32>
    %34 = tpu.matmul %33, %31, %cst_31 {dimension_numbers = #tpu.dot_dimension_numbers<[1], [1], [0], [0], [0, 0, 1, 0], [], []>} : vector<16x3xf32>, vector<128x3xf32>, vector<16x128xf32> -> vector<16x128xf32>
    %35 = arith.addf %30, %34 : vector<16x128xf32>
    %c33 = arith.constant 33 : index
    %c0_32 = arith.constant 0 : index
    %36 = vector.load %arg0[%c33, %c0_32] : memref<552x3xf32, #tpu.memory_space<vmem>>, vector<128x3xf32>
    %c7 = arith.constant 7 : index
    %c0_33 = arith.constant 0 : index
    %c0_34 = arith.constant 0 : index
    %37 = vector.load %arg1[%c7, %c0_33, %c0_34] : memref<9x16x3xf32, #tpu.memory_space<vmem>>, vector<1x16x3xf32>
    %38 = vector.shape_cast %37 : vector<1x16x3xf32> to vector<16x3xf32>
    %cst_35 = arith.constant dense<0.000000e+00> : vector<16x128xf32>
    %39 = tpu.matmul %38, %36, %cst_35 {dimension_numbers = #tpu.dot_dimension_numbers<[1], [1], [0], [0], [0, 0, 1, 0], [], []>} : vector<16x3xf32>, vector<128x3xf32>, vector<16x128xf32> -> vector<16x128xf32>
    %40 = arith.addf %35, %39 : vector<16x128xf32>
    %c34 = arith.constant 34 : index
    %c0_36 = arith.constant 0 : index
    %41 = vector.load %arg0[%c34, %c0_36] : memref<552x3xf32, #tpu.memory_space<vmem>>, vector<128x3xf32>
    %c8 = arith.constant 8 : index
    %c0_37 = arith.constant 0 : index
    %c0_38 = arith.constant 0 : index
    %42 = vector.load %arg1[%c8, %c0_37, %c0_38] : memref<9x16x3xf32, #tpu.memory_space<vmem>>, vector<1x16x3xf32>
    %43 = vector.shape_cast %42 : vector<1x16x3xf32> to vector<16x3xf32>
    %cst_39 = arith.constant dense<0.000000e+00> : vector<16x128xf32>
    %44 = tpu.matmul %43, %41, %cst_39 {dimension_numbers = #tpu.dot_dimension_numbers<[1], [1], [0], [0], [0, 0, 1, 0], [], []>} : vector<16x3xf32>, vector<128x3xf32>, vector<16x128xf32> -> vector<16x128xf32>
    %45 = arith.addf %40, %44 : vector<16x128xf32>
    %c0_40 = arith.constant 0 : index
    %c0_41 = arith.constant 0 : index
    %46 = vector.load %arg4[%c0_40, %c0_41] : memref<1x512xf32, #tpu.memory_space<vmem>>, vector<1x128xf32>
    %47 = vector.broadcast %46 : vector<1x128xf32> to vector<16x128xf32>
    %48 = arith.mulf %45, %47 : vector<16x128xf32>
    %cst_42 = arith.constant dense<0.000000e+00> : vector<16xf32>
    %49 = vector.multi_reduction <add>, %48, %cst_42 [1] : vector<16x128xf32> to vector<16xf32>
    %50 = vector.shape_cast %49 : vector<16xf32> to vector<16x1xf32>
    %51 = arith.addf %0, %50 : vector<16x1xf32>
    %52 = arith.mulf %48, %45 : vector<16x128xf32>
    %cst_43 = arith.constant dense<0.000000e+00> : vector<16xf32>
    %53 = vector.multi_reduction <add>, %52, %cst_43 [1] : vector<16x128xf32> to vector<16xf32>
    %54 = vector.shape_cast %53 : vector<16xf32> to vector<16x1xf32>
    %55 = arith.addf %1, %54 : vector<16x1xf32>
    %c128 = arith.constant 128 : index
    %c0_44 = arith.constant 0 : index
    %56 = vector.load %arg0[%c128, %c0_44] : memref<552x3xf32, #tpu.memory_space<vmem>>, vector<128x3xf32>
    %c0_45 = arith.constant 0 : index
    %c0_46 = arith.constant 0 : index
    %c0_47 = arith.constant 0 : index
    %57 = vector.load %arg1[%c0_45, %c0_46, %c0_47] : memref<9x16x3xf32, #tpu.memory_space<vmem>>, vector<1x16x3xf32>
    %58 = vector.shape_cast %57 : vector<1x16x3xf32> to vector<16x3xf32>
    %cst_48 = arith.constant dense<0.000000e+00> : vector<16x128xf32>
    %59 = tpu.matmul %58, %56, %cst_48 {dimension_numbers = #tpu.dot_dimension_numbers<[1], [1], [0], [0], [0, 0, 1, 0], [], []>} : vector<16x3xf32>, vector<128x3xf32>, vector<16x128xf32> -> vector<16x128xf32>
    %c129 = arith.constant 129 : index
    %c0_49 = arith.constant 0 : index
    %60 = vector.load %arg0[%c129, %c0_49] : memref<552x3xf32, #tpu.memory_space<vmem>>, vector<128x3xf32>
    %c1_50 = arith.constant 1 : index
    %c0_51 = arith.constant 0 : index
    %c0_52 = arith.constant 0 : index
    %61 = vector.load %arg1[%c1_50, %c0_51, %c0_52] : memref<9x16x3xf32, #tpu.memory_space<vmem>>, vector<1x16x3xf32>
    %62 = vector.shape_cast %61 : vector<1x16x3xf32> to vector<16x3xf32>
    %cst_53 = arith.constant dense<0.000000e+00> : vector<16x128xf32>
    %63 = tpu.matmul %62, %60, %cst_53 {dimension_numbers = #tpu.dot_dimension_numbers<[1], [1], [0], [0], [0, 0, 1, 0], [], []>} : vector<16x3xf32>, vector<128x3xf32>, vector<16x128xf32> -> vector<16x128xf32>
    %64 = arith.addf %59, %63 : vector<16x128xf32>
    %c130 = arith.constant 130 : index
    %c0_54 = arith.constant 0 : index
    %65 = vector.load %arg0[%c130, %c0_54] : memref<552x3xf32, #tpu.memory_space<vmem>>, vector<128x3xf32>
    %c2_55 = arith.constant 2 : index
    %c0_56 = arith.constant 0 : index
    %c0_57 = arith.constant 0 : index
    %66 = vector.load %arg1[%c2_55, %c0_56, %c0_57] : memref<9x16x3xf32, #tpu.memory_space<vmem>>, vector<1x16x3xf32>
    %67 = vector.shape_cast %66 : vector<1x16x3xf32> to vector<16x3xf32>
    %cst_58 = arith.constant dense<0.000000e+00> : vector<16x128xf32>
    %68 = tpu.matmul %67, %65, %cst_58 {dimension_numbers = #tpu.dot_dimension_numbers<[1], [1], [0], [0], [0, 0, 1, 0], [], []>} : vector<16x3xf32>, vector<128x3xf32>, vector<16x128xf32> -> vector<16x128xf32>
    %69 = arith.addf %64, %68 : vector<16x128xf32>
    %c144 = arith.constant 144 : index
    %c0_59 = arith.constant 0 : index
    %70 = vector.load %arg0[%c144, %c0_59] : memref<552x3xf32, #tpu.memory_space<vmem>>, vector<128x3xf32>
    %c3_60 = arith.constant 3 : index
    %c0_61 = arith.constant 0 : index
    %c0_62 = arith.constant 0 : index
    %71 = vector.load %arg1[%c3_60, %c0_61, %c0_62] : memref<9x16x3xf32, #tpu.memory_space<vmem>>, vector<1x16x3xf32>
    %72 = vector.shape_cast %71 : vector<1x16x3xf32> to vector<16x3xf32>
    %cst_63 = arith.constant dense<0.000000e+00> : vector<16x128xf32>
    %73 = tpu.matmul %72, %70, %cst_63 {dimension_numbers = #tpu.dot_dimension_numbers<[1], [1], [0], [0], [0, 0, 1, 0], [], []>} : vector<16x3xf32>, vector<128x3xf32>, vector<16x128xf32> -> vector<16x128xf32>
    %74 = arith.addf %69, %73 : vector<16x128xf32>
    %c145 = arith.constant 145 : index
    %c0_64 = arith.constant 0 : index
    %75 = vector.load %arg0[%c145, %c0_64] : memref<552x3xf32, #tpu.memory_space<vmem>>, vector<128x3xf32>
    %c4_65 = arith.constant 4 : index
    %c0_66 = arith.constant 0 : index
    %c0_67 = arith.constant 0 : index
    %76 = vector.load %arg1[%c4_65, %c0_66, %c0_67] : memref<9x16x3xf32, #tpu.memory_space<vmem>>, vector<1x16x3xf32>
    %77 = vector.shape_cast %76 : vector<1x16x3xf32> to vector<16x3xf32>
    %cst_68 = arith.constant dense<0.000000e+00> : vector<16x128xf32>
    %78 = tpu.matmul %77, %75, %cst_68 {dimension_numbers = #tpu.dot_dimension_numbers<[1], [1], [0], [0], [0, 0, 1, 0], [], []>} : vector<16x3xf32>, vector<128x3xf32>, vector<16x128xf32> -> vector<16x128xf32>
    %79 = arith.addf %74, %78 : vector<16x128xf32>
    %c146 = arith.constant 146 : index
    %c0_69 = arith.constant 0 : index
    %80 = vector.load %arg0[%c146, %c0_69] : memref<552x3xf32, #tpu.memory_space<vmem>>, vector<128x3xf32>
    %c5_70 = arith.constant 5 : index
    %c0_71 = arith.constant 0 : index
    %c0_72 = arith.constant 0 : index
    %81 = vector.load %arg1[%c5_70, %c0_71, %c0_72] : memref<9x16x3xf32, #tpu.memory_space<vmem>>, vector<1x16x3xf32>
    %82 = vector.shape_cast %81 : vector<1x16x3xf32> to vector<16x3xf32>
    %cst_73 = arith.constant dense<0.000000e+00> : vector<16x128xf32>
    %83 = tpu.matmul %82, %80, %cst_73 {dimension_numbers = #tpu.dot_dimension_numbers<[1], [1], [0], [0], [0, 0, 1, 0], [], []>} : vector<16x3xf32>, vector<128x3xf32>, vector<16x128xf32> -> vector<16x128xf32>
    %84 = arith.addf %79, %83 : vector<16x128xf32>
    %c160 = arith.constant 160 : index
    %c0_74 = arith.constant 0 : index
    %85 = vector.load %arg0[%c160, %c0_74] : memref<552x3xf32, #tpu.memory_space<vmem>>, vector<128x3xf32>
    %c6_75 = arith.constant 6 : index
    %c0_76 = arith.constant 0 : index
    %c0_77 = arith.constant 0 : index
    %86 = vector.load %arg1[%c6_75, %c0_76, %c0_77] : memref<9x16x3xf32, #tpu.memory_space<vmem>>, vector<1x16x3xf32>
    %87 = vector.shape_cast %86 : vector<1x16x3xf32> to vector<16x3xf32>
    %cst_78 = arith.constant dense<0.000000e+00> : vector<16x128xf32>
    %88 = tpu.matmul %87, %85, %cst_78 {dimension_numbers = #tpu.dot_dimension_numbers<[1], [1], [0], [0], [0, 0, 1, 0], [], []>} : vector<16x3xf32>, vector<128x3xf32>, vector<16x128xf32> -> vector<16x128xf32>
    %89 = arith.addf %84, %88 : vector<16x128xf32>
    %c161 = arith.constant 161 : index
    %c0_79 = arith.constant 0 : index
    %90 = vector.load %arg0[%c161, %c0_79] : memref<552x3xf32, #tpu.memory_space<vmem>>, vector<128x3xf32>
    %c7_80 = arith.constant 7 : index
    %c0_81 = arith.constant 0 : index
    %c0_82 = arith.constant 0 : index
    %91 = vector.load %arg1[%c7_80, %c0_81, %c0_82] : memref<9x16x3xf32, #tpu.memory_space<vmem>>, vector<1x16x3xf32>
    %92 = vector.shape_cast %91 : vector<1x16x3xf32> to vector<16x3xf32>
    %cst_83 = arith.constant dense<0.000000e+00> : vector<16x128xf32>
    %93 = tpu.matmul %92, %90, %cst_83 {dimension_numbers = #tpu.dot_dimension_numbers<[1], [1], [0], [0], [0, 0, 1, 0], [], []>} : vector<16x3xf32>, vector<128x3xf32>, vector<16x128xf32> -> vector<16x128xf32>
    %94 = arith.addf %89, %93 : vector<16x128xf32>
    %c162 = arith.constant 162 : index
    %c0_84 = arith.constant 0 : index
    %95 = vector.load %arg0[%c162, %c0_84] : memref<552x3xf32, #tpu.memory_space<vmem>>, vector<128x3xf32>
    %c8_85 = arith.constant 8 : index
    %c0_86 = arith.constant 0 : index
    %c0_87 = arith.constant 0 : index
    %96 = vector.load %arg1[%c8_85, %c0_86, %c0_87] : memref<9x16x3xf32, #tpu.memory_space<vmem>>, vector<1x16x3xf32>
    %97 = vector.shape_cast %96 : vector<1x16x3xf32> to vector<16x3xf32>
    %cst_88 = arith.constant dense<0.000000e+00> : vector<16x128xf32>
    %98 = tpu.matmul %97, %95, %cst_88 {dimension_numbers = #tpu.dot_dimension_numbers<[1], [1], [0], [0], [0, 0, 1, 0], [], []>} : vector<16x3xf32>, vector<128x3xf32>, vector<16x128xf32> -> vector<16x128xf32>
    %99 = arith.addf %94, %98 : vector<16x128xf32>
    %c0_89 = arith.constant 0 : index
    %c128_90 = arith.constant 128 : index
    %100 = vector.load %arg4[%c0_89, %c128_90] : memref<1x512xf32, #tpu.memory_space<vmem>>, vector<1x128xf32>
    %101 = vector.broadcast %100 : vector<1x128xf32> to vector<16x128xf32>
    %102 = arith.mulf %99, %101 : vector<16x128xf32>
    %cst_91 = arith.constant dense<0.000000e+00> : vector<16xf32>
    %103 = vector.multi_reduction <add>, %102, %cst_91 [1] : vector<16x128xf32> to vector<16xf32>
    %104 = vector.shape_cast %103 : vector<16xf32> to vector<16x1xf32>
    %105 = arith.addf %51, %104 : vector<16x1xf32>
    %106 = arith.mulf %102, %99 : vector<16x128xf32>
    %cst_92 = arith.constant dense<0.000000e+00> : vector<16xf32>
    %107 = vector.multi_reduction <add>, %106, %cst_92 [1] : vector<16x128xf32> to vector<16xf32>
    %108 = vector.shape_cast %107 : vector<16xf32> to vector<16x1xf32>
    %109 = arith.addf %55, %108 : vector<16x1xf32>
    %c256 = arith.constant 256 : index
    %c0_93 = arith.constant 0 : index
    %110 = vector.load %arg0[%c256, %c0_93] : memref<552x3xf32, #tpu.memory_space<vmem>>, vector<128x3xf32>
    %c0_94 = arith.constant 0 : index
    %c0_95 = arith.constant 0 : index
    %c0_96 = arith.constant 0 : index
    %111 = vector.load %arg1[%c0_94, %c0_95, %c0_96] : memref<9x16x3xf32, #tpu.memory_space<vmem>>, vector<1x16x3xf32>
    %112 = vector.shape_cast %111 : vector<1x16x3xf32> to vector<16x3xf32>
    %cst_97 = arith.constant dense<0.000000e+00> : vector<16x128xf32>
    %113 = tpu.matmul %112, %110, %cst_97 {dimension_numbers = #tpu.dot_dimension_numbers<[1], [1], [0], [0], [0, 0, 1, 0], [], []>} : vector<16x3xf32>, vector<128x3xf32>, vector<16x128xf32> -> vector<16x128xf32>
    %c257 = arith.constant 257 : index
    %c0_98 = arith.constant 0 : index
    %114 = vector.load %arg0[%c257, %c0_98] : memref<552x3xf32, #tpu.memory_space<vmem>>, vector<128x3xf32>
    %c1_99 = arith.constant 1 : index
    %c0_100 = arith.constant 0 : index
    %c0_101 = arith.constant 0 : index
    %115 = vector.load %arg1[%c1_99, %c0_100, %c0_101] : memref<9x16x3xf32, #tpu.memory_space<vmem>>, vector<1x16x3xf32>
    %116 = vector.shape_cast %115 : vector<1x16x3xf32> to vector<16x3xf32>
    %cst_102 = arith.constant dense<0.000000e+00> : vector<16x128xf32>
    %117 = tpu.matmul %116, %114, %cst_102 {dimension_numbers = #tpu.dot_dimension_numbers<[1], [1], [0], [0], [0, 0, 1, 0], [], []>} : vector<16x3xf32>, vector<128x3xf32>, vector<16x128xf32> -> vector<16x128xf32>
    %118 = arith.addf %113, %117 : vector<16x128xf32>
    %c258 = arith.constant 258 : index
    %c0_103 = arith.constant 0 : index
    %119 = vector.load %arg0[%c258, %c0_103] : memref<552x3xf32, #tpu.memory_space<vmem>>, vector<128x3xf32>
    %c2_104 = arith.constant 2 : index
    %c0_105 = arith.constant 0 : index
    %c0_106 = arith.constant 0 : index
    %120 = vector.load %arg1[%c2_104, %c0_105, %c0_106] : memref<9x16x3xf32, #tpu.memory_space<vmem>>, vector<1x16x3xf32>
    %121 = vector.shape_cast %120 : vector<1x16x3xf32> to vector<16x3xf32>
    %cst_107 = arith.constant dense<0.000000e+00> : vector<16x128xf32>
    %122 = tpu.matmul %121, %119, %cst_107 {dimension_numbers = #tpu.dot_dimension_numbers<[1], [1], [0], [0], [0, 0, 1, 0], [], []>} : vector<16x3xf32>, vector<128x3xf32>, vector<16x128xf32> -> vector<16x128xf32>
    %123 = arith.addf %118, %122 : vector<16x128xf32>
    %c272 = arith.constant 272 : index
    %c0_108 = arith.constant 0 : index
    %124 = vector.load %arg0[%c272, %c0_108] : memref<552x3xf32, #tpu.memory_space<vmem>>, vector<128x3xf32>
    %c3_109 = arith.constant 3 : index
    %c0_110 = arith.constant 0 : index
    %c0_111 = arith.constant 0 : index
    %125 = vector.load %arg1[%c3_109, %c0_110, %c0_111] : memref<9x16x3xf32, #tpu.memory_space<vmem>>, vector<1x16x3xf32>
    %126 = vector.shape_cast %125 : vector<1x16x3xf32> to vector<16x3xf32>
    %cst_112 = arith.constant dense<0.000000e+00> : vector<16x128xf32>
    %127 = tpu.matmul %126, %124, %cst_112 {dimension_numbers = #tpu.dot_dimension_numbers<[1], [1], [0], [0], [0, 0, 1, 0], [], []>} : vector<16x3xf32>, vector<128x3xf32>, vector<16x128xf32> -> vector<16x128xf32>
    %128 = arith.addf %123, %127 : vector<16x128xf32>
    %c273 = arith.constant 273 : index
    %c0_113 = arith.constant 0 : index
    %129 = vector.load %arg0[%c273, %c0_113] : memref<552x3xf32, #tpu.memory_space<vmem>>, vector<128x3xf32>
    %c4_114 = arith.constant 4 : index
    %c0_115 = arith.constant 0 : index
    %c0_116 = arith.constant 0 : index
    %130 = vector.load %arg1[%c4_114, %c0_115, %c0_116] : memref<9x16x3xf32, #tpu.memory_space<vmem>>, vector<1x16x3xf32>
    %131 = vector.shape_cast %130 : vector<1x16x3xf32> to vector<16x3xf32>
    %cst_117 = arith.constant dense<0.000000e+00> : vector<16x128xf32>
    %132 = tpu.matmul %131, %129, %cst_117 {dimension_numbers = #tpu.dot_dimension_numbers<[1], [1], [0], [0], [0, 0, 1, 0], [], []>} : vector<16x3xf32>, vector<128x3xf32>, vector<16x128xf32> -> vector<16x128xf32>
    %133 = arith.addf %128, %132 : vector<16x128xf32>
    %c274 = arith.constant 274 : index
    %c0_118 = arith.constant 0 : index
    %134 = vector.load %arg0[%c274, %c0_118] : memref<552x3xf32, #tpu.memory_space<vmem>>, vector<128x3xf32>
    %c5_119 = arith.constant 5 : index
    %c0_120 = arith.constant 0 : index
    %c0_121 = arith.constant 0 : index
    %135 = vector.load %arg1[%c5_119, %c0_120, %c0_121] : memref<9x16x3xf32, #tpu.memory_space<vmem>>, vector<1x16x3xf32>
    %136 = vector.shape_cast %135 : vector<1x16x3xf32> to vector<16x3xf32>
    %cst_122 = arith.constant dense<0.000000e+00> : vector<16x128xf32>
    %137 = tpu.matmul %136, %134, %cst_122 {dimension_numbers = #tpu.dot_dimension_numbers<[1], [1], [0], [0], [0, 0, 1, 0], [], []>} : vector<16x3xf32>, vector<128x3xf32>, vector<16x128xf32> -> vector<16x128xf32>
    %138 = arith.addf %133, %137 : vector<16x128xf32>
    %c288 = arith.constant 288 : index
    %c0_123 = arith.constant 0 : index
    %139 = vector.load %arg0[%c288, %c0_123] : memref<552x3xf32, #tpu.memory_space<vmem>>, vector<128x3xf32>
    %c6_124 = arith.constant 6 : index
    %c0_125 = arith.constant 0 : index
    %c0_126 = arith.constant 0 : index
    %140 = vector.load %arg1[%c6_124, %c0_125, %c0_126] : memref<9x16x3xf32, #tpu.memory_space<vmem>>, vector<1x16x3xf32>
    %141 = vector.shape_cast %140 : vector<1x16x3xf32> to vector<16x3xf32>
    %cst_127 = arith.constant dense<0.000000e+00> : vector<16x128xf32>
    %142 = tpu.matmul %141, %139, %cst_127 {dimension_numbers = #tpu.dot_dimension_numbers<[1], [1], [0], [0], [0, 0, 1, 0], [], []>} : vector<16x3xf32>, vector<128x3xf32>, vector<16x128xf32> -> vector<16x128xf32>
    %143 = arith.addf %138, %142 : vector<16x128xf32>
    %c289 = arith.constant 289 : index
    %c0_128 = arith.constant 0 : index
    %144 = vector.load %arg0[%c289, %c0_128] : memref<552x3xf32, #tpu.memory_space<vmem>>, vector<128x3xf32>
    %c7_129 = arith.constant 7 : index
    %c0_130 = arith.constant 0 : index
    %c0_131 = arith.constant 0 : index
    %145 = vector.load %arg1[%c7_129, %c0_130, %c0_131] : memref<9x16x3xf32, #tpu.memory_space<vmem>>, vector<1x16x3xf32>
    %146 = vector.shape_cast %145 : vector<1x16x3xf32> to vector<16x3xf32>
    %cst_132 = arith.constant dense<0.000000e+00> : vector<16x128xf32>
    %147 = tpu.matmul %146, %144, %cst_132 {dimension_numbers = #tpu.dot_dimension_numbers<[1], [1], [0], [0], [0, 0, 1, 0], [], []>} : vector<16x3xf32>, vector<128x3xf32>, vector<16x128xf32> -> vector<16x128xf32>
    %148 = arith.addf %143, %147 : vector<16x128xf32>
    %c290 = arith.constant 290 : index
    %c0_133 = arith.constant 0 : index
    %149 = vector.load %arg0[%c290, %c0_133] : memref<552x3xf32, #tpu.memory_space<vmem>>, vector<128x3xf32>
    %c8_134 = arith.constant 8 : index
    %c0_135 = arith.constant 0 : index
    %c0_136 = arith.constant 0 : index
    %150 = vector.load %arg1[%c8_134, %c0_135, %c0_136] : memref<9x16x3xf32, #tpu.memory_space<vmem>>, vector<1x16x3xf32>
    %151 = vector.shape_cast %150 : vector<1x16x3xf32> to vector<16x3xf32>
    %cst_137 = arith.constant dense<0.000000e+00> : vector<16x128xf32>
    %152 = tpu.matmul %151, %149, %cst_137 {dimension_numbers = #tpu.dot_dimension_numbers<[1], [1], [0], [0], [0, 0, 1, 0], [], []>} : vector<16x3xf32>, vector<128x3xf32>, vector<16x128xf32> -> vector<16x128xf32>
    %153 = arith.addf %148, %152 : vector<16x128xf32>
    %c0_138 = arith.constant 0 : index
    %c256_139 = arith.constant 256 : index
    %154 = vector.load %arg4[%c0_138, %c256_139] : memref<1x512xf32, #tpu.memory_space<vmem>>, vector<1x128xf32>
    %155 = vector.broadcast %154 : vector<1x128xf32> to vector<16x128xf32>
    %156 = arith.mulf %153, %155 : vector<16x128xf32>
    %cst_140 = arith.constant dense<0.000000e+00> : vector<16xf32>
    %157 = vector.multi_reduction <add>, %156, %cst_140 [1] : vector<16x128xf32> to vector<16xf32>
    %158 = vector.shape_cast %157 : vector<16xf32> to vector<16x1xf32>
    %159 = arith.addf %105, %158 : vector<16x1xf32>
    %160 = arith.mulf %156, %153 : vector<16x128xf32>
    %cst_141 = arith.constant dense<0.000000e+00> : vector<16xf32>
    %161 = vector.multi_reduction <add>, %160, %cst_141 [1] : vector<16x128xf32> to vector<16xf32>
    %162 = vector.shape_cast %161 : vector<16xf32> to vector<16x1xf32>
    %163 = arith.addf %109, %162 : vector<16x1xf32>
    %c384 = arith.constant 384 : index
    %c0_142 = arith.constant 0 : index
    %164 = vector.load %arg0[%c384, %c0_142] : memref<552x3xf32, #tpu.memory_space<vmem>>, vector<128x3xf32>
    %c0_143 = arith.constant 0 : index
    %c0_144 = arith.constant 0 : index
    %c0_145 = arith.constant 0 : index
    %165 = vector.load %arg1[%c0_143, %c0_144, %c0_145] : memref<9x16x3xf32, #tpu.memory_space<vmem>>, vector<1x16x3xf32>
    %166 = vector.shape_cast %165 : vector<1x16x3xf32> to vector<16x3xf32>
    %cst_146 = arith.constant dense<0.000000e+00> : vector<16x128xf32>
    %167 = tpu.matmul %166, %164, %cst_146 {dimension_numbers = #tpu.dot_dimension_numbers<[1], [1], [0], [0], [0, 0, 1, 0], [], []>} : vector<16x3xf32>, vector<128x3xf32>, vector<16x128xf32> -> vector<16x128xf32>
    %c385 = arith.constant 385 : index
    %c0_147 = arith.constant 0 : index
    %168 = vector.load %arg0[%c385, %c0_147] : memref<552x3xf32, #tpu.memory_space<vmem>>, vector<128x3xf32>
    %c1_148 = arith.constant 1 : index
    %c0_149 = arith.constant 0 : index
    %c0_150 = arith.constant 0 : index
    %169 = vector.load %arg1[%c1_148, %c0_149, %c0_150] : memref<9x16x3xf32, #tpu.memory_space<vmem>>, vector<1x16x3xf32>
    %170 = vector.shape_cast %169 : vector<1x16x3xf32> to vector<16x3xf32>
    %cst_151 = arith.constant dense<0.000000e+00> : vector<16x128xf32>
    %171 = tpu.matmul %170, %168, %cst_151 {dimension_numbers = #tpu.dot_dimension_numbers<[1], [1], [0], [0], [0, 0, 1, 0], [], []>} : vector<16x3xf32>, vector<128x3xf32>, vector<16x128xf32> -> vector<16x128xf32>
    %172 = arith.addf %167, %171 : vector<16x128xf32>
    %c386 = arith.constant 386 : index
    %c0_152 = arith.constant 0 : index
    %173 = vector.load %arg0[%c386, %c0_152] : memref<552x3xf32, #tpu.memory_space<vmem>>, vector<128x3xf32>
    %c2_153 = arith.constant 2 : index
    %c0_154 = arith.constant 0 : index
    %c0_155 = arith.constant 0 : index
    %174 = vector.load %arg1[%c2_153, %c0_154, %c0_155] : memref<9x16x3xf32, #tpu.memory_space<vmem>>, vector<1x16x3xf32>
    %175 = vector.shape_cast %174 : vector<1x16x3xf32> to vector<16x3xf32>
    %cst_156 = arith.constant dense<0.000000e+00> : vector<16x128xf32>
    %176 = tpu.matmul %175, %173, %cst_156 {dimension_numbers = #tpu.dot_dimension_numbers<[1], [1], [0], [0], [0, 0, 1, 0], [], []>} : vector<16x3xf32>, vector<128x3xf32>, vector<16x128xf32> -> vector<16x128xf32>
    %177 = arith.addf %172, %176 : vector<16x128xf32>
    %c400 = arith.constant 400 : index
    %c0_157 = arith.constant 0 : index
    %178 = vector.load %arg0[%c400, %c0_157] : memref<552x3xf32, #tpu.memory_space<vmem>>, vector<128x3xf32>
    %c3_158 = arith.constant 3 : index
    %c0_159 = arith.constant 0 : index
    %c0_160 = arith.constant 0 : index
    %179 = vector.load %arg1[%c3_158, %c0_159, %c0_160] : memref<9x16x3xf32, #tpu.memory_space<vmem>>, vector<1x16x3xf32>
    %180 = vector.shape_cast %179 : vector<1x16x3xf32> to vector<16x3xf32>
    %cst_161 = arith.constant dense<0.000000e+00> : vector<16x128xf32>
    %181 = tpu.matmul %180, %178, %cst_161 {dimension_numbers = #tpu.dot_dimension_numbers<[1], [1], [0], [0], [0, 0, 1, 0], [], []>} : vector<16x3xf32>, vector<128x3xf32>, vector<16x128xf32> -> vector<16x128xf32>
    %182 = arith.addf %177, %181 : vector<16x128xf32>
    %c401 = arith.constant 401 : index
    %c0_162 = arith.constant 0 : index
    %183 = vector.load %arg0[%c401, %c0_162] : memref<552x3xf32, #tpu.memory_space<vmem>>, vector<128x3xf32>
    %c4_163 = arith.constant 4 : index
    %c0_164 = arith.constant 0 : index
    %c0_165 = arith.constant 0 : index
    %184 = vector.load %arg1[%c4_163, %c0_164, %c0_165] : memref<9x16x3xf32, #tpu.memory_space<vmem>>, vector<1x16x3xf32>
    %185 = vector.shape_cast %184 : vector<1x16x3xf32> to vector<16x3xf32>
    %cst_166 = arith.constant dense<0.000000e+00> : vector<16x128xf32>
    %186 = tpu.matmul %185, %183, %cst_166 {dimension_numbers = #tpu.dot_dimension_numbers<[1], [1], [0], [0], [0, 0, 1, 0], [], []>} : vector<16x3xf32>, vector<128x3xf32>, vector<16x128xf32> -> vector<16x128xf32>
    %187 = arith.addf %182, %186 : vector<16x128xf32>
    %c402 = arith.constant 402 : index
    %c0_167 = arith.constant 0 : index
    %188 = vector.load %arg0[%c402, %c0_167] : memref<552x3xf32, #tpu.memory_space<vmem>>, vector<128x3xf32>
    %c5_168 = arith.constant 5 : index
    %c0_169 = arith.constant 0 : index
    %c0_170 = arith.constant 0 : index
    %189 = vector.load %arg1[%c5_168, %c0_169, %c0_170] : memref<9x16x3xf32, #tpu.memory_space<vmem>>, vector<1x16x3xf32>
    %190 = vector.shape_cast %189 : vector<1x16x3xf32> to vector<16x3xf32>
    %cst_171 = arith.constant dense<0.000000e+00> : vector<16x128xf32>
    %191 = tpu.matmul %190, %188, %cst_171 {dimension_numbers = #tpu.dot_dimension_numbers<[1], [1], [0], [0], [0, 0, 1, 0], [], []>} : vector<16x3xf32>, vector<128x3xf32>, vector<16x128xf32> -> vector<16x128xf32>
    %192 = arith.addf %187, %191 : vector<16x128xf32>
    %c416 = arith.constant 416 : index
    %c0_172 = arith.constant 0 : index
    %193 = vector.load %arg0[%c416, %c0_172] : memref<552x3xf32, #tpu.memory_space<vmem>>, vector<128x3xf32>
    %c6_173 = arith.constant 6 : index
    %c0_174 = arith.constant 0 : index
    %c0_175 = arith.constant 0 : index
    %194 = vector.load %arg1[%c6_173, %c0_174, %c0_175] : memref<9x16x3xf32, #tpu.memory_space<vmem>>, vector<1x16x3xf32>
    %195 = vector.shape_cast %194 : vector<1x16x3xf32> to vector<16x3xf32>
    %cst_176 = arith.constant dense<0.000000e+00> : vector<16x128xf32>
    %196 = tpu.matmul %195, %193, %cst_176 {dimension_numbers = #tpu.dot_dimension_numbers<[1], [1], [0], [0], [0, 0, 1, 0], [], []>} : vector<16x3xf32>, vector<128x3xf32>, vector<16x128xf32> -> vector<16x128xf32>
    %197 = arith.addf %192, %196 : vector<16x128xf32>
    %c417 = arith.constant 417 : index
    %c0_177 = arith.constant 0 : index
    %198 = vector.load %arg0[%c417, %c0_177] : memref<552x3xf32, #tpu.memory_space<vmem>>, vector<128x3xf32>
    %c7_178 = arith.constant 7 : index
    %c0_179 = arith.constant 0 : index
    %c0_180 = arith.constant 0 : index
    %199 = vector.load %arg1[%c7_178, %c0_179, %c0_180] : memref<9x16x3xf32, #tpu.memory_space<vmem>>, vector<1x16x3xf32>
    %200 = vector.shape_cast %199 : vector<1x16x3xf32> to vector<16x3xf32>
    %cst_181 = arith.constant dense<0.000000e+00> : vector<16x128xf32>
    %201 = tpu.matmul %200, %198, %cst_181 {dimension_numbers = #tpu.dot_dimension_numbers<[1], [1], [0], [0], [0, 0, 1, 0], [], []>} : vector<16x3xf32>, vector<128x3xf32>, vector<16x128xf32> -> vector<16x128xf32>
    %202 = arith.addf %197, %201 : vector<16x128xf32>
    %c418 = arith.constant 418 : index
    %c0_182 = arith.constant 0 : index
    %203 = vector.load %arg0[%c418, %c0_182] : memref<552x3xf32, #tpu.memory_space<vmem>>, vector<128x3xf32>
    %c8_183 = arith.constant 8 : index
    %c0_184 = arith.constant 0 : index
    %c0_185 = arith.constant 0 : index
    %204 = vector.load %arg1[%c8_183, %c0_184, %c0_185] : memref<9x16x3xf32, #tpu.memory_space<vmem>>, vector<1x16x3xf32>
    %205 = vector.shape_cast %204 : vector<1x16x3xf32> to vector<16x3xf32>
    %cst_186 = arith.constant dense<0.000000e+00> : vector<16x128xf32>
    %206 = tpu.matmul %205, %203, %cst_186 {dimension_numbers = #tpu.dot_dimension_numbers<[1], [1], [0], [0], [0, 0, 1, 0], [], []>} : vector<16x3xf32>, vector<128x3xf32>, vector<16x128xf32> -> vector<16x128xf32>
    %207 = arith.addf %202, %206 : vector<16x128xf32>
    %c0_187 = arith.constant 0 : index
    %c384_188 = arith.constant 384 : index
    %208 = vector.load %arg4[%c0_187, %c384_188] : memref<1x512xf32, #tpu.memory_space<vmem>>, vector<1x128xf32>
    %209 = vector.broadcast %208 : vector<1x128xf32> to vector<16x128xf32>
    %210 = arith.mulf %207, %209 : vector<16x128xf32>
    %cst_189 = arith.constant dense<0.000000e+00> : vector<16xf32>
    %211 = vector.multi_reduction <add>, %210, %cst_189 [1] : vector<16x128xf32> to vector<16xf32>
    %212 = vector.shape_cast %211 : vector<16xf32> to vector<16x1xf32>
    %213 = arith.addf %159, %212 : vector<16x1xf32>
    %214 = arith.mulf %210, %207 : vector<16x128xf32>
    %cst_190 = arith.constant dense<0.000000e+00> : vector<16xf32>
    %215 = vector.multi_reduction <add>, %214, %cst_190 [1] : vector<16x128xf32> to vector<16xf32>
    %216 = vector.shape_cast %215 : vector<16xf32> to vector<16x1xf32>
    %217 = arith.addf %163, %216 : vector<16x1xf32>
    %cst_191 = arith.constant 0.00255102036 : f32
    %218 = vector.broadcast %cst_191 : f32 to vector<16x1xf32>
    %219 = arith.mulf %213, %218 : vector<16x1xf32>
    %cst_192 = arith.constant 0.00255102036 : f32
    %220 = vector.broadcast %cst_192 : f32 to vector<16x1xf32>
    %221 = arith.mulf %217, %220 : vector<16x1xf32>
    %222 = arith.mulf %219, %219 : vector<16x1xf32>
    %223 = arith.subf %221, %222 : vector<16x1xf32>
    %cst_193 = arith.constant 0.000000e+00 : f32
    %224 = vector.broadcast %cst_193 : f32 to vector<16x1xf32>
    %225 = arith.maximumf %223, %224 : vector<16x1xf32>
    %c0_194 = arith.constant 0 : index
    %c0_195 = arith.constant 0 : index
    %226 = vector.load %arg2[%c0_194, %c0_195] : memref<16x1xf32, #tpu.memory_space<vmem>>, vector<16x1xf32>
    %cst_196 = arith.constant 9.99999974E-6 : f32
    %227 = vector.broadcast %cst_196 : f32 to vector<16x1xf32>
    %228 = arith.addf %225, %227 : vector<16x1xf32>
    %229 = math.rsqrt %228 : vector<16x1xf32>
    %230 = arith.mulf %226, %229 : vector<16x1xf32>
    %c0_197 = arith.constant 0 : index
    %c0_198 = arith.constant 0 : index
    %231 = vector.load %arg3[%c0_197, %c0_198] : memref<16x1xf32, #tpu.memory_space<vmem>>, vector<16x1xf32>
    %232 = arith.mulf %219, %230 : vector<16x1xf32>
    %233 = arith.subf %231, %232 : vector<16x1xf32>
    %234 = vector.broadcast %230 : vector<16x1xf32> to vector<16x128xf32>
    %235 = arith.mulf %45, %234 : vector<16x128xf32>
    %236 = vector.broadcast %233 : vector<16x1xf32> to vector<16x128xf32>
    %237 = arith.addf %235, %236 : vector<16x128xf32>
    %cst_199 = arith.constant 0.000000e+00 : f32
    %238 = vector.broadcast %cst_199 : f32 to vector<16x128xf32>
    %239 = arith.maximumf %237, %238 : vector<16x128xf32>
    %c0_200 = arith.constant 0 : index
    %c0_201 = arith.constant 0 : index
    %240 = vector.load %arg5[%c0_200, %c0_201] : memref<16x512xf32, #tpu.memory_space<vmem>>, vector<16x128xf32>
    tpu.vector_store %arg5[%c0_200, %c0_201], %239 {strides = array<i32>} : memref<16x512xf32, #tpu.memory_space<vmem>>, vector<16x128xf32>,
    %241 = vector.broadcast %230 : vector<16x1xf32> to vector<16x128xf32>
    %242 = arith.mulf %99, %241 : vector<16x128xf32>
    %243 = vector.broadcast %233 : vector<16x1xf32> to vector<16x128xf32>
    %244 = arith.addf %242, %243 : vector<16x128xf32>
    %cst_202 = arith.constant 0.000000e+00 : f32
    %245 = vector.broadcast %cst_202 : f32 to vector<16x128xf32>
    %246 = arith.maximumf %244, %245 : vector<16x128xf32>
    %c0_203 = arith.constant 0 : index
    %c128_204 = arith.constant 128 : index
    %247 = vector.load %arg5[%c0_203, %c128_204] : memref<16x512xf32, #tpu.memory_space<vmem>>, vector<16x128xf32>
    tpu.vector_store %arg5[%c0_203, %c128_204], %246 {strides = array<i32>} : memref<16x512xf32, #tpu.memory_space<vmem>>, vector<16x128xf32>,
    %248 = vector.broadcast %230 : vector<16x1xf32> to vector<16x128xf32>
    %249 = arith.mulf %153, %248 : vector<16x128xf32>
    %250 = vector.broadcast %233 : vector<16x1xf32> to vector<16x128xf32>
    %251 = arith.addf %249, %250 : vector<16x128xf32>
    %cst_205 = arith.constant 0.000000e+00 : f32
    %252 = vector.broadcast %cst_205 : f32 to vector<16x128xf32>
    %253 = arith.maximumf %251, %252 : vector<16x128xf32>
    %c0_206 = arith.constant 0 : index
    %c256_207 = arith.constant 256 : index
    %254 = vector.load %arg5[%c0_206, %c256_207] : memref<16x512xf32, #tpu.memory_space<vmem>>, vector<16x128xf32>
    tpu.vector_store %arg5[%c0_206, %c256_207], %253 {strides = array<i32>} : memref<16x512xf32, #tpu.memory_space<vmem>>, vector<16x128xf32>,
    %255 = vector.broadcast %230 : vector<16x1xf32> to vector<16x128xf32>
    %256 = arith.mulf %207, %255 : vector<16x128xf32>
    %257 = vector.broadcast %233 : vector<16x1xf32> to vector<16x128xf32>
    %258 = arith.addf %256, %257 : vector<16x128xf32>
    %cst_208 = arith.constant 0.000000e+00 : f32
    %259 = vector.broadcast %cst_208 : f32 to vector<16x128xf32>
    %260 = arith.maximumf %258, %259 : vector<16x128xf32>
    %c0_209 = arith.constant 0 : index
    %c384_210 = arith.constant 384 : index
    %261 = vector.load %arg5[%c0_209, %c384_210] : memref<16x512xf32, #tpu.memory_space<vmem>>, vector<16x128xf32>
    tpu.vector_store %arg5[%c0_209, %c384_210], %260 {strides = array<i32>} : memref<16x512xf32, #tpu.memory_space<vmem>>, vector<16x128xf32>,
    return
  }
}

</mosaic_0001>

<llo_original>
// kernel: conv_bn_relu.1
$region0: #{conv_bn_relu.1}
  #allocation0 [shape = 'u32[]', space=smem, size = 0x4, offset = 0x4, fixed_abs, tag = 'smem constant byte address 0x4 - core index']
  #allocation1 [shape = 'u32[144,128]{1,0:T(1,128)}', space=vmem, size = 0x12000, scoped, tag = 'internal scratch']
  %s0 = inlined_call_operand.vmem [shape: f32[552,3], index: 0, kind: input, shape index: {}]
  %s1 = inlined_call_operand.vmem [shape: f32[9,16,3], index: 1, kind: input, shape index: {}]
  %s2 = inlined_call_operand.vmem [shape: f32[16,1], index: 2, kind: input, shape index: {}]
  %s3 = inlined_call_operand.vmem [shape: f32[16,1], index: 3, kind: input, shape index: {}]
  %s4 = inlined_call_operand.vmem [shape: f32[1,512], index: 4, kind: input, shape index: {}]
  %s5 = inlined_call_operand.vmem [shape: f32[16,512], index: 5, kind: output, shape index: {}]
  %s6 = sld [smem:[#allocation0]]
  $region30: #{conv_bn_relu.1} parent=0
    _
  %s8 = ssub.s32 1, %s6
  %s9 = scalar_select 0, %s8, %s6
  // Predicated region
  $region2: #{conv_bn_relu.1} parent=0 // pred_check
    _
  $region3: #{conv_bn_relu.1} parent=0 // pred_check_branch
    %11 = sbr.rel (0) target = $region5
  $region4: #{conv_bn_relu.1} parent=0 // pred_region
    _
  $region5: #{conv_bn_relu.1} parent=0 // pred_fallthru
    _
  // Predicated region
  $region6: #{conv_bn_relu.1} parent=0 // pred_check
    _
  $region7: #{conv_bn_relu.1} parent=0 // pred_check_branch
    %13 = sbr.rel (0) target = $region9
  $region8: #{conv_bn_relu.1} parent=0 // pred_region
    _
  $region9: #{conv_bn_relu.1} parent=0 // pred_fallthru
    _
  // Predicated region
  $region10: #{conv_bn_relu.1} parent=0 // pred_check
    _
  $region11: #{conv_bn_relu.1} parent=0 // pred_check_branch
    %15 = sbr.rel (0) target = $region13
  $region12: #{conv_bn_relu.1} parent=0 // pred_region
    _
  $region13: #{conv_bn_relu.1} parent=0 // pred_fallthru
    _
  // Predicated region
  $region14: #{conv_bn_relu.1} parent=0 // pred_check
    _
  $region15: #{conv_bn_relu.1} parent=0 // pred_check_branch
    %17 = sbr.rel (0) target = $region17
  $region16: #{conv_bn_relu.1} parent=0 // pred_region
    _
  $region17: #{conv_bn_relu.1} parent=0 // pred_fallthru
    _
  // Predicated region
  $region18: #{conv_bn_relu.1} parent=0 // pred_check
    _
  $region19: #{conv_bn_relu.1} parent=0 // pred_check_branch
    %19 = sbr.rel (0) target = $region21
  $region20: #{conv_bn_relu.1} parent=0 // pred_region
    _
  $region21: #{conv_bn_relu.1} parent=0 // pred_fallthru
    _
  %v20 = vld [vmem:[%s0] sm:$0xff]
  %v21 = vld [vmem:[%s0 + $0x8] sm:$0xff]
  %v22 = vld [vmem:[%s0 + $0x10] sm:$0xff]
  %v23 = vld [vmem:[%s0 + $0x18] sm:$0xff]
  %v24 = vld [vmem:[%s0 + $0x20] sm:$0xff]
  %v25 = vld [vmem:[%s0 + $0x28] sm:$0xff]
  %v26 = vld [vmem:[%s0 + $0x30] sm:$0xff]
  %v27 = vld [vmem:[%s0 + $0x38] sm:$0xff]
  %v28 = vld [vmem:[%s0 + $0x40] sm:$0xff]
  %v29 = vld [vmem:[%s0 + $0x48] sm:$0xff]
  %v30 = vld [vmem:[%s0 + $0x50] sm:$0xff]
  %v31 = vld [vmem:[%s0 + $0x58] sm:$0xff]
  %v32 = vld [vmem:[%s0 + $0x60] sm:$0xff]
  %v33 = vld [vmem:[%s0 + $0x68] sm:$0xff]
  %v34 = vld [vmem:[%s0 + $0x70] sm:$0xff]
  %v35 = vld [vmem:[%s0 + $0x78] sm:$0xff]
  %v36 = vld [vmem:[%s1] sm:$0xff]
  %v37 = vld [vmem:[%s1 + $0x8] sm:$0xff]
  %v38 = vld [vmem:[%s0 + $0x1] sm:$0xff]
  %v39 = vld [vmem:[%s0 + $0x9] sm:$0xff]
  %v40 = vld [vmem:[%s0 + $0x11] sm:$0xff]
  %v41 = vld [vmem:[%s0 + $0x19] sm:$0xff]
  %v42 = vld [vmem:[%s0 + $0x21] sm:$0xff]
  %v43 = vld [vmem:[%s0 + $0x29] sm:$0xff]
  %v44 = vld [vmem:[%s0 + $0x31] sm:$0xff]
  %v45 = vld [vmem:[%s0 + $0x39] sm:$0xff]
  %v46 = vld [vmem:[%s0 + $0x41] sm:$0xff]
  %v47 = vld [vmem:[%s0 + $0x49] sm:$0xff]
  %v48 = vld [vmem:[%s0 + $0x51] sm:$0xff]
  %v49 = vld [vmem:[%s0 + $0x59] sm:$0xff]
  %v50 = vld [vmem:[%s0 + $0x61] sm:$0xff]
  %v51 = vld [vmem:[%s0 + $0x69] sm:$0xff]
  %v52 = vld [vmem:[%s0 + $0x71] sm:$0xff]
  %v53 = vld [vmem:[%s0 + $0x79] sm:$0xff]
  %s54 = scalar_lea.vmem %s1, 16
  %v55 = vld [vmem:[%s54] sm:$0xff]
  %v56 = vld [vmem:[%s54 + $0x8] sm:$0xff]
  %vm57 = vcmask 23552
  %v59 = vsel %vm57, %v55, 0
  %v62 = vsel %vm57, %v56, 0
  %v65 = vsel %vm57, %v38, 0
  %v68 = vsel %vm57, %v39, 0
  %v71 = vsel %vm57, %v40, 0
  %v74 = vsel %vm57, %v41, 0
  %v77 = vsel %vm57, %v42, 0
  %v80 = vsel %vm57, %v43, 0
  %v83 = vsel %vm57, %v44, 0
  %v86 = vsel %vm57, %v45, 0
  %v89 = vsel %vm57, %v46, 0
  %v92 = vsel %vm57, %v47, 0
  %v95 = vsel %vm57, %v48, 0
  %v98 = vsel %vm57, %v49, 0
  %v101 = vsel %vm57, %v50, 0
  %v104 = vsel %vm57, %v51, 0
  %v107 = vsel %vm57, %v52, 0
  %v110 = vsel %vm57, %v53, 0
  %112 = vmatprep.subr.mxu0 0.0
  %113 = vmatpush1.xpose.msra.mxu0 %v65
  %114 = vmatprep.subr.mxu0 0.0
  %115 = vmatpush1.xpose.msra.mxu0 %v68
  %116 = vmatprep.subr.mxu0 0.0
  %117 = vmatpush1.xpose.msra.mxu0 %v71
  %118 = vmatprep.subr.mxu0 0.0
  %119 = vmatpush1.xpose.msra.mxu0 %v74
  %120 = vmatprep.subr.mxu0 0.0
  %121 = vmatpush1.xpose.msra.mxu0 %v77
  %122 = vmatprep.subr.mxu0 0.0
  %123 = vmatpush1.xpose.msra.mxu0 %v80
  %124 = vmatprep.subr.mxu0 0.0
  %125 = vmatpush1.xpose.msra.mxu0 %v83
  %126 = vmatprep.subr.mxu0 0.0
  %127 = vmatpush1.xpose.msra.mxu0 %v86
  %128 = vmatprep.subr.mxu0 0.0
  %129 = vmatpush1.xpose.msra.mxu0 %v89
  %130 = vmatprep.subr.mxu0 0.0
  %131 = vmatpush1.xpose.msra.mxu0 %v92
  %132 = vmatprep.subr.mxu0 0.0
  %133 = vmatpush1.xpose.msra.mxu0 %v95
  %134 = vmatprep.subr.mxu0 0.0
  %135 = vmatpush1.xpose.msra.mxu0 %v98
  %136 = vmatprep.subr.mxu0 0.0
  %137 = vmatpush1.xpose.msra.mxu0 %v101
  %138 = vmatprep.subr.mxu0 0.0
  %139 = vmatpush1.xpose.msra.mxu0 %v104
  %140 = vmatprep.subr.mxu0 0.0
  %141 = vmatpush1.xpose.msra.mxu0 %v107
  %142 = vmatprep.subr.mxu0 0.0
  %143 = vmatpush1.xpose.msra.mxu0 %v110
  %144 = vmatprep.subr.mxu0 0.0
  %145 = vmatpush1.xpose.msra.mxu0 0.0
  %146 = vmatprep.subr.mxu0 0.0
  %147 = vmatpush1.xpose.msra.mxu0 0.0
  %148 = vmatprep.subr.mxu0 0.0
  %149 = vmatpush1.xpose.msra.mxu0 0.0
  %150 = vmatprep.subr.mxu0 0.0
  %151 = vmatpush1.xpose.msra.mxu0 0.0
  %152 = vmatprep.subr.mxu0 0.0
  %153 = vmatpush1.xpose.msra.mxu0 0.0
  %154 = vmatprep.subr.mxu0 0.0
  %155 = vmatpush1.xpose.msra.mxu0 0.0
  %156 = vmatprep.subr.mxu0 0.0
  %157 = vmatpush1.xpose.msra.mxu0 0.0
  %158 = vmatprep.subr.mxu0 0.0
  %159 = vmatpush1.xpose.msra.mxu0 0.0
  %160 = vmatprep.subr.mxu0 0.0
  %161 = vmatpush1.xpose.msra.mxu0 0.0
  %162 = vmatprep.subr.mxu0 0.0
  %163 = vmatpush1.xpose.msra.mxu0 0.0
  %164 = vmatprep.subr.mxu0 0.0
  %165 = vmatpush1.xpose.msra.mxu0 0.0
  %166 = vmatprep.subr.mxu0 0.0
  %167 = vmatpush1.xpose.msra.mxu0 0.0
  %168 = vmatprep.subr.mxu0 0.0
  %169 = vmatpush1.xpose.msra.mxu0 0.0
  %170 = vmatprep.subr.mxu0 0.0
  %171 = vmatpush1.xpose.msra.mxu0 0.0
  %172 = vmatprep.subr.mxu0 0.0
  %173 = vmatpush1.xpose.msra.mxu0 0.0
  %174 = vmatprep.subr.mxu0 0.0
  %175 = vmatpush1.xpose.msra.mxu0 0.0
  %176 = vmatprep.mubr.f32.mxu0 0.0
  %177 = vmatmul.mubr.f32.gmra.mrb[0].mxu0 %v59
  %v178 = vpop.f32.mrb[0].mxu0
  %v179 = vadd.f32 0.0, %v178
  %v180 = vpop.f32.mrb[0].mxu0
  %181 = vmatprep.mubr.f32.mxu0 0.0
  %182 = vmatmul.mubr.f32.gmra.mrb[0].mxu0 %v62
  %v183 = vpop.f32.mrb[0].mxu0
  %v184 = vadd.f32 0.0, %v183
  %v185 = vpop.f32.mrb[0].mxu0
  %186 = vdwg.mxu0
  %v188 = vsel %vm57, %v36, 0
  %v191 = vsel %vm57, %v37, 0
  %v194 = vsel %vm57, %v20, 0
  %v197 = vsel %vm57, %v21, 0
  %v200 = vsel %vm57, %v22, 0
  %v203 = vsel %vm57, %v23, 0
  %v206 = vsel %vm57, %v24, 0
  %v209 = vsel %vm57, %v25, 0
  %v212 = vsel %vm57, %v26, 0
  %v215 = vsel %vm57, %v27, 0
  %v218 = vsel %vm57, %v28, 0
  %v221 = vsel %vm57, %v29, 0
  %v224 = vsel %vm57, %v30, 0
  %v227 = vsel %vm57, %v31, 0
  %v230 = vsel %vm57, %v32, 0
  %v233 = vsel %vm57, %v33, 0
  %v236 = vsel %vm57, %v34, 0
  %v239 = vsel %vm57, %v35, 0
  %241 = vmatprep.subr.mxu0 0.0
  %242 = vmatpush1.xpose.msra.mxu0 %v194
  %243 = vmatprep.subr.mxu0 0.0
  %244 = vmatpush1.xpose.msra.mxu0 %v197
  %245 = vmatprep.subr.mxu0 0.0
  %246 = vmatpush1.xpose.msra.mxu0 %v200
  %247 = vmatprep.subr.mxu0 0.0
  %248 = vmatpush1.xpose.msra.mxu0 %v203
  %249 = vmatprep.subr.mxu0 0.0
  %250 = vmatpush1.xpose.msra.mxu0 %v206
  %251 = vmatprep.subr.mxu0 0.0
  %252 = vmatpush1.xpose.msra.mxu0 %v209
  %253 = vmatprep.subr.mxu0 0.0
  %254 = vmatpush1.xpose.msra.mxu0 %v212
  %255 = vmatprep.subr.mxu0 0.0
  %256 = vmatpush1.xpose.msra.mxu0 %v215
  %257 = vmatprep.subr.mxu0 0.0
  %258 = vmatpush1.xpose.msra.mxu0 %v218
  %259 = vmatprep.subr.mxu0 0.0
  %260 = vmatpush1.xpose.msra.mxu0 %v221
  %261 = vmatprep.subr.mxu0 0.0
  %262 = vmatpush1.xpose.msra.mxu0 %v224
  %263 = vmatprep.subr.mxu0 0.0
  %264 = vmatpush1.xpose.msra.mxu0 %v227
  %265 = vmatprep.subr.mxu0 0.0
  %266 = vmatpush1.xpose.msra.mxu0 %v230
  %267 = vmatprep.subr.mxu0 0.0
  %268 = vmatpush1.xpose.msra.mxu0 %v233
  %269 = vmatprep.subr.mxu0 0.0
  %270 = vmatpush1.xpose.msra.mxu0 %v236
  %271 = vmatprep.subr.mxu0 0.0
  %272 = vmatpush1.xpose.msra.mxu0 %v239
  %273 = vmatprep.subr.mxu0 0.0
  %274 = vmatpush1.xpose.msra.mxu0 0.0
  %275 = vmatprep.subr.mxu0 0.0
  %276 = vmatpush1.xpose.msra.mxu0 0.0
  %277 = vmatprep.subr.mxu0 0.0
  %278 = vmatpush1.xpose.msra.mxu0 0.0
  %279 = vmatprep.subr.mxu0 0.0
  %280 = vmatpush1.xpose.msra.mxu0 0.0
  %281 = vmatprep.subr.mxu0 0.0
  %282 = vmatpush1.xpose.msra.mxu0 0.0
  %283 = vmatprep.subr.mxu0 0.0
  %284 = vmatpush1.xpose.msra.mxu0 0.0
  %285 = vmatprep.subr.mxu0 0.0
  %286 = vmatpush1.xpose.msra.mxu0 0.0
  %287 = vmatprep.subr.mxu0 0.0
  %288 = vmatpush1.xpose.msra.mxu0 0.0
  %289 = vmatprep.subr.mxu0 0.0
  %290 = vmatpush1.xpose.msra.mxu0 0.0
  %291 = vmatprep.subr.mxu0 0.0
  %292 = vmatpush1.xpose.msra.mxu0 0.0
  %293 = vmatprep.subr.mxu0 0.0
  %294 = vmatpush1.xpose.msra.mxu0 0.0
  %295 = vmatprep.subr.mxu0 0.0
  %296 = vmatpush1.xpose.msra.mxu0 0.0
  %297 = vmatprep.subr.mxu0 0.0
  %298 = vmatpush1.xpose.msra.mxu0 0.0
  %299 = vmatprep.subr.mxu0 0.0
  %300 = vmatpush1.xpose.msra.mxu0 0.0
  %301 = vmatprep.subr.mxu0 0.0
  %302 = vmatpush1.xpose.msra.mxu0 0.0
  %303 = vmatprep.subr.mxu0 0.0
  %304 = vmatpush1.xpose.msra.mxu0 0.0
  %305 = vmatprep.mubr.f32.mxu0 0.0
  %306 = vmatmul.mubr.f32.gmra.mrb[0].mxu0 %v188
  %v307 = vpop.f32.mrb[0].mxu0
  %v308 = vadd.f32 %v179, %v307
  %v309 = vpop.f32.mrb[0].mxu0
  %310 = vmatprep.mubr.f32.mxu0 0.0
  %311 = vmatmul.mubr.f32.gmra.mrb[0].mxu0 %v191
  %v312 = vpop.f32.mrb[0].mxu0
  %v313 = vadd.f32 %v184, %v312
  %v314 = vpop.f32.mrb[0].mxu0
  %315 = vdwg.mxu0
  %v316 = vld [vmem:[%s0 + $0x2] sm:$0xff]
  %v317 = vld [vmem:[%s0 + $0xa] sm:$0xff]
  %v318 = vld [vmem:[%s0 + $0x12] sm:$0xff]
  %v319 = vld [vmem:[%s0 + $0x1a] sm:$0xff]
  %v320 = vld [vmem:[%s0 + $0x22] sm:$0xff]
  %v321 = vld [vmem:[%s0 + $0x2a] sm:$0xff]
  %v322 = vld [vmem:[%s0 + $0x32] sm:$0xff]
  %v323 = vld [vmem:[%s0 + $0x3a] sm:$0xff]
  %v324 = vld [vmem:[%s0 + $0x42] sm:$0xff]
  %v325 = vld [vmem:[%s0 + $0x4a] sm:$0xff]
  %v326 = vld [vmem:[%s0 + $0x52] sm:$0xff]
  %v327 = vld [vmem:[%s0 + $0x5a] sm:$0xff]
  %v328 = vld [vmem:[%s0 + $0x62] sm:$0xff]
  %v329 = vld [vmem:[%s0 + $0x6a] sm:$0xff]
  %v330 = vld [vmem:[%s0 + $0x72] sm:$0xff]
  %v331 = vld [vmem:[%s0 + $0x7a] sm:$0xff]
  %s332 = scalar_lea.vmem %s1, 32
  %v333 = vld [vmem:[%s332] sm:$0xff]
  %v334 = vld [vmem:[%s332 + $0x8] sm:$0xff]
  %v336 = vsel %vm57, %v333, 0
  %v339 = vsel %vm57, %v334, 0
  %v342 = vsel %vm57, %v316, 0
  %v345 = vsel %vm57, %v317, 0
  %v348 = vsel %vm57, %v318, 0
  %v351 = vsel %vm57, %v319, 0
  %v354 = vsel %vm57, %v320, 0
  %v357 = vsel %vm57, %v321, 0
  %v360 = vsel %vm57, %v322, 0
  %v363 = vsel %vm57, %v323, 0
  %v366 = vsel %vm57, %v324, 0
  %v369 = vsel %vm57, %v325, 0
  %v372 = vsel %vm57, %v326, 0
  %v375 = vsel %vm57, %v327, 0
  %v378 = vsel %vm57, %v328, 0
  %v381 = vsel %vm57, %v329, 0
  %v384 = vsel %vm57, %v330, 0
  %v387 = vsel %vm57, %v331, 0
  %389 = vmatprep.subr.mxu0 0.0
  %390 = vmatpush1.xpose.msra.mxu0 %v342
  %391 = vmatprep.subr.mxu0 0.0
  %392 = vmatpush1.xpose.msra.mxu0 %v345
  %393 = vmatprep.subr.mxu0 0.0
  %394 = vmatpush1.xpose.msra.mxu0 %v348
  %395 = vmatprep.subr.mxu0 0.0
  %396 = vmatpush1.xpose.msra.mxu0 %v351
  %397 = vmatprep.subr.mxu0 0.0
  %398 = vmatpush1.xpose.msra.mxu0 %v354
  %399 = vmatprep.subr.mxu0 0.0
  %400 = vmatpush1.xpose.msra.mxu0 %v357
  %401 = vmatprep.subr.mxu0 0.0
  %402 = vmatpush1.xpose.msra.mxu0 %v360
  %403 = vmatprep.subr.mxu0 0.0
  %404 = vmatpush1.xpose.msra.mxu0 %v363
  %405 = vmatprep.subr.mxu0 0.0
  %406 = vmatpush1.xpose.msra.mxu0 %v366
  %407 = vmatprep.subr.mxu0 0.0
  %408 = vmatpush1.xpose.msra.mxu0 %v369
  %409 = vmatprep.subr.mxu0 0.0
  %410 = vmatpush1.xpose.msra.mxu0 %v372
  %411 = vmatprep.subr.mxu0 0.0
  %412 = vmatpush1.xpose.msra.mxu0 %v375
  %413 = vmatprep.subr.mxu0 0.0
  %414 = vmatpush1.xpose.msra.mxu0 %v378
  %415 = vmatprep.subr.mxu0 0.0
  %416 = vmatpush1.xpose.msra.mxu0 %v381
  %417 = vmatprep.subr.mxu0 0.0
  %418 = vmatpush1.xpose.msra.mxu0 %v384
  %419 = vmatprep.subr.mxu0 0.0
  %420 = vmatpush1.xpose.msra.mxu0 %v387
  %421 = vmatprep.subr.mxu0 0.0
  %422 = vmatpush1.xpose.msra.mxu0 0.0
  %423 = vmatprep.subr.mxu0 0.0
  %424 = vmatpush1.xpose.msra.mxu0 0.0
  %425 = vmatprep.subr.mxu0 0.0
  %426 = vmatpush1.xpose.msra.mxu0 0.0
  %427 = vmatprep.subr.mxu0 0.0
  %428 = vmatpush1.xpose.msra.mxu0 0.0
  %429 = vmatprep.subr.mxu0 0.0
  %430 = vmatpush1.xpose.msra.mxu0 0.0
  %431 = vmatprep.subr.mxu0 0.0
  %432 = vmatpush1.xpose.msra.mxu0 0.0
  %433 = vmatprep.subr.mxu0 0.0
  %434 = vmatpush1.xpose.msra.mxu0 0.0
  %435 = vmatprep.subr.mxu0 0.0
  %436 = vmatpush1.xpose.msra.mxu0 0.0
  %437 = vmatprep.subr.mxu0 0.0
  %438 = vmatpush1.xpose.msra.mxu0 0.0
  %439 = vmatprep.subr.mxu0 0.0
  %440 = vmatpush1.xpose.msra.mxu0 0.0
  %441 = vmatprep.subr.mxu0 0.0
  %442 = vmatpush1.xpose.msra.mxu0 0.0
  %443 = vmatprep.subr.mxu0 0.0
  %444 = vmatpush1.xpose.msra.mxu0 0.0
  %445 = vmatprep.subr.mxu0 0.0
  %446 = vmatpush1.xpose.msra.mxu0 0.0
  %447 = vmatprep.subr.mxu0 0.0
  %448 = vmatpush1.xpose.msra.mxu0 0.0
  %449 = vmatprep.subr.mxu0 0.0
  %450 = vmatpush1.xpose.msra.mxu0 0.0
  %451 = vmatprep.subr.mxu0 0.0
  %452 = vmatpush1.xpose.msra.mxu0 0.0
  %453 = vmatprep.mubr.f32.mxu0 0.0
  %454 = vmatmul.mubr.f32.gmra.mrb[0].mxu0 %v336
  %v455 = vpop.f32.mrb[0].mxu0
  %v456 = vadd.f32 0.0, %v455
  %v457 = vpop.f32.mrb[0].mxu0
  %458 = vmatprep.mubr.f32.mxu0 0.0
  %459 = vmatmul.mubr.f32.gmra.mrb[0].mxu0 %v339
  %v460 = vpop.f32.mrb[0].mxu0
  %v461 = vadd.f32 0.0, %v460
  %v462 = vpop.f32.mrb[0].mxu0
  %463 = vdwg.mxu0
  %v464 = vadd.f32 %v308, %v456
  %v465 = vadd.f32 %v313, %v461
  %v466 = vld [vmem:[%s0 + $0x10] sm:$0xff]
  %v467 = vld [vmem:[%s0 + $0x18] sm:$0xff]
  %v468 = vld [vmem:[%s0 + $0x20] sm:$0xff]
  %v469 = vld [vmem:[%s0 + $0x28] sm:$0xff]
  %v470 = vld [vmem:[%s0 + $0x30] sm:$0xff]
  %v471 = vld [vmem:[%s0 + $0x38] sm:$0xff]
  %v472 = vld [vmem:[%s0 + $0x40] sm:$0xff]
  %v473 = vld [vmem:[%s0 + $0x48] sm:$0xff]
  %v474 = vld [vmem:[%s0 + $0x50] sm:$0xff]
  %v475 = vld [vmem:[%s0 + $0x58] sm:$0xff]
  %v476 = vld [vmem:[%s0 + $0x60] sm:$0xff]
  %v477 = vld [vmem:[%s0 + $0x68] sm:$0xff]
  %v478 = vld [vmem:[%s0 + $0x70] sm:$0xff]
  %v479 = vld [vmem:[%s0 + $0x78] sm:$0xff]
  %v480 = vld [vmem:[%s0 + $0x80] sm:$0xff]
  %v481 = vld [vmem:[%s0 + $0x88] sm:$0xff]
  %s482 = scalar_lea.vmem %s1, 48
  %v483 = vld [vmem:[%s482] sm:$0xff]
  %v484 = vld [vmem:[%s482 + $0x8] sm:$0xff]
  %v486 = vsel %vm57, %v483, 0
  %v489 = vsel %vm57, %v484, 0
  %v492 = vsel %vm57, %v466, 0
  %v495 = vsel %vm57, %v467, 0
  %v498 = vsel %vm57, %v468, 0
  %v501 = vsel %vm57, %v469, 0
  %v504 = vsel %vm57, %v470, 0
  %v507 = vsel %vm57, %v471, 0
  %v510 = vsel %vm57, %v472, 0
  %v513 = vsel %vm57, %v473, 0
  %v516 = vsel %vm57, %v474, 0
  %v519 = vsel %vm57, %v475, 0
  %v522 = vsel %vm57, %v476, 0
  %v525 = vsel %vm57, %v477, 0
  %v528 = vsel %vm57, %v478, 0
  %v531 = vsel %vm57, %v479, 0
  %v534 = vsel %vm57, %v480, 0
  %v537 = vsel %vm57, %v481, 0
  %539 = vmatprep.subr.mxu0 0.0
  %540 = vmatpush1.xpose.msra.mxu0 %v492
  %541 = vmatprep.subr.mxu0 0.0
  %542 = vmatpush1.xpose.msra.mxu0 %v495
  %543 = vmatprep.subr.mxu0 0.0
  %544 = vmatpush1.xpose.msra.mxu0 %v498
  %545 = vmatprep.subr.mxu0 0.0
  %546 = vmatpush1.xpose.msra.mxu0 %v501
  %547 = vmatprep.subr.mxu0 0.0
  %548 = vmatpush1.xpose.msra.mxu0 %v504
  %549 = vmatprep.subr.mxu0 0.0
  %550 = vmatpush1.xpose.msra.mxu0 %v507
  %551 = vmatprep.subr.mxu0 0.0
  %552 = vmatpush1.xpose.msra.mxu0 %v510
  %553 = vmatprep.subr.mxu0 0.0
  %554 = vmatpush1.xpose.msra.mxu0 %v513
  %555 = vmatprep.subr.mxu0 0.0
  %556 = vmatpush1.xpose.msra.mxu0 %v516
  %557 = vmatprep.subr.mxu0 0.0
  %558 = vmatpush1.xpose.msra.mxu0 %v519
  %559 = vmatprep.subr.mxu0 0.0
  %560 = vmatpush1.xpose.msra.mxu0 %v522
  %561 = vmatprep.subr.mxu0 0.0
  %562 = vmatpush1.xpose.msra.mxu0 %v525
  %563 = vmatprep.subr.mxu0 0.0
  %564 = vmatpush1.xpose.msra.mxu0 %v528
  %565 = vmatprep.subr.mxu0 0.0
  %566 = vmatpush1.xpose.msra.mxu0 %v531
  %567 = vmatprep.subr.mxu0 0.0
  %568 = vmatpush1.xpose.msra.mxu0 %v534
  %569 = vmatprep.subr.mxu0 0.0
  %570 = vmatpush1.xpose.msra.mxu0 %v537
  %571 = vmatprep.subr.mxu0 0.0
  %572 = vmatpush1.xpose.msra.mxu0 0.0
  %573 = vmatprep.subr.mxu0 0.0
  %574 = vmatpush1.xpose.msra.mxu0 0.0
  %575 = vmatprep.subr.mxu0 0.0
  %576 = vmatpush1.xpose.msra.mxu0 0.0
  %577 = vmatprep.subr.mxu0 0.0
  %578 = vmatpush1.xpose.msra.mxu0 0.0
  %579 = vmatprep.subr.mxu0 0.0
  %580 = vmatpush1.xpose.msra.mxu0 0.0
  %581 = vmatprep.subr.mxu0 0.0
  %582 = vmatpush1.xpose.msra.mxu0 0.0
  %583 = vmatprep.subr.mxu0 0.0
  %584 = vmatpush1.xpose.msra.mxu0 0.0
  %585 = vmatprep.subr.mxu0 0.0
  %586 = vmatpush1.xpose.msra.mxu0 0.0
  %587 = vmatprep.subr.mxu0 0.0
  %588 = vmatpush1.xpose.msra.mxu0 0.0
  %589 = vmatprep.subr.mxu0 0.0
  %590 = vmatpush1.xpose.msra.mxu0 0.0
  %591 = vmatprep.subr.mxu0 0.0
  %592 = vmatpush1.xpose.msra.mxu0 0.0
  %593 = vmatprep.subr.mxu0 0.0
  %594 = vmatpush1.xpose.msra.mxu0 0.0
  %595 = vmatprep.subr.mxu0 0.0
  %596 = vmatpush1.xpose.msra.mxu0 0.0
  %597 = vmatprep.subr.mxu0 0.0
  %598 = vmatpush1.xpose.msra.mxu0 0.0
  %599 = vmatprep.subr.mxu0 0.0
  %600 = vmatpush1.xpose.msra.mxu0 0.0
  %601 = vmatprep.subr.mxu0 0.0
  %602 = vmatpush1.xpose.msra.mxu0 0.0
  %603 = vmatprep.mubr.f32.mxu0 0.0
  %604 = vmatmul.mubr.f32.gmra.mrb[0].mxu0 %v486
  %v605 = vpop.f32.mrb[0].mxu0
  %v606 = vadd.f32 0.0, %v605
  %v607 = vpop.f32.mrb[0].mxu0
  %608 = vmatprep.mubr.f32.mxu0 0.0
  %609 = vmatmul.mubr.f32.gmra.mrb[0].mxu0 %v489
  %v610 = vpop.f32.mrb[0].mxu0
  %v611 = vadd.f32 0.0, %v610
  %v612 = vpop.f32.mrb[0].mxu0
  %613 = vdwg.mxu0
  %v614 = vadd.f32 %v464, %v606
  %v615 = vadd.f32 %v465, %v611
  %v616 = vld [vmem:[%s0 + $0x11] sm:$0xff]
  %v617 = vld [vmem:[%s0 + $0x19] sm:$0xff]
  %v618 = vld [vmem:[%s0 + $0x21] sm:$0xff]
  %v619 = vld [vmem:[%s0 + $0x29] sm:$0xff]
  %v620 = vld [vmem:[%s0 + $0x31] sm:$0xff]
  %v621 = vld [vmem:[%s0 + $0x39] sm:$0xff]
  %v622 = vld [vmem:[%s0 + $0x41] sm:$0xff]
  %v623 = vld [vmem:[%s0 + $0x49] sm:$0xff]
  %v624 = vld [vmem:[%s0 + $0x51] sm:$0xff]
  %v625 = vld [vmem:[%s0 + $0x59] sm:$0xff]
  %v626 = vld [vmem:[%s0 + $0x61] sm:$0xff]
  %v627 = vld [vmem:[%s0 + $0x69] sm:$0xff]
  %v628 = vld [vmem:[%s0 + $0x71] sm:$0xff]
  %v629 = vld [vmem:[%s0 + $0x79] sm:$0xff]
  %v630 = vld [vmem:[%s0 + $0x81] sm:$0xff]
  %v631 = vld [vmem:[%s0 + $0x89] sm:$0xff]
  %s632 = scalar_lea.vmem %s1, 64
  %v633 = vld [vmem:[%s632] sm:$0xff]
  %v634 = vld [vmem:[%s632 + $0x8] sm:$0xff]
  %v636 = vsel %vm57, %v633, 0
  %v639 = vsel %vm57, %v634, 0
  %v642 = vsel %vm57, %v616, 0
  %v645 = vsel %vm57, %v617, 0
  %v648 = vsel %vm57, %v618, 0
  %v651 = vsel %vm57, %v619, 0
  %v654 = vsel %vm57, %v620, 0
  %v657 = vsel %vm57, %v621, 0
  %v660 = vsel %vm57, %v622, 0
  %v663 = vsel %vm57, %v623, 0
  %v666 = vsel %vm57, %v624, 0
  %v669 = vsel %vm57, %v625, 0
  %v672 = vsel %vm57, %v626, 0
  %v675 = vsel %vm57, %v627, 0
  %v678 = vsel %vm57, %v628, 0
  %v681 = vsel %vm57, %v629, 0
  %v684 = vsel %vm57, %v630, 0
  %v687 = vsel %vm57, %v631, 0
  %689 = vmatprep.subr.mxu0 0.0
  %690 = vmatpush1.xpose.msra.mxu0 %v642
  %691 = vmatprep.subr.mxu0 0.0
  %692 = vmatpush1.xpose.msra.mxu0 %v645
  %693 = vmatprep.subr.mxu0 0.0
  %694 = vmatpush1.xpose.msra.mxu0 %v648
  %695 = vmatprep.subr.mxu0 0.0
  %696 = vmatpush1.xpose.msra.mxu0 %v651
  %697 = vmatprep.subr.mxu0 0.0
  %698 = vmatpush1.xpose.msra.mxu0 %v654
  %699 = vmatprep.subr.mxu0 0.0
  %700 = vmatpush1.xpose.msra.mxu0 %v657
  %701 = vmatprep.subr.mxu0 0.0
  %702 = vmatpush1.xpose.msra.mxu0 %v660
  %703 = vmatprep.subr.mxu0 0.0
  %704 = vmatpush1.xpose.msra.mxu0 %v663
  %705 = vmatprep.subr.mxu0 0.0
  %706 = vmatpush1.xpose.msra.mxu0 %v666
  %707 = vmatprep.subr.mxu0 0.0
  %708 = vmatpush1.xpose.msra.mxu0 %v669
  %709 = vmatprep.subr.mxu0 0.0
  %710 = vmatpush1.xpose.msra.mxu0 %v672
  %711 = vmatprep.subr.mxu0 0.0
  %712 = vmatpush1.xpose.msra.mxu0 %v675
  %713 = vmatprep.subr.mxu0 0.0
  %714 = vmatpush1.xpose.msra.mxu0 %v678
  %715 = vmatprep.subr.mxu0 0.0
  %716 = vmatpush1.xpose.msra.mxu0 %v681
  %717 = vmatprep.subr.mxu0 0.0
  %718 = vmatpush1.xpose.msra.mxu0 %v684
  %719 = vmatprep.subr.mxu0 0.0
  %720 = vmatpush1.xpose.msra.mxu0 %v687
  %721 = vmatprep.subr.mxu0 0.0
  %722 = vmatpush1.xpose.msra.mxu0 0.0
  %723 = vmatprep.subr.mxu0 0.0
  %724 = vmatpush1.xpose.msra.mxu0 0.0
  %725 = vmatprep.subr.mxu0 0.0
  %726 = vmatpush1.xpose.msra.mxu0 0.0
  %727 = vmatprep.subr.mxu0 0.0
  %728 = vmatpush1.xpose.msra.mxu0 0.0
  %729 = vmatprep.subr.mxu0 0.0
  %730 = vmatpush1.xpose.msra.mxu0 0.0
  %731 = vmatprep.subr.mxu0 0.0
  %732 = vmatpush1.xpose.msra.mxu0 0.0
  %733 = vmatprep.subr.mxu0 0.0
  %734 = vmatpush1.xpose.msra.mxu0 0.0
  %735 = vmatprep.subr.mxu0 0.0
  %736 = vmatpush1.xpose.msra.mxu0 0.0
  %737 = vmatprep.subr.mxu0 0.0
  %738 = vmatpush1.xpose.msra.mxu0 0.0
  %739 = vmatprep.subr.mxu0 0.0
  %740 = vmatpush1.xpose.msra.mxu0 0.0
  %741 = vmatprep.subr.mxu0 0.0
  %742 = vmatpush1.xpose.msra.mxu0 0.0
  %743 = vmatprep.subr.mxu0 0.0
  %744 = vmatpush1.xpose.msra.mxu0 0.0
  %745 = vmatprep.subr.mxu0 0.0
  %746 = vmatpush1.xpose.msra.mxu0 0.0
  %747 = vmatprep.subr.mxu0 0.0
  %748 = vmatpush1.xpose.msra.mxu0 0.0
  %749 = vmatprep.subr.mxu0 0.0
  %750 = vmatpush1.xpose.msra.mxu0 0.0
  %751 = vmatprep.subr.mxu0 0.0
  %752 = vmatpush1.xpose.msra.mxu0 0.0
  %753 = vmatprep.mubr.f32.mxu0 0.0
  %754 = vmatmul.mubr.f32.gmra.mrb[0].mxu0 %v636
  %v755 = vpop.f32.mrb[0].mxu0
  %v756 = vadd.f32 0.0, %v755
  %v757 = vpop.f32.mrb[0].mxu0
  %758 = vmatprep.mubr.f32.mxu0 0.0
  %759 = vmatmul.mubr.f32.gmra.mrb[0].mxu0 %v639
  %v760 = vpop.f32.mrb[0].mxu0
  %v761 = vadd.f32 0.0, %v760
  %v762 = vpop.f32.mrb[0].mxu0
  %763 = vdwg.mxu0
  %v764 = vadd.f32 %v614, %v756
  %v765 = vadd.f32 %v615, %v761
  %v766 = vld [vmem:[%s0 + $0x12] sm:$0xff]
  %v767 = vld [vmem:[%s0 + $0x1a] sm:$0xff]
  %v768 = vld [vmem:[%s0 + $0x22] sm:$0xff]
  %v769 = vld [vmem:[%s0 + $0x2a] sm:$0xff]
  %v770 = vld [vmem:[%s0 + $0x32] sm:$0xff]
  %v771 = vld [vmem:[%s0 + $0x3a] sm:$0xff]
  %v772 = vld [vmem:[%s0 + $0x42] sm:$0xff]
  %v773 = vld [vmem:[%s0 + $0x4a] sm:$0xff]
  %v774 = vld [vmem:[%s0 + $0x52] sm:$0xff]
  %v775 = vld [vmem:[%s0 + $0x5a] sm:$0xff]
  %v776 = vld [vmem:[%s0 + $0x62] sm:$0xff]
  %v777 = vld [vmem:[%s0 + $0x6a] sm:$0xff]
  %v778 = vld [vmem:[%s0 + $0x72] sm:$0xff]
  %v779 = vld [vmem:[%s0 + $0x7a] sm:$0xff]
  %v780 = vld [vmem:[%s0 + $0x82] sm:$0xff]
  %v781 = vld [vmem:[%s0 + $0x8a] sm:$0xff]
  %s782 = scalar_lea.vmem %s1, 80
  %v783 = vld [vmem:[%s782] sm:$0xff]
  %v784 = vld [vmem:[%s782 + $0x8] sm:$0xff]
  %v786 = vsel %vm57, %v783, 0
  %v789 = vsel %vm57, %v784, 0
  %v792 = vsel %vm57, %v766, 0
  %v795 = vsel %vm57, %v767, 0
  %v798 = vsel %vm57, %v768, 0
  %v801 = vsel %vm57, %v769, 0
  %v804 = vsel %vm57, %v770, 0
  %v807 = vsel %vm57, %v771, 0
  %v810 = vsel %vm57, %v772, 0
  %v813 = vsel %vm57, %v773, 0
  %v816 = vsel %vm57, %v774, 0
  %v819 = vsel %vm57, %v775, 0
  %v822 = vsel %vm57, %v776, 0
  %v825 = vsel %vm57, %v777, 0
  %v828 = vsel %vm57, %v778, 0
  %v831 = vsel %vm57, %v779, 0
  %v834 = vsel %vm57, %v780, 0
  %v837 = vsel %vm57, %v781, 0
  %839 = vmatprep.subr.mxu0 0.0
  %840 = vmatpush1.xpose.msra.mxu0 %v792
  %841 = vmatprep.subr.mxu0 0.0
  %842 = vmatpush1.xpose.msra.mxu0 %v795
  %843 = vmatprep.subr.mxu0 0.0
  %844 = vmatpush1.xpose.msra.mxu0 %v798
  %845 = vmatprep.subr.mxu0 0.0
  %846 = vmatpush1.xpose.msra.mxu0 %v801
  %847 = vmatprep.subr.mxu0 0.0
  %848 = vmatpush1.xpose.msra.mxu0 %v804
  %849 = vmatprep.subr.mxu0 0.0
  %850 = vmatpush1.xpose.msra.mxu0 %v807
  %851 = vmatprep.subr.mxu0 0.0
  %852 = vmatpush1.xpose.msra.mxu0 %v810
  %853 = vmatprep.subr.mxu0 0.0
  %854 = vmatpush1.xpose.msra.mxu0 %v813
  %855 = vmatprep.subr.mxu0 0.0
  %856 = vmatpush1.xpose.msra.mxu0 %v816
  %857 = vmatprep.subr.mxu0 0.0
  %858 = vmatpush1.xpose.msra.mxu0 %v819
  %859 = vmatprep.subr.mxu0 0.0
  %860 = vmatpush1.xpose.msra.mxu0 %v822
  %861 = vmatprep.subr.mxu0 0.0
  %862 = vmatpush1.xpose.msra.mxu0 %v825
  %863 = vmatprep.subr.mxu0 0.0
  %864 = vmatpush1.xpose.msra.mxu0 %v828
  %865 = vmatprep.subr.mxu0 0.0
  %866 = vmatpush1.xpose.msra.mxu0 %v831
  %867 = vmatprep.subr.mxu0 0.0
  %868 = vmatpush1.xpose.msra.mxu0 %v834
  %869 = vmatprep.subr.mxu0 0.0
  %870 = vmatpush1.xpose.msra.mxu0 %v837
  %871 = vmatprep.subr.mxu0 0.0
  %872 = vmatpush1.xpose.msra.mxu0 0.0
  %873 = vmatprep.subr.mxu0 0.0
  %874 = vmatpush1.xpose.msra.mxu0 0.0
  %875 = vmatprep.subr.mxu0 0.0
  %876 = vmatpush1.xpose.msra.mxu0 0.0
  %877 = vmatprep.subr.mxu0 0.0
  %878 = vmatpush1.xpose.msra.mxu0 0.0
  %879 = vmatprep.subr.mxu0 0.0
  %880 = vmatpush1.xpose.msra.mxu0 0.0
  %881 = vmatprep.subr.mxu0 0.0
  %882 = vmatpush1.xpose.msra.mxu0 0.0
  %883 = vmatprep.subr.mxu0 0.0
  %884 = vmatpush1.xpose.msra.mxu0 0.0
  %885 = vmatprep.subr.mxu0 0.0
  %886 = vmatpush1.xpose.msra.mxu0 0.0
  %887 = vmatprep.subr.mxu0 0.0
  %888 = vmatpush1.xpose.msra.mxu0 0.0
  %889 = vmatprep.subr.mxu0 0.0
  %890 = vmatpush1.xpose.msra.mxu0 0.0
  %891 = vmatprep.subr.mxu0 0.0
  %892 = vmatpush1.xpose.msra.mxu0 0.0
  %893 = vmatprep.subr.mxu0 0.0
  %894 = vmatpush1.xpose.msra.mxu0 0.0
  %895 = vmatprep.subr.mxu0 0.0
  %896 = vmatpush1.xpose.msra.mxu0 0.0
  %897 = vmatprep.subr.mxu0 0.0
  %898 = vmatpush1.xpose.msra.mxu0 0.0
  %899 = vmatprep.subr.mxu0 0.0
  %900 = vmatpush1.xpose.msra.mxu0 0.0
  %901 = vmatprep.subr.mxu0 0.0
  %902 = vmatpush1.xpose.msra.mxu0 0.0
  %903 = vmatprep.mubr.f32.mxu0 0.0
  %904 = vmatmul.mubr.f32.gmra.mrb[0].mxu0 %v786
  %v905 = vpop.f32.mrb[0].mxu0
  %v906 = vadd.f32 0.0, %v905
  %v907 = vpop.f32.mrb[0].mxu0
  %908 = vmatprep.mubr.f32.mxu0 0.0
  %909 = vmatmul.mubr.f32.gmra.mrb[0].mxu0 %v789
  %v910 = vpop.f32.mrb[0].mxu0
  %v911 = vadd.f32 0.0, %v910
  %v912 = vpop.f32.mrb[0].mxu0
  %913 = vdwg.mxu0
  %v914 = vadd.f32 %v764, %v906
  %v915 = vadd.f32 %v765, %v911
  %v916 = vld [vmem:[%s0 + $0x20] sm:$0xff]
  %v917 = vld [vmem:[%s0 + $0x28] sm:$0xff]
  %v918 = vld [vmem:[%s0 + $0x30] sm:$0xff]
  %v919 = vld [vmem:[%s0 + $0x38] sm:$0xff]
  %v920 = vld [vmem:[%s0 + $0x40] sm:$0xff]
  %v921 = vld [vmem:[%s0 + $0x48] sm:$0xff]
  %v922 = vld [vmem:[%s0 + $0x50] sm:$0xff]
  %v923 = vld [vmem:[%s0 + $0x58] sm:$0xff]
  %v924 = vld [vmem:[%s0 + $0x60] sm:$0xff]
  %v925 = vld [vmem:[%s0 + $0x68] sm:$0xff]
  %v926 = vld [vmem:[%s0 + $0x70] sm:$0xff]
  %v927 = vld [vmem:[%s0 + $0x78] sm:$0xff]
  %v928 = vld [vmem:[%s0 + $0x80] sm:$0xff]
  %v929 = vld [vmem:[%s0 + $0x88] sm:$0xff]
  %v930 = vld [vmem:[%s0 + $0x90] sm:$0xff]
  %v931 = vld [vmem:[%s0 + $0x98] sm:$0xff]
  %s932 = scalar_lea.vmem %s1, 96
  %v933 = vld [vmem:[%s932] sm:$0xff]
  %v934 = vld [vmem:[%s932 + $0x8] sm:$0xff]
  %v936 = vsel %vm57, %v933, 0
  %v939 = vsel %vm57, %v934, 0
  %v942 = vsel %vm57, %v916, 0
  %v945 = vsel %vm57, %v917, 0
  %v948 = vsel %vm57, %v918, 0
  %v951 = vsel %vm57, %v919, 0
  %v954 = vsel %vm57, %v920, 0
  %v957 = vsel %vm57, %v921, 0
  %v960 = vsel %vm57, %v922, 0
  %v963 = vsel %vm57, %v923, 0
  %v966 = vsel %vm57, %v924, 0
  %v969 = vsel %vm57, %v925, 0
  %v972 = vsel %vm57, %v926, 0
  %v975 = vsel %vm57, %v927, 0
  %v978 = vsel %vm57, %v928, 0
  %v981 = vsel %vm57, %v929, 0
  %v984 = vsel %vm57, %v930, 0
  %v987 = vsel %vm57, %v931, 0
  %989 = vmatprep.subr.mxu0 0.0
  %990 = vmatpush1.xpose.msra.mxu0 %v942
  %991 = vmatprep.subr.mxu0 0.0
  %992 = vmatpush1.xpose.msra.mxu0 %v945
  %993 = vmatprep.subr.mxu0 0.0
  %994 = vmatpush1.xpose.msra.mxu0 %v948
  %995 = vmatprep.subr.mxu0 0.0
  %996 = vmatpush1.xpose.msra.mxu0 %v951
  %997 = vmatprep.subr.mxu0 0.0
  %998 = vmatpush1.xpose.msra.mxu0 %v954
  %999 = vmatprep.subr.mxu0 0.0
  %1000 = vmatpush1.xpose.msra.mxu0 %v957
  %1001 = vmatprep.subr.mxu0 0.0
  %1002 = vmatpush1.xpose.msra.mxu0 %v960
  %1003 = vmatprep.subr.mxu0 0.0
  %1004 = vmatpush1.xpose.msra.mxu0 %v963
  %1005 = vmatprep.subr.mxu0 0.0
  %1006 = vmatpush1.xpose.msra.mxu0 %v966
  %1007 = vmatprep.subr.mxu0 0.0
  %1008 = vmatpush1.xpose.msra.mxu0 %v969
  %1009 = vmatprep.subr.mxu0 0.0
  %1010 = vmatpush1.xpose.msra.mxu0 %v972
  %1011 = vmatprep.subr.mxu0 0.0
  %1012 = vmatpush1.xpose.msra.mxu0 %v975
  %1013 = vmatprep.subr.mxu0 0.0
  %1014 = vmatpush1.xpose.msra.mxu0 %v978
  %1015 = vmatprep.subr.mxu0 0.0
  %1016 = vmatpush1.xpose.msra.mxu0 %v981
  %1017 = vmatprep.subr.mxu0 0.0
  %1018 = vmatpush1.xpose.msra.mxu0 %v984
  %1019 = vmatprep.subr.mxu0 0.0
  %1020 = vmatpush1.xpose.msra.mxu0 %v987
  %1021 = vmatprep.subr.mxu0 0.0
  %1022 = vmatpush1.xpose.msra.mxu0 0.0
  %1023 = vmatprep.subr.mxu0 0.0
  %1024 = vmatpush1.xpose.msra.mxu0 0.0
  %1025 = vmatprep.subr.mxu0 0.0
  %1026 = vmatpush1.xpose.msra.mxu0 0.0
  %1027 = vmatprep.subr.mxu0 0.0
  %1028 = vmatpush1.xpose.msra.mxu0 0.0
  %1029 = vmatprep.subr.mxu0 0.0
  %1030 = vmatpush1.xpose.msra.mxu0 0.0
  %1031 = vmatprep.subr.mxu0 0.0
  %1032 = vmatpush1.xpose.msra.mxu0 0.0
  %1033 = vmatprep.subr.mxu0 0.0
  %1034 = vmatpush1.xpose.msra.mxu0 0.0
  %1035 = vmatprep.subr.mxu0 0.0
  %1036 = vmatpush1.xpose.msra.mxu0 0.0
  %1037 = vmatprep.subr.mxu0 0.0
  %1038 = vmatpush1.xpose.msra.mxu0 0.0
  %1039 = vmatprep.subr.mxu0 0.0
  %1040 = vmatpush1.xpose.msra.mxu0 0.0
  %1041 = vmatprep.subr.mxu0 0.0
  %1042 = vmatpush1.xpose.msra.mxu0 0.0
  %1043 = vmatprep.subr.mxu0 0.0
  %1044 = vmatpush1.xpose.msra.mxu0 0.0
  %1045 = vmatprep.subr.mxu0 0.0
  %1046 = vmatpush1.xpose.msra.mxu0 0.0
  %1047 = vmatprep.subr.mxu0 0.0
  %1048 = vmatpush1.xpose.msra.mxu0 0.0
  %1049 = vmatprep.subr.mxu0 0.0
  %1050 = vmatpush1.xpose.msra.mxu0 0.0
  %1051 = vmatprep.subr.mxu0 0.0
  %1052 = vmatpush1.xpose.msra.mxu0 0.0
  %1053 = vmatprep.mubr.f32.mxu0 0.0
  %1054 = vmatmul.mubr.f32.gmra.mrb[0].mxu0 %v936
  %v1055 = vpop.f32.mrb[0].mxu0
  %v1056 = vadd.f32 0.0, %v1055
  %v1057 = vpop.f32.mrb[0].mxu0
  %1058 = vmatprep.mubr.f32.mxu0 0.0
  %1059 = vmatmul.mubr.f32.gmra.mrb[0].mxu0 %v939
  %v1060 = vpop.f32.mrb[0].mxu0
  %v1061 = vadd.f32 0.0, %v1060
  %v1062 = vpop.f32.mrb[0].mxu0
  %1063 = vdwg.mxu0
  %v1064 = vadd.f32 %v914, %v1056
  %v1065 = vadd.f32 %v915, %v1061
  %v1066 = vld [vmem:[%s0 + $0x21] sm:$0xff]
  %v1067 = vld [vmem:[%s0 + $0x29] sm:$0xff]
  %v1068 = vld [vmem:[%s0 + $0x31] sm:$0xff]
  %v1069 = vld [vmem:[%s0 + $0x39] sm:$0xff]
  %v1070 = vld [vmem:[%s0 + $0x41] sm:$0xff]
  %v1071 = vld [vmem:[%s0 + $0x49] sm:$0xff]
  %v1072 = vld [vmem:[%s0 + $0x51] sm:$0xff]
  %v1073 = vld [vmem:[%s0 + $0x59] sm:$0xff]
  %v1074 = vld [vmem:[%s0 + $0x61] sm:$0xff]
  %v1075 = vld [vmem:[%s0 + $0x69] sm:$0xff]
  %v1076 = vld [vmem:[%s0 + $0x71] sm:$0xff]
  %v1077 = vld [vmem:[%s0 + $0x79] sm:$0xff]
  %v1078 = vld [vmem:[%s0 + $0x81] sm:$0xff]
  %v1079 = vld [vmem:[%s0 + $0x89] sm:$0xff]
  %v1080 = vld [vmem:[%s0 + $0x91] sm:$0xff]
  %v1081 = vld [vmem:[%s0 + $0x99] sm:$0xff]
  %s1082 = scalar_lea.vmem %s1, 112
  %v1083 = vld [vmem:[%s1082] sm:$0xff]
  %v1084 = vld [vmem:[%s1082 + $0x8] sm:$0xff]
  %v1086 = vsel %vm57, %v1083, 0
  %v1089 = vsel %vm57, %v1084, 0
  %v1092 = vsel %vm57, %v1066, 0
  %v1095 = vsel %vm57, %v1067, 0
  %v1098 = vsel %vm57, %v1068, 0
  %v1101 = vsel %vm57, %v1069, 0
  %v1104 = vsel %vm57, %v1070, 0
  %v1107 = vsel %vm57, %v1071, 0
  %v1110 = vsel %vm57, %v1072, 0
  %v1113 = vsel %vm57, %v1073, 0
  %v1116 = vsel %vm57, %v1074, 0
  %v1119 = vsel %vm57, %v1075, 0
  %v1122 = vsel %vm57, %v1076, 0
  %v1125 = vsel %vm57, %v1077, 0
  %v1128 = vsel %vm57, %v1078, 0
  %v1131 = vsel %vm57, %v1079, 0
  %v1134 = vsel %vm57, %v1080, 0
  %v1137 = vsel %vm57, %v1081, 0
  %1139 = vmatprep.subr.mxu0 0.0
  %1140 = vmatpush1.xpose.msra.mxu0 %v1092
  %1141 = vmatprep.subr.mxu0 0.0
  %1142 = vmatpush1.xpose.msra.mxu0 %v1095
  %1143 = vmatprep.subr.mxu0 0.0
  %1144 = vmatpush1.xpose.msra.mxu0 %v1098
  %1145 = vmatprep.subr.mxu0 0.0
  %1146 = vmatpush1.xpose.msra.mxu0 %v1101
  %1147 = vmatprep.subr.mxu0 0.0
  %1148 = vmatpush1.xpose.msra.mxu0 %v1104
  %1149 = vmatprep.subr.mxu0 0.0
  %1150 = vmatpush1.xpose.msra.mxu0 %v1107
  %1151 = vmatprep.subr.mxu0 0.0
  %1152 = vmatpush1.xpose.msra.mxu0 %v1110
  %1153 = vmatprep.subr.mxu0 0.0
  %1154 = vmatpush1.xpose.msra.mxu0 %v1113
  %1155 = vmatprep.subr.mxu0 0.0
  %1156 = vmatpush1.xpose.msra.mxu0 %v1116
  %1157 = vmatprep.subr.mxu0 0.0
  %1158 = vmatpush1.xpose.msra.mxu0 %v1119
  %1159 = vmatprep.subr.mxu0 0.0
  %1160 = vmatpush1.xpose.msra.mxu0 %v1122
  %1161 = vmatprep.subr.mxu0 0.0
  %1162 = vmatpush1.xpose.msra.mxu0 %v1125
  %1163 = vmatprep.subr.mxu0 0.0
  %1164 = vmatpush1.xpose.msra.mxu0 %v1128
  %1165 = vmatprep.subr.mxu0 0.0
  %1166 = vmatpush1.xpose.msra.mxu0 %v1131
  %1167 = vmatprep.subr.mxu0 0.0
  %1168 = vmatpush1.xpose.msra.mxu0 %v1134
  %1169 = vmatprep.subr.mxu0 0.0
  %1170 = vmatpush1.xpose.msra.mxu0 %v1137
  %1171 = vmatprep.subr.mxu0 0.0
  %1172 = vmatpush1.xpose.msra.mxu0 0.0
  %1173 = vmatprep.subr.mxu0 0.0
  %1174 = vmatpush1.xpose.msra.mxu0 0.0
  %1175 = vmatprep.subr.mxu0 0.0
  %1176 = vmatpush1.xpose.msra.mxu0 0.0
  %1177 = vmatprep.subr.mxu0 0.0
  %1178 = vmatpush1.xpose.msra.mxu0 0.0
  %1179 = vmatprep.subr.mxu0 0.0
  %1180 = vmatpush1.xpose.msra.mxu0 0.0
  %1181 = vmatprep.subr.mxu0 0.0
  %1182 = vmatpush1.xpose.msra.mxu0 0.0
  %1183 = vmatprep.subr.mxu0 0.0
  %1184 = vmatpush1.xpose.msra.mxu0 0.0
  %1185 = vmatprep.subr.mxu0 0.0
  %1186 = vmatpush1.xpose.msra.mxu0 0.0
  %1187 = vmatprep.subr.mxu0 0.0
  %1188 = vmatpush1.xpose.msra.mxu0 0.0
  %1189 = vmatprep.subr.mxu0 0.0
  %1190 = vmatpush1.xpose.msra.mxu0 0.0
  %1191 = vmatprep.subr.mxu0 0.0
  %1192 = vmatpush1.xpose.msra.mxu0 0.0
  %1193 = vmatprep.subr.mxu0 0.0
  %1194 = vmatpush1.xpose.msra.mxu0 0.0
  %1195 = vmatprep.subr.mxu0 0.0
  %1196 = vmatpush1.xpose.msra.mxu0 0.0
  %1197 = vmatprep.subr.mxu0 0.0
  %1198 = vmatpush1.xpose.msra.mxu0 0.0
  %1199 = vmatprep.subr.mxu0 0.0
  %1200 = vmatpush1.xpose.msra.mxu0 0.0
  %1201 = vmatprep.subr.mxu0 0.0
  %1202 = vmatpush1.xpose.msra.mxu0 0.0
  %1203 = vmatprep.mubr.f32.mxu0 0.0
  %1204 = vmatmul.mubr.f32.gmra.mrb[0].mxu0 %v1086
  %v1205 = vpop.f32.mrb[0].mxu0
  %v1206 = vadd.f32 0.0, %v1205
  %v1207 = vpop.f32.mrb[0].mxu0
  %1208 = vmatprep.mubr.f32.mxu0 0.0
  %1209 = vmatmul.mubr.f32.gmra.mrb[0].mxu0 %v1089
  %v1210 = vpop.f32.mrb[0].mxu0
  %v1211 = vadd.f32 0.0, %v1210
  %v1212 = vpop.f32.mrb[0].mxu0
  %1213 = vdwg.mxu0
  %v1214 = vadd.f32 %v1064, %v1206
  %v1215 = vadd.f32 %v1065, %v1211
  %v1216 = vld [vmem:[%s0 + $0x22] sm:$0xff]
  %v1217 = vld [vmem:[%s0 + $0x2a] sm:$0xff]
  %v1218 = vld [vmem:[%s0 + $0x32] sm:$0xff]
  %v1219 = vld [vmem:[%s0 + $0x3a] sm:$0xff]
  %v1220 = vld [vmem:[%s0 + $0x42] sm:$0xff]
  %v1221 = vld [vmem:[%s0 + $0x4a] sm:$0xff]
  %v1222 = vld [vmem:[%s0 + $0x52] sm:$0xff]
  %v1223 = vld [vmem:[%s0 + $0x5a] sm:$0xff]
  %v1224 = vld [vmem:[%s0 + $0x62] sm:$0xff]
  %v1225 = vld [vmem:[%s0 + $0x6a] sm:$0xff]
  %v1226 = vld [vmem:[%s0 + $0x72] sm:$0xff]
  %v1227 = vld [vmem:[%s0 + $0x7a] sm:$0xff]
  %v1228 = vld [vmem:[%s0 + $0x82] sm:$0xff]
  %v1229 = vld [vmem:[%s0 + $0x8a] sm:$0xff]
  %v1230 = vld [vmem:[%s0 + $0x92] sm:$0xff]
  %v1231 = vld [vmem:[%s0 + $0x9a] sm:$0xff]
  %s1232 = scalar_lea.vmem %s1, 128
  %v1233 = vld [vmem:[%s1232] sm:$0xff]
  %v1234 = vld [vmem:[%s1232 + $0x8] sm:$0xff]
  %v1236 = vsel %vm57, %v1233, 0
  %v1239 = vsel %vm57, %v1234, 0
  %v1242 = vsel %vm57, %v1216, 0
  %v1245 = vsel %vm57, %v1217, 0
  %v1248 = vsel %vm57, %v1218, 0
  %v1251 = vsel %vm57, %v1219, 0
  %v1254 = vsel %vm57, %v1220, 0
  %v1257 = vsel %vm57, %v1221, 0
  %v1260 = vsel %vm57, %v1222, 0
  %v1263 = vsel %vm57, %v1223, 0
  %v1266 = vsel %vm57, %v1224, 0
  %v1269 = vsel %vm57, %v1225, 0
  %v1272 = vsel %vm57, %v1226, 0
  %v1275 = vsel %vm57, %v1227, 0
  %v1278 = vsel %vm57, %v1228, 0
  %v1281 = vsel %vm57, %v1229, 0
  %v1284 = vsel %vm57, %v1230, 0
  %v1287 = vsel %vm57, %v1231, 0
  %1289 = vmatprep.subr.mxu0 0.0
  %1290 = vmatpush1.xpose.msra.mxu0 %v1242
  %1291 = vmatprep.subr.mxu0 0.0
  %1292 = vmatpush1.xpose.msra.mxu0 %v1245
  %1293 = vmatprep.subr.mxu0 0.0
  %1294 = vmatpush1.xpose.msra.mxu0 %v1248
  %1295 = vmatprep.subr.mxu0 0.0
  %1296 = vmatpush1.xpose.msra.mxu0 %v1251
  %1297 = vmatprep.subr.mxu0 0.0
  %1298 = vmatpush1.xpose.msra.mxu0 %v1254
  %1299 = vmatprep.subr.mxu0 0.0
  %1300 = vmatpush1.xpose.msra.mxu0 %v1257
  %1301 = vmatprep.subr.mxu0 0.0
  %1302 = vmatpush1.xpose.msra.mxu0 %v1260
  %1303 = vmatprep.subr.mxu0 0.0
  %1304 = vmatpush1.xpose.msra.mxu0 %v1263
  %1305 = vmatprep.subr.mxu0 0.0
  %1306 = vmatpush1.xpose.msra.mxu0 %v1266
  %1307 = vmatprep.subr.mxu0 0.0
  %1308 = vmatpush1.xpose.msra.mxu0 %v1269
  %1309 = vmatprep.subr.mxu0 0.0
  %1310 = vmatpush1.xpose.msra.mxu0 %v1272
  %1311 = vmatprep.subr.mxu0 0.0
  %1312 = vmatpush1.xpose.msra.mxu0 %v1275
  %1313 = vmatprep.subr.mxu0 0.0
  %1314 = vmatpush1.xpose.msra.mxu0 %v1278
  %1315 = vmatprep.subr.mxu0 0.0
  %1316 = vmatpush1.xpose.msra.mxu0 %v1281
  %1317 = vmatprep.subr.mxu0 0.0
  %1318 = vmatpush1.xpose.msra.mxu0 %v1284
  %1319 = vmatprep.subr.mxu0 0.0
  %1320 = vmatpush1.xpose.msra.mxu0 %v1287
  %1321 = vmatprep.subr.mxu0 0.0
  %1322 = vmatpush1.xpose.msra.mxu0 0.0
  %1323 = vmatprep.subr.mxu0 0.0
  %1324 = vmatpush1.xpose.msra.mxu0 0.0
  %1325 = vmatprep.subr.mxu0 0.0
  %1326 = vmatpush1.xpose.msra.mxu0 0.0
  %1327 = vmatprep.subr.mxu0 0.0
  %1328 = vmatpush1.xpose.msra.mxu0 0.0
  %1329 = vmatprep.subr.mxu0 0.0
  %1330 = vmatpush1.xpose.msra.mxu0 0.0
  %1331 = vmatprep.subr.mxu0 0.0
  %1332 = vmatpush1.xpose.msra.mxu0 0.0
  %1333 = vmatprep.subr.mxu0 0.0
  %1334 = vmatpush1.xpose.msra.mxu0 0.0
  %1335 = vmatprep.subr.mxu0 0.0
  %1336 = vmatpush1.xpose.msra.mxu0 0.0
  %1337 = vmatprep.subr.mxu0 0.0
  %1338 = vmatpush1.xpose.msra.mxu0 0.0
  %1339 = vmatprep.subr.mxu0 0.0
  %1340 = vmatpush1.xpose.msra.mxu0 0.0
  %1341 = vmatprep.subr.mxu0 0.0
  %1342 = vmatpush1.xpose.msra.mxu0 0.0
  %1343 = vmatprep.subr.mxu0 0.0
  %1344 = vmatpush1.xpose.msra.mxu0 0.0
  %1345 = vmatprep.subr.mxu0 0.0
  %1346 = vmatpush1.xpose.msra.mxu0 0.0
  %1347 = vmatprep.subr.mxu0 0.0
  %1348 = vmatpush1.xpose.msra.mxu0 0.0
  %1349 = vmatprep.subr.mxu0 0.0
  %1350 = vmatpush1.xpose.msra.mxu0 0.0
  %1351 = vmatprep.subr.mxu0 0.0
  %1352 = vmatpush1.xpose.msra.mxu0 0.0
  %1353 = vmatprep.mubr.f32.mxu0 0.0
  %1354 = vmatmul.mubr.f32.gmra.mrb[0].mxu0 %v1236
  %v1355 = vpop.f32.mrb[0].mxu0
  %v1356 = vadd.f32 0.0, %v1355
  %v1357 = vpop.f32.mrb[0].mxu0
  %1358 = vmatprep.mubr.f32.mxu0 0.0
  %1359 = vmatmul.mubr.f32.gmra.mrb[0].mxu0 %v1239
  %v1360 = vpop.f32.mrb[0].mxu0
  %v1361 = vadd.f32 0.0, %v1360
  %v1362 = vpop.f32.mrb[0].mxu0
  %1363 = vdwg.mxu0
  %v1364 = vadd.f32 %v1214, %v1356
  %v1365 = vadd.f32 %v1215, %v1361
  %v1366 = vld [vmem:[%s4] sm:$0x1]
  %v1368 = vlaneseq
  %v1369 = vshrl.u32 %v1368, 7
  %v1370 = vsub.s32 0, %v1369
  %v1371 = vrot.slane %v1366, %v1370
  %v1373 = vmul.f32 %v1364, %v1371
  %v1374 = vmul.f32 %v1365, %v1371
  %1375 = vadd.xlane.f32.xlu0 %v1373
  %v1376 = vpop.xlane.xlu0 %1375
  %1377 = vadd.xlane.f32.xlu0 %v1374
  %v1378 = vpop.xlane.xlu0 %1377
  %v1379 = vadd.f32 %v1376, 0.0
  %v1380 = vadd.f32 %v1378, 0.0
  %v1381 = vmul.f32 %v1373, %v1364
  %v1382 = vmul.f32 %v1374, %v1365
  %1383 = vadd.xlane.f32.xlu0 %v1381
  %v1384 = vpop.xlane.xlu0 %1383
  %1385 = vadd.xlane.f32.xlu0 %v1382
  %v1386 = vpop.xlane.xlu0 %1385
  %v1387 = vadd.f32 %v1384, 0.0
  %v1388 = vadd.f32 %v1386, 0.0
  %v1389 = vld [vmem:[%s0 + $0x80] sm:$0xff]
  %v1390 = vld [vmem:[%s0 + $0x88] sm:$0xff]
  %v1391 = vld [vmem:[%s0 + $0x90] sm:$0xff]
  %v1392 = vld [vmem:[%s0 + $0x98] sm:$0xff]
  %v1393 = vld [vmem:[%s0 + $0xa0] sm:$0xff]
  %v1394 = vld [vmem:[%s0 + $0xa8] sm:$0xff]
  %v1395 = vld [vmem:[%s0 + $0xb0] sm:$0xff]
  %v1396 = vld [vmem:[%s0 + $0xb8] sm:$0xff]
  %v1397 = vld [vmem:[%s0 + $0xc0] sm:$0xff]
  %v1398 = vld [vmem:[%s0 + $0xc8] sm:$0xff]
  %v1399 = vld [vmem:[%s0 + $0xd0] sm:$0xff]
  %v1400 = vld [vmem:[%s0 + $0xd8] sm:$0xff]
  %v1401 = vld [vmem:[%s0 + $0xe0] sm:$0xff]
  %v1402 = vld [vmem:[%s0 + $0xe8] sm:$0xff]
  %v1403 = vld [vmem:[%s0 + $0xf0] sm:$0xff]
  %v1404 = vld [vmem:[%s0 + $0xf8] sm:$0xff]
  %v1405 = vld [vmem:[%s0 + $0x81] sm:$0xff]
  %v1406 = vld [vmem:[%s0 + $0x89] sm:$0xff]
  %v1407 = vld [vmem:[%s0 + $0x91] sm:$0xff]
  %v1408 = vld [vmem:[%s0 + $0x99] sm:$0xff]
  %v1409 = vld [vmem:[%s0 + $0xa1] sm:$0xff]
  %v1410 = vld [vmem:[%s0 + $0xa9] sm:$0xff]
  %v1411 = vld [vmem:[%s0 + $0xb1] sm:$0xff]
  %v1412 = vld [vmem:[%s0 + $0xb9] sm:$0xff]
  %v1413 = vld [vmem:[%s0 + $0xc1] sm:$0xff]
  %v1414 = vld [vmem:[%s0 + $0xc9] sm:$0xff]
  %v1415 = vld [vmem:[%s0 + $0xd1] sm:$0xff]
  %v1416 = vld [vmem:[%s0 + $0xd9] sm:$0xff]
  %v1417 = vld [vmem:[%s0 + $0xe1] sm:$0xff]
  %v1418 = vld [vmem:[%s0 + $0xe9] sm:$0xff]
  %v1419 = vld [vmem:[%s0 + $0xf1] sm:$0xff]
  %v1420 = vld [vmem:[%s0 + $0xf9] sm:$0xff]
  %v1422 = vsel %vm57, %v1405, 0
  %v1425 = vsel %vm57, %v1406, 0
  %v1428 = vsel %vm57, %v1407, 0
  %v1431 = vsel %vm57, %v1408, 0
  %v1434 = vsel %vm57, %v1409, 0
  %v1437 = vsel %vm57, %v1410, 0
  %v1440 = vsel %vm57, %v1411, 0
  %v1443 = vsel %vm57, %v1412, 0
  %v1446 = vsel %vm57, %v1413, 0
  %v1449 = vsel %vm57, %v1414, 0
  %v1452 = vsel %vm57, %v1415, 0
  %v1455 = vsel %vm57, %v1416, 0
  %v1458 = vsel %vm57, %v1417, 0
  %v1461 = vsel %vm57, %v1418, 0
  %v1464 = vsel %vm57, %v1419, 0
  %v1467 = vsel %vm57, %v1420, 0
  %1469 = vmatprep.subr.mxu0 0.0
  %1470 = vmatpush1.xpose.msra.mxu0 %v1422
  %1471 = vmatprep.subr.mxu0 0.0
  %1472 = vmatpush1.xpose.msra.mxu0 %v1425
  %1473 = vmatprep.subr.mxu0 0.0
  %1474 = vmatpush1.xpose.msra.mxu0 %v1428
  %1475 = vmatprep.subr.mxu0 0.0
  %1476 = vmatpush1.xpose.msra.mxu0 %v1431
  %1477 = vmatprep.subr.mxu0 0.0
  %1478 = vmatpush1.xpose.msra.mxu0 %v1434
  %1479 = vmatprep.subr.mxu0 0.0
  %1480 = vmatpush1.xpose.msra.mxu0 %v1437
  %1481 = vmatprep.subr.mxu0 0.0
  %1482 = vmatpush1.xpose.msra.mxu0 %v1440
  %1483 = vmatprep.subr.mxu0 0.0
  %1484 = vmatpush1.xpose.msra.mxu0 %v1443
  %1485 = vmatprep.subr.mxu0 0.0
  %1486 = vmatpush1.xpose.msra.mxu0 %v1446
  %1487 = vmatprep.subr.mxu0 0.0
  %1488 = vmatpush1.xpose.msra.mxu0 %v1449
  %1489 = vmatprep.subr.mxu0 0.0
  %1490 = vmatpush1.xpose.msra.mxu0 %v1452
  %1491 = vmatprep.subr.mxu0 0.0
  %1492 = vmatpush1.xpose.msra.mxu0 %v1455
  %1493 = vmatprep.subr.mxu0 0.0
  %1494 = vmatpush1.xpose.msra.mxu0 %v1458
  %1495 = vmatprep.subr.mxu0 0.0
  %1496 = vmatpush1.xpose.msra.mxu0 %v1461
  %1497 = vmatprep.subr.mxu0 0.0
  %1498 = vmatpush1.xpose.msra.mxu0 %v1464
  %1499 = vmatprep.subr.mxu0 0.0
  %1500 = vmatpush1.xpose.msra.mxu0 %v1467
  %1501 = vmatprep.subr.mxu0 0.0
  %1502 = vmatpush1.xpose.msra.mxu0 0.0
  %1503 = vmatprep.subr.mxu0 0.0
  %1504 = vmatpush1.xpose.msra.mxu0 0.0
  %1505 = vmatprep.subr.mxu0 0.0
  %1506 = vmatpush1.xpose.msra.mxu0 0.0
  %1507 = vmatprep.subr.mxu0 0.0
  %1508 = vmatpush1.xpose.msra.mxu0 0.0
  %1509 = vmatprep.subr.mxu0 0.0
  %1510 = vmatpush1.xpose.msra.mxu0 0.0
  %1511 = vmatprep.subr.mxu0 0.0
  %1512 = vmatpush1.xpose.msra.mxu0 0.0
  %1513 = vmatprep.subr.mxu0 0.0
  %1514 = vmatpush1.xpose.msra.mxu0 0.0
  %1515 = vmatprep.subr.mxu0 0.0
  %1516 = vmatpush1.xpose.msra.mxu0 0.0
  %1517 = vmatprep.subr.mxu0 0.0
  %1518 = vmatpush1.xpose.msra.mxu0 0.0
  %1519 = vmatprep.subr.mxu0 0.0
  %1520 = vmatpush1.xpose.msra.mxu0 0.0
  %1521 = vmatprep.subr.mxu0 0.0
  %1522 = vmatpush1.xpose.msra.mxu0 0.0
  %1523 = vmatprep.subr.mxu0 0.0
  %1524 = vmatpush1.xpose.msra.mxu0 0.0
  %1525 = vmatprep.subr.mxu0 0.0
  %1526 = vmatpush1.xpose.msra.mxu0 0.0
  %1527 = vmatprep.subr.mxu0 0.0
  %1528 = vmatpush1.xpose.msra.mxu0 0.0
  %1529 = vmatprep.subr.mxu0 0.0
  %1530 = vmatpush1.xpose.msra.mxu0 0.0
  %1531 = vmatprep.subr.mxu0 0.0
  %1532 = vmatpush1.xpose.msra.mxu0 0.0
  %1533 = vmatprep.mubr.f32.mxu0 0.0
  %1534 = vmatmul.mubr.f32.gmra.mrb[0].mxu0 %v59
  %v1535 = vpop.f32.mrb[0].mxu0
  %v1536 = vadd.f32 0.0, %v1535
  %v1537 = vpop.f32.mrb[0].mxu0
  %1538 = vmatprep.mubr.f32.mxu0 0.0
  %1539 = vmatmul.mubr.f32.gmra.mrb[0].mxu0 %v62
  %v1540 = vpop.f32.mrb[0].mxu0
  %v1541 = vadd.f32 0.0, %v1540
  %v1542 = vpop.f32.mrb[0].mxu0
  %1543 = vdwg.mxu0
  %v1545 = vsel %vm57, %v1389, 0
  %v1548 = vsel %vm57, %v1390, 0
  %v1551 = vsel %vm57, %v1391, 0
  %v1554 = vsel %vm57, %v1392, 0
  %v1557 = vsel %vm57, %v1393, 0
  %v1560 = vsel %vm57, %v1394, 0
  %v1563 = vsel %vm57, %v1395, 0
  %v1566 = vsel %vm57, %v1396, 0
  %v1569 = vsel %vm57, %v1397, 0
  %v1572 = vsel %vm57, %v1398, 0
  %v1575 = vsel %vm57, %v1399, 0
  %v1578 = vsel %vm57, %v1400, 0
  %v1581 = vsel %vm57, %v1401, 0
  %v1584 = vsel %vm57, %v1402, 0
  %v1587 = vsel %vm57, %v1403, 0
  %v1590 = vsel %vm57, %v1404, 0
  %1592 = vmatprep.subr.mxu0 0.0
  %1593 = vmatpush1.xpose.msra.mxu0 %v1545
  %1594 = vmatprep.subr.mxu0 0.0
  %1595 = vmatpush1.xpose.msra.mxu0 %v1548
  %1596 = vmatprep.subr.mxu0 0.0
  %1597 = vmatpush1.xpose.msra.mxu0 %v1551
  %1598 = vmatprep.subr.mxu0 0.0
  %1599 = vmatpush1.xpose.msra.mxu0 %v1554
  %1600 = vmatprep.subr.mxu0 0.0
  %1601 = vmatpush1.xpose.msra.mxu0 %v1557
  %1602 = vmatprep.subr.mxu0 0.0
  %1603 = vmatpush1.xpose.msra.mxu0 %v1560
  %1604 = vmatprep.subr.mxu0 0.0
  %1605 = vmatpush1.xpose.msra.mxu0 %v1563
  %1606 = vmatprep.subr.mxu0 0.0
  %1607 = vmatpush1.xpose.msra.mxu0 %v1566
  %1608 = vmatprep.subr.mxu0 0.0
  %1609 = vmatpush1.xpose.msra.mxu0 %v1569
  %1610 = vmatprep.subr.mxu0 0.0
  %1611 = vmatpush1.xpose.msra.mxu0 %v1572
  %1612 = vmatprep.subr.mxu0 0.0
  %1613 = vmatpush1.xpose.msra.mxu0 %v1575
  %1614 = vmatprep.subr.mxu0 0.0
  %1615 = vmatpush1.xpose.msra.mxu0 %v1578
  %1616 = vmatprep.subr.mxu0 0.0
  %1617 = vmatpush1.xpose.msra.mxu0 %v1581
  %1618 = vmatprep.subr.mxu0 0.0
  %1619 = vmatpush1.xpose.msra.mxu0 %v1584
  %1620 = vmatprep.subr.mxu0 0.0
  %1621 = vmatpush1.xpose.msra.mxu0 %v1587
  %1622 = vmatprep.subr.mxu0 0.0
  %1623 = vmatpush1.xpose.msra.mxu0 %v1590
  %1624 = vmatprep.subr.mxu0 0.0
  %1625 = vmatpush1.xpose.msra.mxu0 0.0
  %1626 = vmatprep.subr.mxu0 0.0
  %1627 = vmatpush1.xpose.msra.mxu0 0.0
  %1628 = vmatprep.subr.mxu0 0.0
  %1629 = vmatpush1.xpose.msra.mxu0 0.0
  %1630 = vmatprep.subr.mxu0 0.0
  %1631 = vmatpush1.xpose.msra.mxu0 0.0
  %1632 = vmatprep.subr.mxu0 0.0
  %1633 = vmatpush1.xpose.msra.mxu0 0.0
  %1634 = vmatprep.subr.mxu0 0.0
  %1635 = vmatpush1.xpose.msra.mxu0 0.0
  %1636 = vmatprep.subr.mxu0 0.0
  %1637 = vmatpush1.xpose.msra.mxu0 0.0
  %1638 = vmatprep.subr.mxu0 0.0
  %1639 = vmatpush1.xpose.msra.mxu0 0.0
  %1640 = vmatprep.subr.mxu0 0.0
  %1641 = vmatpush1.xpose.msra.mxu0 0.0
  %1642 = vmatprep.subr.mxu0 0.0
  %1643 = vmatpush1.xpose.msra.mxu0 0.0
  %1644 = vmatprep.subr.mxu0 0.0
  %1645 = vmatpush1.xpose.msra.mxu0 0.0
  %1646 = vmatprep.subr.mxu0 0.0
  %1647 = vmatpush1.xpose.msra.mxu0 0.0
  %1648 = vmatprep.subr.mxu0 0.0
  %1649 = vmatpush1.xpose.msra.mxu0 0.0
  %1650 = vmatprep.subr.mxu0 0.0
  %1651 = vmatpush1.xpose.msra.mxu0 0.0
  %1652 = vmatprep.subr.mxu0 0.0
  %1653 = vmatpush1.xpose.msra.mxu0 0.0
  %1654 = vmatprep.subr.mxu0 0.0
  %1655 = vmatpush1.xpose.msra.mxu0 0.0
  %1656 = vmatprep.mubr.f32.mxu0 0.0
  %1657 = vmatmul.mubr.f32.gmra.mrb[0].mxu0 %v188
  %v1658 = vpop.f32.mrb[0].mxu0
  %v1659 = vadd.f32 %v1536, %v1658
  %v1660 = vpop.f32.mrb[0].mxu0
  %1661 = vmatprep.mubr.f32.mxu0 0.0
  %1662 = vmatmul.mubr.f32.gmra.mrb[0].mxu0 %v191
  %v1663 = vpop.f32.mrb[0].mxu0
  %v1664 = vadd.f32 %v1541, %v1663
  %v1665 = vpop.f32.mrb[0].mxu0
  %1666 = vdwg.mxu0
  %v1667 = vld [vmem:[%s0 + $0x82] sm:$0xff]
  %v1668 = vld [vmem:[%s0 + $0x8a] sm:$0xff]
  %v1669 = vld [vmem:[%s0 + $0x92] sm:$0xff]
  %v1670 = vld [vmem:[%s0 + $0x9a] sm:$0xff]
  %v1671 = vld [vmem:[%s0 + $0xa2] sm:$0xff]
  %v1672 = vld [vmem:[%s0 + $0xaa] sm:$0xff]
  %v1673 = vld [vmem:[%s0 + $0xb2] sm:$0xff]
  %v1674 = vld [vmem:[%s0 + $0xba] sm:$0xff]
  %v1675 = vld [vmem:[%s0 + $0xc2] sm:$0xff]
  %v1676 = vld [vmem:[%s0 + $0xca] sm:$0xff]
  %v1677 = vld [vmem:[%s0 + $0xd2] sm:$0xff]
  %v1678 = vld [vmem:[%s0 + $0xda] sm:$0xff]
  %v1679 = vld [vmem:[%s0 + $0xe2] sm:$0xff]
  %v1680 = vld [vmem:[%s0 + $0xea] sm:$0xff]
  %v1681 = vld [vmem:[%s0 + $0xf2] sm:$0xff]
  %v1682 = vld [vmem:[%s0 + $0xfa] sm:$0xff]
  %v1684 = vsel %vm57, %v1667, 0
  %v1687 = vsel %vm57, %v1668, 0
  %v1690 = vsel %vm57, %v1669, 0
  %v1693 = vsel %vm57, %v1670, 0
  %v1696 = vsel %vm57, %v1671, 0
  %v1699 = vsel %vm57, %v1672, 0
  %v1702 = vsel %vm57, %v1673, 0
  %v1705 = vsel %vm57, %v1674, 0
  %v1708 = vsel %vm57, %v1675, 0
  %v1711 = vsel %vm57, %v1676, 0
  %v1714 = vsel %vm57, %v1677, 0
  %v1717 = vsel %vm57, %v1678, 0
  %v1720 = vsel %vm57, %v1679, 0
  %v1723 = vsel %vm57, %v1680, 0
  %v1726 = vsel %vm57, %v1681, 0
  %v1729 = vsel %vm57, %v1682, 0
  %1731 = vmatprep.subr.mxu0 0.0
  %1732 = vmatpush1.xpose.msra.mxu0 %v1684
  %1733 = vmatprep.subr.mxu0 0.0
  %1734 = vmatpush1.xpose.msra.mxu0 %v1687
  %1735 = vmatprep.subr.mxu0 0.0
  %1736 = vmatpush1.xpose.msra.mxu0 %v1690
  %1737 = vmatprep.subr.mxu0 0.0
  %1738 = vmatpush1.xpose.msra.mxu0 %v1693
  %1739 = vmatprep.subr.mxu0 0.0
  %1740 = vmatpush1.xpose.msra.mxu0 %v1696
  %1741 = vmatprep.subr.mxu0 0.0
  %1742 = vmatpush1.xpose.msra.mxu0 %v1699
  %1743 = vmatprep.subr.mxu0 0.0
  %1744 = vmatpush1.xpose.msra.mxu0 %v1702
  %1745 = vmatprep.subr.mxu0 0.0
  %1746 = vmatpush1.xpose.msra.mxu0 %v1705
  %1747 = vmatprep.subr.mxu0 0.0
  %1748 = vmatpush1.xpose.msra.mxu0 %v1708
  %1749 = vmatprep.subr.mxu0 0.0
  %1750 = vmatpush1.xpose.msra.mxu0 %v1711
  %1751 = vmatprep.subr.mxu0 0.0
  %1752 = vmatpush1.xpose.msra.mxu0 %v1714
  %1753 = vmatprep.subr.mxu0 0.0
  %1754 = vmatpush1.xpose.msra.mxu0 %v1717
  %1755 = vmatprep.subr.mxu0 0.0
  %1756 = vmatpush1.xpose.msra.mxu0 %v1720
  %1757 = vmatprep.subr.mxu0 0.0
  %1758 = vmatpush1.xpose.msra.mxu0 %v1723
  %1759 = vmatprep.subr.mxu0 0.0
  %1760 = vmatpush1.xpose.msra.mxu0 %v1726
  %1761 = vmatprep.subr.mxu0 0.0
  %1762 = vmatpush1.xpose.msra.mxu0 %v1729
  %1763 = vmatprep.subr.mxu0 0.0
  %1764 = vmatpush1.xpose.msra.mxu0 0.0
  %1765 = vmatprep.subr.mxu0 0.0
  %1766 = vmatpush1.xpose.msra.mxu0 0.0
  %1767 = vmatprep.subr.mxu0 0.0
  %1768 = vmatpush1.xpose.msra.mxu0 0.0
  %1769 = vmatprep.subr.mxu0 0.0
  %1770 = vmatpush1.xpose.msra.mxu0 0.0
  %1771 = vmatprep.subr.mxu0 0.0
  %1772 = vmatpush1.xpose.msra.mxu0 0.0
  %1773 = vmatprep.subr.mxu0 0.0
  %1774 = vmatpush1.xpose.msra.mxu0 0.0
  %1775 = vmatprep.subr.mxu0 0.0
  %1776 = vmatpush1.xpose.msra.mxu0 0.0
  %1777 = vmatprep.subr.mxu0 0.0
  %1778 = vmatpush1.xpose.msra.mxu0 0.0
  %1779 = vmatprep.subr.mxu0 0.0
  %1780 = vmatpush1.xpose.msra.mxu0 0.0
  %1781 = vmatprep.subr.mxu0 0.0
  %1782 = vmatpush1.xpose.msra.mxu0 0.0
  %1783 = vmatprep.subr.mxu0 0.0
  %1784 = vmatpush1.xpose.msra.mxu0 0.0
  %1785 = vmatprep.subr.mxu0 0.0
  %1786 = vmatpush1.xpose.msra.mxu0 0.0
  %1787 = vmatprep.subr.mxu0 0.0
  %1788 = vmatpush1.xpose.msra.mxu0 0.0
  %1789 = vmatprep.subr.mxu0 0.0
  %1790 = vmatpush1.xpose.msra.mxu0 0.0
  %1791 = vmatprep.subr.mxu0 0.0
  %1792 = vmatpush1.xpose.msra.mxu0 0.0
  %1793 = vmatprep.subr.mxu0 0.0
  %1794 = vmatpush1.xpose.msra.mxu0 0.0
  %1795 = vmatprep.mubr.f32.mxu0 0.0
  %1796 = vmatmul.mubr.f32.gmra.mrb[0].mxu0 %v336
  %v1797 = vpop.f32.mrb[0].mxu0
  %v1798 = vadd.f32 0.0, %v1797
  %v1799 = vpop.f32.mrb[0].mxu0
  %1800 = vmatprep.mubr.f32.mxu0 0.0
  %1801 = vmatmul.mubr.f32.gmra.mrb[0].mxu0 %v339
  %v1802 = vpop.f32.mrb[0].mxu0
  %v1803 = vadd.f32 0.0, %v1802
  %v1804 = vpop.f32.mrb[0].mxu0
  %1805 = vdwg.mxu0
  %v1806 = vadd.f32 %v1659, %v1798
  %v1807 = vadd.f32 %v1664, %v1803
  %v1808 = vld [vmem:[%s0 + $0x90] sm:$0xff]
  %v1809 = vld [vmem:[%s0 + $0x98] sm:$0xff]
  %v1810 = vld [vmem:[%s0 + $0xa0] sm:$0xff]
  %v1811 = vld [vmem:[%s0 + $0xa8] sm:$0xff]
  %v1812 = vld [vmem:[%s0 + $0xb0] sm:$0xff]
  %v1813 = vld [vmem:[%s0 + $0xb8] sm:$0xff]
  %v1814 = vld [vmem:[%s0 + $0xc0] sm:$0xff]
  %v1815 = vld [vmem:[%s0 + $0xc8] sm:$0xff]
  %v1816 = vld [vmem:[%s0 + $0xd0] sm:$0xff]
  %v1817 = vld [vmem:[%s0 + $0xd8] sm:$0xff]
  %v1818 = vld [vmem:[%s0 + $0xe0] sm:$0xff]
  %v1819 = vld [vmem:[%s0 + $0xe8] sm:$0xff]
  %v1820 = vld [vmem:[%s0 + $0xf0] sm:$0xff]
  %v1821 = vld [vmem:[%s0 + $0xf8] sm:$0xff]
  %v1822 = vld [vmem:[%s0 + $0x100] sm:$0xff]
  %v1823 = vld [vmem:[%s0 + $0x108] sm:$0xff]
  %v1825 = vsel %vm57, %v1808, 0
  %v1828 = vsel %vm57, %v1809, 0
  %v1831 = vsel %vm57, %v1810, 0
  %v1834 = vsel %vm57, %v1811, 0
  %v1837 = vsel %vm57, %v1812, 0
  %v1840 = vsel %vm57, %v1813, 0
  %v1843 = vsel %vm57, %v1814, 0
  %v1846 = vsel %vm57, %v1815, 0
  %v1849 = vsel %vm57, %v1816, 0
  %v1852 = vsel %vm57, %v1817, 0
  %v1855 = vsel %vm57, %v1818, 0
  %v1858 = vsel %vm57, %v1819, 0
  %v1861 = vsel %vm57, %v1820, 0
  %v1864 = vsel %vm57, %v1821, 0
  %v1867 = vsel %vm57, %v1822, 0
  %v1870 = vsel %vm57, %v1823, 0
  %1872 = vmatprep.subr.mxu0 0.0
  %1873 = vmatpush1.xpose.msra.mxu0 %v1825
  %1874 = vmatprep.subr.mxu0 0.0
  %1875 = vmatpush1.xpose.msra.mxu0 %v1828
  %1876 = vmatprep.subr.mxu0 0.0
  %1877 = vmatpush1.xpose.msra.mxu0 %v1831
  %1878 = vmatprep.subr.mxu0 0.0
  %1879 = vmatpush1.xpose.msra.mxu0 %v1834
  %1880 = vmatprep.subr.mxu0 0.0
  %1881 = vmatpush1.xpose.msra.mxu0 %v1837
  %1882 = vmatprep.subr.mxu0 0.0
  %1883 = vmatpush1.xpose.msra.mxu0 %v1840
  %1884 = vmatprep.subr.mxu0 0.0
  %1885 = vmatpush1.xpose.msra.mxu0 %v1843
  %1886 = vmatprep.subr.mxu0 0.0
  %1887 = vmatpush1.xpose.msra.mxu0 %v1846
  %1888 = vmatprep.subr.mxu0 0.0
  %1889 = vmatpush1.xpose.msra.mxu0 %v1849
  %1890 = vmatprep.subr.mxu0 0.0
  %1891 = vmatpush1.xpose.msra.mxu0 %v1852
  %1892 = vmatprep.subr.mxu0 0.0
  %1893 = vmatpush1.xpose.msra.mxu0 %v1855
  %1894 = vmatprep.subr.mxu0 0.0
  %1895 = vmatpush1.xpose.msra.mxu0 %v1858
  %1896 = vmatprep.subr.mxu0 0.0
  %1897 = vmatpush1.xpose.msra.mxu0 %v1861
  %1898 = vmatprep.subr.mxu0 0.0
  %1899 = vmatpush1.xpose.msra.mxu0 %v1864
  %1900 = vmatprep.subr.mxu0 0.0
  %1901 = vmatpush1.xpose.msra.mxu0 %v1867
  %1902 = vmatprep.subr.mxu0 0.0
  %1903 = vmatpush1.xpose.msra.mxu0 %v1870
  %1904 = vmatprep.subr.mxu0 0.0
  %1905 = vmatpush1.xpose.msra.mxu0 0.0
  %1906 = vmatprep.subr.mxu0 0.0
  %1907 = vmatpush1.xpose.msra.mxu0 0.0
  %1908 = vmatprep.subr.mxu0 0.0
  %1909 = vmatpush1.xpose.msra.mxu0 0.0
  %1910 = vmatprep.subr.mxu0 0.0
  %1911 = vmatpush1.xpose.msra.mxu0 0.0
  %1912 = vmatprep.subr.mxu0 0.0
  %1913 = vmatpush1.xpose.msra.mxu0 0.0
  %1914 = vmatprep.subr.mxu0 0.0
  %1915 = vmatpush1.xpose.msra.mxu0 0.0
  %1916 = vmatprep.subr.mxu0 0.0
  %1917 = vmatpush1.xpose.msra.mxu0 0.0
  %1918 = vmatprep.subr.mxu0 0.0
  %1919 = vmatpush1.xpose.msra.mxu0 0.0
  %1920 = vmatprep.subr.mxu0 0.0
  %1921 = vmatpush1.xpose.msra.mxu0 0.0
  %1922 = vmatprep.subr.mxu0 0.0
  %1923 = vmatpush1.xpose.msra.mxu0 0.0
  %1924 = vmatprep.subr.mxu0 0.0
  %1925 = vmatpush1.xpose.msra.mxu0 0.0
  %1926 = vmatprep.subr.mxu0 0.0
  %1927 = vmatpush1.xpose.msra.mxu0 0.0
  %1928 = vmatprep.subr.mxu0 0.0
  %1929 = vmatpush1.xpose.msra.mxu0 0.0
  %1930 = vmatprep.subr.mxu0 0.0
  %1931 = vmatpush1.xpose.msra.mxu0 0.0
  %1932 = vmatprep.subr.mxu0 0.0
  %1933 = vmatpush1.xpose.msra.mxu0 0.0
  %1934 = vmatprep.subr.mxu0 0.0
  %1935 = vmatpush1.xpose.msra.mxu0 0.0
  %1936 = vmatprep.mubr.f32.mxu0 0.0
  %1937 = vmatmul.mubr.f32.gmra.mrb[0].mxu0 %v486
  %v1938 = vpop.f32.mrb[0].mxu0
  %v1939 = vadd.f32 0.0, %v1938
  %v1940 = vpop.f32.mrb[0].mxu0
  %1941 = vmatprep.mubr.f32.mxu0 0.0
  %1942 = vmatmul.mubr.f32.gmra.mrb[0].mxu0 %v489
  %v1943 = vpop.f32.mrb[0].mxu0
  %v1944 = vadd.f32 0.0, %v1943
  %v1945 = vpop.f32.mrb[0].mxu0
  %1946 = vdwg.mxu0
  %v1947 = vadd.f32 %v1806, %v1939
  %v1948 = vadd.f32 %v1807, %v1944
  %v1949 = vld [vmem:[%s0 + $0x91] sm:$0xff]
  %v1950 = vld [vmem:[%s0 + $0x99] sm:$0xff]
  %v1951 = vld [vmem:[%s0 + $0xa1] sm:$0xff]
  %v1952 = vld [vmem:[%s0 + $0xa9] sm:$0xff]
  %v1953 = vld [vmem:[%s0 + $0xb1] sm:$0xff]
  %v1954 = vld [vmem:[%s0 + $0xb9] sm:$0xff]
  %v1955 = vld [vmem:[%s0 + $0xc1] sm:$0xff]
  %v1956 = vld [vmem:[%s0 + $0xc9] sm:$0xff]
  %v1957 = vld [vmem:[%s0 + $0xd1] sm:$0xff]
  %v1958 = vld [vmem:[%s0 + $0xd9] sm:$0xff]
  %v1959 = vld [vmem:[%s0 + $0xe1] sm:$0xff]
  %v1960 = vld [vmem:[%s0 + $0xe9] sm:$0xff]
  %v1961 = vld [vmem:[%s0 + $0xf1] sm:$0xff]
  %v1962 = vld [vmem:[%s0 + $0xf9] sm:$0xff]
  %v1963 = vld [vmem:[%s0 + $0x101] sm:$0xff]
  %v1964 = vld [vmem:[%s0 + $0x109] sm:$0xff]
  %v1966 = vsel %vm57, %v1949, 0
  %v1969 = vsel %vm57, %v1950, 0
  %v1972 = vsel %vm57, %v1951, 0
  %v1975 = vsel %vm57, %v1952, 0
  %v1978 = vsel %vm57, %v1953, 0
  %v1981 = vsel %vm57, %v1954, 0
  %v1984 = vsel %vm57, %v1955, 0
  %v1987 = vsel %vm57, %v1956, 0
  %v1990 = vsel %vm57, %v1957, 0
  %v1993 = vsel %vm57, %v1958, 0
  %v1996 = vsel %vm57, %v1959, 0
  %v1999 = vsel %vm57, %v1960, 0
  %v2002 = vsel %vm57, %v1961, 0
  %v2005 = vsel %vm57, %v1962, 0
  %v2008 = vsel %vm57, %v1963, 0
  %v2011 = vsel %vm57, %v1964, 0
  %2013 = vmatprep.subr.mxu0 0.0
  %2014 = vmatpush1.xpose.msra.mxu0 %v1966
  %2015 = vmatprep.subr.mxu0 0.0
  %2016 = vmatpush1.xpose.msra.mxu0 %v1969
  %2017 = vmatprep.subr.mxu0 0.0
  %2018 = vmatpush1.xpose.msra.mxu0 %v1972
  %2019 = vmatprep.subr.mxu0 0.0
  %2020 = vmatpush1.xpose.msra.mxu0 %v1975
  %2021 = vmatprep.subr.mxu0 0.0
  %2022 = vmatpush1.xpose.msra.mxu0 %v1978
  %2023 = vmatprep.subr.mxu0 0.0
  %2024 = vmatpush1.xpose.msra.mxu0 %v1981
  %2025 = vmatprep.subr.mxu0 0.0
  %2026 = vmatpush1.xpose.msra.mxu0 %v1984
  %2027 = vmatprep.subr.mxu0 0.0
  %2028 = vmatpush1.xpose.msra.mxu0 %v1987
  %2029 = vmatprep.subr.mxu0 0.0
  %2030 = vmatpush1.xpose.msra.mxu0 %v1990
  %2031 = vmatprep.subr.mxu0 0.0
  %2032 = vmatpush1.xpose.msra.mxu0 %v1993
  %2033 = vmatprep.subr.mxu0 0.0
  %2034 = vmatpush1.xpose.msra.mxu0 %v1996
  %2035 = vmatprep.subr.mxu0 0.0
  %2036 = vmatpush1.xpose.msra.mxu0 %v1999
  %2037 = vmatprep.subr.mxu0 0.0
  %2038 = vmatpush1.xpose.msra.mxu0 %v2002
  %2039 = vmatprep.subr.mxu0 0.0
  %2040 = vmatpush1.xpose.msra.mxu0 %v2005
  %2041 = vmatprep.subr.mxu0 0.0
  %2042 = vmatpush1.xpose.msra.mxu0 %v2008
  %2043 = vmatprep.subr.mxu0 0.0
  %2044 = vmatpush1.xpose.msra.mxu0 %v2011
  %2045 = vmatprep.subr.mxu0 0.0
  %2046 = vmatpush1.xpose.msra.mxu0 0.0
  %2047 = vmatprep.subr.mxu0 0.0
  %2048 = vmatpush1.xpose.msra.mxu0 0.0
  %2049 = vmatprep.subr.mxu0 0.0
  %2050 = vmatpush1.xpose.msra.mxu0 0.0
  %2051 = vmatprep.subr.mxu0 0.0
  %2052 = vmatpush1.xpose.msra.mxu0 0.0
  %2053 = vmatprep.subr.mxu0 0.0
  %2054 = vmatpush1.xpose.msra.mxu0 0.0
  %2055 = vmatprep.subr.mxu0 0.0
  %2056 = vmatpush1.xpose.msra.mxu0 0.0
  %2057 = vmatprep.subr.mxu0 0.0
  %2058 = vmatpush1.xpose.msra.mxu0 0.0
  %2059 = vmatprep.subr.mxu0 0.0
  %2060 = vmatpush1.xpose.msra.mxu0 0.0
  %2061 = vmatprep.subr.mxu0 0.0
  %2062 = vmatpush1.xpose.msra.mxu0 0.0
  %2063 = vmatprep.subr.mxu0 0.0
  %2064 = vmatpush1.xpose.msra.mxu0 0.0
  %2065 = vmatprep.subr.mxu0 0.0
  %2066 = vmatpush1.xpose.msra.mxu0 0.0
  %2067 = vmatprep.subr.mxu0 0.0
  %2068 = vmatpush1.xpose.msra.mxu0 0.0
  %2069 = vmatprep.subr.mxu0 0.0
  %2070 = vmatpush1.xpose.msra.mxu0 0.0
  %2071 = vmatprep.subr.mxu0 0.0
  %2072 = vmatpush1.xpose.msra.mxu0 0.0
  %2073 = vmatprep.subr.mxu0 0.0
  %2074 = vmatpush1.xpose.msra.mxu0 0.0
  %2075 = vmatprep.subr.mxu0 0.0
  %2076 = vmatpush1.xpose.msra.mxu0 0.0
  %2077 = vmatprep.mubr.f32.mxu0 0.0
  %2078 = vmatmul.mubr.f32.gmra.mrb[0].mxu0 %v636
  %v2079 = vpop.f32.mrb[0].mxu0
  %v2080 = vadd.f32 0.0, %v2079
  %v2081 = vpop.f32.mrb[0].mxu0
  %2082 = vmatprep.mubr.f32.mxu0 0.0
  %2083 = vmatmul.mubr.f32.gmra.mrb[0].mxu0 %v639
  %v2084 = vpop.f32.mrb[0].mxu0
  %v2085 = vadd.f32 0.0, %v2084
  %v2086 = vpop.f32.mrb[0].mxu0
  %2087 = vdwg.mxu0
  %v2088 = vadd.f32 %v1947, %v2080
  %v2089 = vadd.f32 %v1948, %v2085
  %v2090 = vld [vmem:[%s0 + $0x92] sm:$0xff]
  %v2091 = vld [vmem:[%s0 + $0x9a] sm:$0xff]
  %v2092 = vld [vmem:[%s0 + $0xa2] sm:$0xff]
  %v2093 = vld [vmem:[%s0 + $0xaa] sm:$0xff]
  %v2094 = vld [vmem:[%s0 + $0xb2] sm:$0xff]
  %v2095 = vld [vmem:[%s0 + $0xba] sm:$0xff]
  %v2096 = vld [vmem:[%s0 + $0xc2] sm:$0xff]
  %v2097 = vld [vmem:[%s0 + $0xca] sm:$0xff]
  %v2098 = vld [vmem:[%s0 + $0xd2] sm:$0xff]
  %v2099 = vld [vmem:[%s0 + $0xda] sm:$0xff]
  %v2100 = vld [vmem:[%s0 + $0xe2] sm:$0xff]
  %v2101 = vld [vmem:[%s0 + $0xea] sm:$0xff]
  %v2102 = vld [vmem:[%s0 + $0xf2] sm:$0xff]
  %v2103 = vld [vmem:[%s0 + $0xfa] sm:$0xff]
  %v2104 = vld [vmem:[%s0 + $0x102] sm:$0xff]
  %v2105 = vld [vmem:[%s0 + $0x10a] sm:$0xff]
  %v2107 = vsel %vm57, %v2090, 0
  %v2110 = vsel %vm57, %v2091, 0
  %v2113 = vsel %vm57, %v2092, 0
  %v2116 = vsel %vm57, %v2093, 0
  %v2119 = vsel %vm57, %v2094, 0
  %v2122 = vsel %vm57, %v2095, 0
  %v2125 = vsel %vm57, %v2096, 0
  %v2128 = vsel %vm57, %v2097, 0
  %v2131 = vsel %vm57, %v2098, 0
  %v2134 = vsel %vm57, %v2099, 0
  %v2137 = vsel %vm57, %v2100, 0
  %v2140 = vsel %vm57, %v2101, 0
  %v2143 = vsel %vm57, %v2102, 0
  %v2146 = vsel %vm57, %v2103, 0
  %v2149 = vsel %vm57, %v2104, 0
  %v2152 = vsel %vm57, %v2105, 0
  %2154 = vmatprep.subr.mxu0 0.0
  %2155 = vmatpush1.xpose.msra.mxu0 %v2107
  %2156 = vmatprep.subr.mxu0 0.0
  %2157 = vmatpush1.xpose.msra.mxu0 %v2110
  %2158 = vmatprep.subr.mxu0 0.0
  %2159 = vmatpush1.xpose.msra.mxu0 %v2113
  %2160 = vmatprep.subr.mxu0 0.0
  %2161 = vmatpush1.xpose.msra.mxu0 %v2116
  %2162 = vmatprep.subr.mxu0 0.0
  %2163 = vmatpush1.xpose.msra.mxu0 %v2119
  %2164 = vmatprep.subr.mxu0 0.0
  %2165 = vmatpush1.xpose.msra.mxu0 %v2122
  %2166 = vmatprep.subr.mxu0 0.0
  %2167 = vmatpush1.xpose.msra.mxu0 %v2125
  %2168 = vmatprep.subr.mxu0 0.0
  %2169 = vmatpush1.xpose.msra.mxu0 %v2128
  %2170 = vmatprep.subr.mxu0 0.0
  %2171 = vmatpush1.xpose.msra.mxu0 %v2131
  %2172 = vmatprep.subr.mxu0 0.0
  %2173 = vmatpush1.xpose.msra.mxu0 %v2134
  %2174 = vmatprep.subr.mxu0 0.0
  %2175 = vmatpush1.xpose.msra.mxu0 %v2137
  %2176 = vmatprep.subr.mxu0 0.0
  %2177 = vmatpush1.xpose.msra.mxu0 %v2140
  %2178 = vmatprep.subr.mxu0 0.0
  %2179 = vmatpush1.xpose.msra.mxu0 %v2143
  %2180 = vmatprep.subr.mxu0 0.0
  %2181 = vmatpush1.xpose.msra.mxu0 %v2146
  %2182 = vmatprep.subr.mxu0 0.0
  %2183 = vmatpush1.xpose.msra.mxu0 %v2149
  %2184 = vmatprep.subr.mxu0 0.0
  %2185 = vmatpush1.xpose.msra.mxu0 %v2152
  %2186 = vmatprep.subr.mxu0 0.0
  %2187 = vmatpush1.xpose.msra.mxu0 0.0
  %2188 = vmatprep.subr.mxu0 0.0
  %2189 = vmatpush1.xpose.msra.mxu0 0.0
  %2190 = vmatprep.subr.mxu0 0.0
  %2191 = vmatpush1.xpose.msra.mxu0 0.0
  %2192 = vmatprep.subr.mxu0 0.0
  %2193 = vmatpush1.xpose.msra.mxu0 0.0
  %2194 = vmatprep.subr.mxu0 0.0
  %2195 = vmatpush1.xpose.msra.mxu0 0.0
  %2196 = vmatprep.subr.mxu0 0.0
  %2197 = vmatpush1.xpose.msra.mxu0 0.0
  %2198 = vmatprep.subr.mxu0 0.0
  %2199 = vmatpush1.xpose.msra.mxu0 0.0
  %2200 = vmatprep.subr.mxu0 0.0
  %2201 = vmatpush1.xpose.msra.mxu0 0.0
  %2202 = vmatprep.subr.mxu0 0.0
  %2203 = vmatpush1.xpose.msra.mxu0 0.0
  %2204 = vmatprep.subr.mxu0 0.0
  %2205 = vmatpush1.xpose.msra.mxu0 0.0
  %2206 = vmatprep.subr.mxu0 0.0
  %2207 = vmatpush1.xpose.msra.mxu0 0.0
  %2208 = vmatprep.subr.mxu0 0.0
  %2209 = vmatpush1.xpose.msra.mxu0 0.0
  %2210 = vmatprep.subr.mxu0 0.0
  %2211 = vmatpush1.xpose.msra.mxu0 0.0
  %2212 = vmatprep.subr.mxu0 0.0
  %2213 = vmatpush1.xpose.msra.mxu0 0.0
  %2214 = vmatprep.subr.mxu0 0.0
  %2215 = vmatpush1.xpose.msra.mxu0 0.0
  %2216 = vmatprep.subr.mxu0 0.0
  %2217 = vmatpush1.xpose.msra.mxu0 0.0
  %2218 = vmatprep.mubr.f32.mxu0 0.0
  %2219 = vmatmul.mubr.f32.gmra.mrb[0].mxu0 %v786
  %v2220 = vpop.f32.mrb[0].mxu0
  %v2221 = vadd.f32 0.0, %v2220
  %v2222 = vpop.f32.mrb[0].mxu0
  %2223 = vmatprep.mubr.f32.mxu0 0.0
  %2224 = vmatmul.mubr.f32.gmra.mrb[0].mxu0 %v789
  %v2225 = vpop.f32.mrb[0].mxu0
  %v2226 = vadd.f32 0.0, %v2225
  %v2227 = vpop.f32.mrb[0].mxu0
  %2228 = vdwg.mxu0
  %v2229 = vadd.f32 %v2088, %v2221
  %v2230 = vadd.f32 %v2089, %v2226
  %v2231 = vld [vmem:[%s0 + $0xa0] sm:$0xff]
  %v2232 = vld [vmem:[%s0 + $0xa8] sm:$0xff]
  %v2233 = vld [vmem:[%s0 + $0xb0] sm:$0xff]
  %v2234 = vld [vmem:[%s0 + $0xb8] sm:$0xff]
  %v2235 = vld [vmem:[%s0 + $0xc0] sm:$0xff]
  %v2236 = vld [vmem:[%s0 + $0xc8] sm:$0xff]
  %v2237 = vld [vmem:[%s0 + $0xd0] sm:$0xff]
  %v2238 = vld [vmem:[%s0 + $0xd8] sm:$0xff]
  %v2239 = vld [vmem:[%s0 + $0xe0] sm:$0xff]
  %v2240 = vld [vmem:[%s0 + $0xe8] sm:$0xff]
  %v2241 = vld [vmem:[%s0 + $0xf0] sm:$0xff]
  %v2242 = vld [vmem:[%s0 + $0xf8] sm:$0xff]
  %v2243 = vld [vmem:[%s0 + $0x100] sm:$0xff]
  %v2244 = vld [vmem:[%s0 + $0x108] sm:$0xff]
  %v2245 = vld [vmem:[%s0 + $0x110] sm:$0xff]
  %v2246 = vld [vmem:[%s0 + $0x118] sm:$0xff]
  %v2248 = vsel %vm57, %v2231, 0
  %v2251 = vsel %vm57, %v2232, 0
  %v2254 = vsel %vm57, %v2233, 0
  %v2257 = vsel %vm57, %v2234, 0
  %v2260 = vsel %vm57, %v2235, 0
  %v2263 = vsel %vm57, %v2236, 0
  %v2266 = vsel %vm57, %v2237, 0
  %v2269 = vsel %vm57, %v2238, 0
  %v2272 = vsel %vm57, %v2239, 0
  %v2275 = vsel %vm57, %v2240, 0
  %v2278 = vsel %vm57, %v2241, 0
  %v2281 = vsel %vm57, %v2242, 0
  %v2284 = vsel %vm57, %v2243, 0
  %v2287 = vsel %vm57, %v2244, 0
  %v2290 = vsel %vm57, %v2245, 0
  %v2293 = vsel %vm57, %v2246, 0
  %2295 = vmatprep.subr.mxu0 0.0
  %2296 = vmatpush1.xpose.msra.mxu0 %v2248
  %2297 = vmatprep.subr.mxu0 0.0
  %2298 = vmatpush1.xpose.msra.mxu0 %v2251
  %2299 = vmatprep.subr.mxu0 0.0
  %2300 = vmatpush1.xpose.msra.mxu0 %v2254
  %2301 = vmatprep.subr.mxu0 0.0
  %2302 = vmatpush1.xpose.msra.mxu0 %v2257
  %2303 = vmatprep.subr.mxu0 0.0
  %2304 = vmatpush1.xpose.msra.mxu0 %v2260
  %2305 = vmatprep.subr.mxu0 0.0
  %2306 = vmatpush1.xpose.msra.mxu0 %v2263
  %2307 = vmatprep.subr.mxu0 0.0
  %2308 = vmatpush1.xpose.msra.mxu0 %v2266
  %2309 = vmatprep.subr.mxu0 0.0
  %2310 = vmatpush1.xpose.msra.mxu0 %v2269
  %2311 = vmatprep.subr.mxu0 0.0
  %2312 = vmatpush1.xpose.msra.mxu0 %v2272
  %2313 = vmatprep.subr.mxu0 0.0
  %2314 = vmatpush1.xpose.msra.mxu0 %v2275
  %2315 = vmatprep.subr.mxu0 0.0
  %2316 = vmatpush1.xpose.msra.mxu0 %v2278
  %2317 = vmatprep.subr.mxu0 0.0
  %2318 = vmatpush1.xpose.msra.mxu0 %v2281
  %2319 = vmatprep.subr.mxu0 0.0
  %2320 = vmatpush1.xpose.msra.mxu0 %v2284
  %2321 = vmatprep.subr.mxu0 0.0
  %2322 = vmatpush1.xpose.msra.mxu0 %v2287
  %2323 = vmatprep.subr.mxu0 0.0
  %2324 = vmatpush1.xpose.msra.mxu0 %v2290
  %2325 = vmatprep.subr.mxu0 0.0
  %2326 = vmatpush1.xpose.msra.mxu0 %v2293
  %2327 = vmatprep.subr.mxu0 0.0
  %2328 = vmatpush1.xpose.msra.mxu0 0.0
  %2329 = vmatprep.subr.mxu0 0.0
  %2330 = vmatpush1.xpose.msra.mxu0 0.0
  %2331 = vmatprep.subr.mxu0 0.0
  %2332 = vmatpush1.xpose.msra.mxu0 0.0
  %2333 = vmatprep.subr.mxu0 0.0
  %2334 = vmatpush1.xpose.msra.mxu0 0.0
  %2335 = vmatprep.subr.mxu0 0.0
  %2336 = vmatpush1.xpose.msra.mxu0 0.0
  %2337 = vmatprep.subr.mxu0 0.0
  %2338 = vmatpush1.xpose.msra.mxu0 0.0
  %2339 = vmatprep.subr.mxu0 0.0
  %2340 = vmatpush1.xpose.msra.mxu0 0.0
  %2341 = vmatprep.subr.mxu0 0.0
  %2342 = vmatpush1.xpose.msra.mxu0 0.0
  %2343 = vmatprep.subr.mxu0 0.0
  %2344 = vmatpush1.xpose.msra.mxu0 0.0
  %2345 = vmatprep.subr.mxu0 0.0
  %2346 = vmatpush1.xpose.msra.mxu0 0.0
  %2347 = vmatprep.subr.mxu0 0.0
  %2348 = vmatpush1.xpose.msra.mxu0 0.0
  %2349 = vmatprep.subr.mxu0 0.0
  %2350 = vmatpush1.xpose.msra.mxu0 0.0
  %2351 = vmatprep.subr.mxu0 0.0
  %2352 = vmatpush1.xpose.msra.mxu0 0.0
  %2353 = vmatprep.subr.mxu0 0.0
  %2354 = vmatpush1.xpose.msra.mxu0 0.0
  %2355 = vmatprep.subr.mxu0 0.0
  %2356 = vmatpush1.xpose.msra.mxu0 0.0
  %2357 = vmatprep.subr.mxu0 0.0
  %2358 = vmatpush1.xpose.msra.mxu0 0.0
  %2359 = vmatprep.mubr.f32.mxu0 0.0
  %2360 = vmatmul.mubr.f32.gmra.mrb[0].mxu0 %v936
  %v2361 = vpop.f32.mrb[0].mxu0
  %v2362 = vadd.f32 0.0, %v2361
  %v2363 = vpop.f32.mrb[0].mxu0
  %2364 = vmatprep.mubr.f32.mxu0 0.0
  %2365 = vmatmul.mubr.f32.gmra.mrb[0].mxu0 %v939
  %v2366 = vpop.f32.mrb[0].mxu0
  %v2367 = vadd.f32 0.0, %v2366
  %v2368 = vpop.f32.mrb[0].mxu0
  %2369 = vdwg.mxu0
  %v2370 = vadd.f32 %v2229, %v2362
  %v2371 = vadd.f32 %v2230, %v2367
  %v2372 = vld [vmem:[%s0 + $0xa1] sm:$0xff]
  %v2373 = vld [vmem:[%s0 + $0xa9] sm:$0xff]
  %v2374 = vld [vmem:[%s0 + $0xb1] sm:$0xff]
  %v2375 = vld [vmem:[%s0 + $0xb9] sm:$0xff]
  %v2376 = vld [vmem:[%s0 + $0xc1] sm:$0xff]
  %v2377 = vld [vmem:[%s0 + $0xc9] sm:$0xff]
  %v2378 = vld [vmem:[%s0 + $0xd1] sm:$0xff]
  %v2379 = vld [vmem:[%s0 + $0xd9] sm:$0xff]
  %v2380 = vld [vmem:[%s0 + $0xe1] sm:$0xff]
  %v2381 = vld [vmem:[%s0 + $0xe9] sm:$0xff]
  %v2382 = vld [vmem:[%s0 + $0xf1] sm:$0xff]
  %v2383 = vld [vmem:[%s0 + $0xf9] sm:$0xff]
  %v2384 = vld [vmem:[%s0 + $0x101] sm:$0xff]
  %v2385 = vld [vmem:[%s0 + $0x109] sm:$0xff]
  %v2386 = vld [vmem:[%s0 + $0x111] sm:$0xff]
  %v2387 = vld [vmem:[%s0 + $0x119] sm:$0xff]
  %v2389 = vsel %vm57, %v2372, 0
  %v2392 = vsel %vm57, %v2373, 0
  %v2395 = vsel %vm57, %v2374, 0
  %v2398 = vsel %vm57, %v2375, 0
  %v2401 = vsel %vm57, %v2376, 0
  %v2404 = vsel %vm57, %v2377, 0
  %v2407 = vsel %vm57, %v2378, 0
  %v2410 = vsel %vm57, %v2379, 0
  %v2413 = vsel %vm57, %v2380, 0
  %v2416 = vsel %vm57, %v2381, 0
  %v2419 = vsel %vm57, %v2382, 0
  %v2422 = vsel %vm57, %v2383, 0
  %v2425 = vsel %vm57, %v2384, 0
  %v2428 = vsel %vm57, %v2385, 0
  %v2431 = vsel %vm57, %v2386, 0
  %v2434 = vsel %vm57, %v2387, 0
  %2436 = vmatprep.subr.mxu0 0.0
  %2437 = vmatpush1.xpose.msra.mxu0 %v2389
  %2438 = vmatprep.subr.mxu0 0.0
  %2439 = vmatpush1.xpose.msra.mxu0 %v2392
  %2440 = vmatprep.subr.mxu0 0.0
  %2441 = vmatpush1.xpose.msra.mxu0 %v2395
  %2442 = vmatprep.subr.mxu0 0.0
  %2443 = vmatpush1.xpose.msra.mxu0 %v2398
  %2444 = vmatprep.subr.mxu0 0.0
  %2445 = vmatpush1.xpose.msra.mxu0 %v2401
  %2446 = vmatprep.subr.mxu0 0.0
  %2447 = vmatpush1.xpose.msra.mxu0 %v2404
  %2448 = vmatprep.subr.mxu0 0.0
  %2449 = vmatpush1.xpose.msra.mxu0 %v2407
  %2450 = vmatprep.subr.mxu0 0.0
  %2451 = vmatpush1.xpose.msra.mxu0 %v2410
  %2452 = vmatprep.subr.mxu0 0.0
  %2453 = vmatpush1.xpose.msra.mxu0 %v2413
  %2454 = vmatprep.subr.mxu0 0.0
  %2455 = vmatpush1.xpose.msra.mxu0 %v2416
  %2456 = vmatprep.subr.mxu0 0.0
  %2457 = vmatpush1.xpose.msra.mxu0 %v2419
  %2458 = vmatprep.subr.mxu0 0.0
  %2459 = vmatpush1.xpose.msra.mxu0 %v2422
  %2460 = vmatprep.subr.mxu0 0.0
  %2461 = vmatpush1.xpose.msra.mxu0 %v2425
  %2462 = vmatprep.subr.mxu0 0.0
  %2463 = vmatpush1.xpose.msra.mxu0 %v2428
  %2464 = vmatprep.subr.mxu0 0.0
  %2465 = vmatpush1.xpose.msra.mxu0 %v2431
  %2466 = vmatprep.subr.mxu0 0.0
  %2467 = vmatpush1.xpose.msra.mxu0 %v2434
  %2468 = vmatprep.subr.mxu0 0.0
  %2469 = vmatpush1.xpose.msra.mxu0 0.0
  %2470 = vmatprep.subr.mxu0 0.0
  %2471 = vmatpush1.xpose.msra.mxu0 0.0
  %2472 = vmatprep.subr.mxu0 0.0
  %2473 = vmatpush1.xpose.msra.mxu0 0.0
  %2474 = vmatprep.subr.mxu0 0.0
  %2475 = vmatpush1.xpose.msra.mxu0 0.0
  %2476 = vmatprep.subr.mxu0 0.0
  %2477 = vmatpush1.xpose.msra.mxu0 0.0
  %2478 = vmatprep.subr.mxu0 0.0
  %2479 = vmatpush1.xpose.msra.mxu0 0.0
  %2480 = vmatprep.subr.mxu0 0.0
  %2481 = vmatpush1.xpose.msra.mxu0 0.0
  %2482 = vmatprep.subr.mxu0 0.0
  %2483 = vmatpush1.xpose.msra.mxu0 0.0
  %2484 = vmatprep.subr.mxu0 0.0
  %2485 = vmatpush1.xpose.msra.mxu0 0.0
  %2486 = vmatprep.subr.mxu0 0.0
  %2487 = vmatpush1.xpose.msra.mxu0 0.0
  %2488 = vmatprep.subr.mxu0 0.0
  %2489 = vmatpush1.xpose.msra.mxu0 0.0
  %2490 = vmatprep.subr.mxu0 0.0
  %2491 = vmatpush1.xpose.msra.mxu0 0.0
  %2492 = vmatprep.subr.mxu0 0.0
  %2493 = vmatpush1.xpose.msra.mxu0 0.0
  %2494 = vmatprep.subr.mxu0 0.0
  %2495 = vmatpush1.xpose.msra.mxu0 0.0
  %2496 = vmatprep.subr.mxu0 0.0
  %2497 = vmatpush1.xpose.msra.mxu0 0.0
  %2498 = vmatprep.subr.mxu0 0.0
  %2499 = vmatpush1.xpose.msra.mxu0 0.0
  %2500 = vmatprep.mubr.f32.mxu0 0.0
  %2501 = vmatmul.mubr.f32.gmra.mrb[0].mxu0 %v1086
  %v2502 = vpop.f32.mrb[0].mxu0
  %v2503 = vadd.f32 0.0, %v2502
  %v2504 = vpop.f32.mrb[0].mxu0
  %2505 = vmatprep.mubr.f32.mxu0 0.0
  %2506 = vmatmul.mubr.f32.gmra.mrb[0].mxu0 %v1089
  %v2507 = vpop.f32.mrb[0].mxu0
  %v2508 = vadd.f32 0.0, %v2507
  %v2509 = vpop.f32.mrb[0].mxu0
  %2510 = vdwg.mxu0
  %v2511 = vadd.f32 %v2370, %v2503
  %v2512 = vadd.f32 %v2371, %v2508
  %v2513 = vld [vmem:[%s0 + $0xa2] sm:$0xff]
  %v2514 = vld [vmem:[%s0 + $0xaa] sm:$0xff]
  %v2515 = vld [vmem:[%s0 + $0xb2] sm:$0xff]
  %v2516 = vld [vmem:[%s0 + $0xba] sm:$0xff]
  %v2517 = vld [vmem:[%s0 + $0xc2] sm:$0xff]
  %v2518 = vld [vmem:[%s0 + $0xca] sm:$0xff]
  %v2519 = vld [vmem:[%s0 + $0xd2] sm:$0xff]
  %v2520 = vld [vmem:[%s0 + $0xda] sm:$0xff]
  %v2521 = vld [vmem:[%s0 + $0xe2] sm:$0xff]
  %v2522 = vld [vmem:[%s0 + $0xea] sm:$0xff]
  %v2523 = vld [vmem:[%s0 + $0xf2] sm:$0xff]
  %v2524 = vld [vmem:[%s0 + $0xfa] sm:$0xff]
  %v2525 = vld [vmem:[%s0 + $0x102] sm:$0xff]
  %v2526 = vld [vmem:[%s0 + $0x10a] sm:$0xff]
  %v2527 = vld [vmem:[%s0 + $0x112] sm:$0xff]
  %v2528 = vld [vmem:[%s0 + $0x11a] sm:$0xff]
  %v2530 = vsel %vm57, %v2513, 0
  %v2533 = vsel %vm57, %v2514, 0
  %v2536 = vsel %vm57, %v2515, 0
  %v2539 = vsel %vm57, %v2516, 0
  %v2542 = vsel %vm57, %v2517, 0
  %v2545 = vsel %vm57, %v2518, 0
  %v2548 = vsel %vm57, %v2519, 0
  %v2551 = vsel %vm57, %v2520, 0
  %v2554 = vsel %vm57, %v2521, 0
  %v2557 = vsel %vm57, %v2522, 0
  %v2560 = vsel %vm57, %v2523, 0
  %v2563 = vsel %vm57, %v2524, 0
  %v2566 = vsel %vm57, %v2525, 0
  %v2569 = vsel %vm57, %v2526, 0
  %v2572 = vsel %vm57, %v2527, 0
  %v2575 = vsel %vm57, %v2528, 0
  %2577 = vmatprep.subr.mxu0 0.0
  %2578 = vmatpush1.xpose.msra.mxu0 %v2530
  %2579 = vmatprep.subr.mxu0 0.0
  %2580 = vmatpush1.xpose.msra.mxu0 %v2533
  %2581 = vmatprep.subr.mxu0 0.0
  %2582 = vmatpush1.xpose.msra.mxu0 %v2536
  %2583 = vmatprep.subr.mxu0 0.0
  %2584 = vmatpush1.xpose.msra.mxu0 %v2539
  %2585 = vmatprep.subr.mxu0 0.0
  %2586 = vmatpush1.xpose.msra.mxu0 %v2542
  %2587 = vmatprep.subr.mxu0 0.0
  %2588 = vmatpush1.xpose.msra.mxu0 %v2545
  %2589 = vmatprep.subr.mxu0 0.0
  %2590 = vmatpush1.xpose.msra.mxu0 %v2548
  %2591 = vmatprep.subr.mxu0 0.0
  %2592 = vmatpush1.xpose.msra.mxu0 %v2551
  %2593 = vmatprep.subr.mxu0 0.0
  %2594 = vmatpush1.xpose.msra.mxu0 %v2554
  %2595 = vmatprep.subr.mxu0 0.0
  %2596 = vmatpush1.xpose.msra.mxu0 %v2557
  %2597 = vmatprep.subr.mxu0 0.0
  %2598 = vmatpush1.xpose.msra.mxu0 %v2560
  %2599 = vmatprep.subr.mxu0 0.0
  %2600 = vmatpush1.xpose.msra.mxu0 %v2563
  %2601 = vmatprep.subr.mxu0 0.0
  %2602 = vmatpush1.xpose.msra.mxu0 %v2566
  %2603 = vmatprep.subr.mxu0 0.0
  %2604 = vmatpush1.xpose.msra.mxu0 %v2569
  %2605 = vmatprep.subr.mxu0 0.0
  %2606 = vmatpush1.xpose.msra.mxu0 %v2572
  %2607 = vmatprep.subr.mxu0 0.0
  %2608 = vmatpush1.xpose.msra.mxu0 %v2575
  %2609 = vmatprep.subr.mxu0 0.0
  %2610 = vmatpush1.xpose.msra.mxu0 0.0
  %2611 = vmatprep.subr.mxu0 0.0
  %2612 = vmatpush1.xpose.msra.mxu0 0.0
  %2613 = vmatprep.subr.mxu0 0.0
  %2614 = vmatpush1.xpose.msra.mxu0 0.0
  %2615 = vmatprep.subr.mxu0 0.0
  %2616 = vmatpush1.xpose.msra.mxu0 0.0
  %2617 = vmatprep.subr.mxu0 0.0
  %2618 = vmatpush1.xpose.msra.mxu0 0.0
  %2619 = vmatprep.subr.mxu0 0.0
  %2620 = vmatpush1.xpose.msra.mxu0 0.0
  %2621 = vmatprep.subr.mxu0 0.0
  %2622 = vmatpush1.xpose.msra.mxu0 0.0
  %2623 = vmatprep.subr.mxu0 0.0
  %2624 = vmatpush1.xpose.msra.mxu0 0.0
  %2625 = vmatprep.subr.mxu0 0.0
  %2626 = vmatpush1.xpose.msra.mxu0 0.0
  %2627 = vmatprep.subr.mxu0 0.0
  %2628 = vmatpush1.xpose.msra.mxu0 0.0
  %2629 = vmatprep.subr.mxu0 0.0
  %2630 = vmatpush1.xpose.msra.mxu0 0.0
  %2631 = vmatprep.subr.mxu0 0.0
  %2632 = vmatpush1.xpose.msra.mxu0 0.0
  %2633 = vmatprep.subr.mxu0 0.0
  %2634 = vmatpush1.xpose.msra.mxu0 0.0
  %2635 = vmatprep.subr.mxu0 0.0
  %2636 = vmatpush1.xpose.msra.mxu0 0.0
  %2637 = vmatprep.subr.mxu0 0.0
  %2638 = vmatpush1.xpose.msra.mxu0 0.0
  %2639 = vmatprep.subr.mxu0 0.0
  %2640 = vmatpush1.xpose.msra.mxu0 0.0
  %2641 = vmatprep.mubr.f32.mxu0 0.0
  %2642 = vmatmul.mubr.f32.gmra.mrb[0].mxu0 %v1236
  %v2643 = vpop.f32.mrb[0].mxu0
  %v2644 = vadd.f32 0.0, %v2643
  %v2645 = vpop.f32.mrb[0].mxu0
  %2646 = vmatprep.mubr.f32.mxu0 0.0
  %2647 = vmatmul.mubr.f32.gmra.mrb[0].mxu0 %v1239
  %v2648 = vpop.f32.mrb[0].mxu0
  %v2649 = vadd.f32 0.0, %v2648
  %v2650 = vpop.f32.mrb[0].mxu0
  %2651 = vdwg.mxu0
  %v2652 = vadd.f32 %v2511, %v2644
  %v2653 = vadd.f32 %v2512, %v2649
  %v2654 = vld [vmem:[%s4 + $0x1] sm:$0x1]
  %v2656 = vlaneseq
  %v2657 = vshrl.u32 %v2656, 7
  %v2658 = vsub.s32 0, %v2657
  %v2659 = vrot.slane %v2654, %v2658
  %v2661 = vmul.f32 %v2652, %v2659
  %v2662 = vmul.f32 %v2653, %v2659
  %2663 = vadd.xlane.f32.xlu0 %v2661
  %v2664 = vpop.xlane.xlu0 %2663
  %2665 = vadd.xlane.f32.xlu0 %v2662
  %v2666 = vpop.xlane.xlu0 %2665
  %v2667 = vadd.f32 %v1379, %v2664
  %v2668 = vadd.f32 %v1380, %v2666
  %v2669 = vmul.f32 %v2661, %v2652
  %v2670 = vmul.f32 %v2662, %v2653
  %2671 = vadd.xlane.f32.xlu0 %v2669
  %v2672 = vpop.xlane.xlu0 %2671
  %2673 = vadd.xlane.f32.xlu0 %v2670
  %v2674 = vpop.xlane.xlu0 %2673
  %v2675 = vadd.f32 %v1387, %v2672
  %v2676 = vadd.f32 %v1388, %v2674
  %v2677 = vld [vmem:[%s0 + $0x100] sm:$0xff]
  %v2678 = vld [vmem:[%s0 + $0x108] sm:$0xff]
  %v2679 = vld [vmem:[%s0 + $0x110] sm:$0xff]
  %v2680 = vld [vmem:[%s0 + $0x118] sm:$0xff]
  %v2681 = vld [vmem:[%s0 + $0x120] sm:$0xff]
  %v2682 = vld [vmem:[%s0 + $0x128] sm:$0xff]
  %v2683 = vld [vmem:[%s0 + $0x130] sm:$0xff]
  %v2684 = vld [vmem:[%s0 + $0x138] sm:$0xff]
  %v2685 = vld [vmem:[%s0 + $0x140] sm:$0xff]
  %v2686 = vld [vmem:[%s0 + $0x148] sm:$0xff]
  %v2687 = vld [vmem:[%s0 + $0x150] sm:$0xff]
  %v2688 = vld [vmem:[%s0 + $0x158] sm:$0xff]
  %v2689 = vld [vmem:[%s0 + $0x160] sm:$0xff]
  %v2690 = vld [vmem:[%s0 + $0x168] sm:$0xff]
  %v2691 = vld [vmem:[%s0 + $0x170] sm:$0xff]
  %v2692 = vld [vmem:[%s0 + $0x178] sm:$0xff]
  %v2693 = vld [vmem:[%s0 + $0x101] sm:$0xff]
  %v2694 = vld [vmem:[%s0 + $0x109] sm:$0xff]
  %v2695 = vld [vmem:[%s0 + $0x111] sm:$0xff]
  %v2696 = vld [vmem:[%s0 + $0x119] sm:$0xff]
  %v2697 = vld [vmem:[%s0 + $0x121] sm:$0xff]
  %v2698 = vld [vmem:[%s0 + $0x129] sm:$0xff]
  %v2699 = vld [vmem:[%s0 + $0x131] sm:$0xff]
  %v2700 = vld [vmem:[%s0 + $0x139] sm:$0xff]
  %v2701 = vld [vmem:[%s0 + $0x141] sm:$0xff]
  %v2702 = vld [vmem:[%s0 + $0x149] sm:$0xff]
  %v2703 = vld [vmem:[%s0 + $0x151] sm:$0xff]
  %v2704 = vld [vmem:[%s0 + $0x159] sm:$0xff]
  %v2705 = vld [vmem:[%s0 + $0x161] sm:$0xff]
  %v2706 = vld [vmem:[%s0 + $0x169] sm:$0xff]
  %v2707 = vld [vmem:[%s0 + $0x171] sm:$0xff]
  %v2708 = vld [vmem:[%s0 + $0x179] sm:$0xff]
  %v2710 = vsel %vm57, %v2693, 0
  %v2713 = vsel %vm57, %v2694, 0
  %v2716 = vsel %vm57, %v2695, 0
  %v2719 = vsel %vm57, %v2696, 0
  %v2722 = vsel %vm57, %v2697, 0
  %v2725 = vsel %vm57, %v2698, 0
  %v2728 = vsel %vm57, %v2699, 0
  %v2731 = vsel %vm57, %v2700, 0
  %v2734 = vsel %vm57, %v2701, 0
  %v2737 = vsel %vm57, %v2702, 0
  %v2740 = vsel %vm57, %v2703, 0
  %v2743 = vsel %vm57, %v2704, 0
  %v2746 = vsel %vm57, %v2705, 0
  %v2749 = vsel %vm57, %v2706, 0
  %v2752 = vsel %vm57, %v2707, 0
  %v2755 = vsel %vm57, %v2708, 0
  %2757 = vmatprep.subr.mxu0 0.0
  %2758 = vmatpush1.xpose.msra.mxu0 %v2710
  %2759 = vmatprep.subr.mxu0 0.0
  %2760 = vmatpush1.xpose.msra.mxu0 %v2713
  %2761 = vmatprep.subr.mxu0 0.0
  %2762 = vmatpush1.xpose.msra.mxu0 %v2716
  %2763 = vmatprep.subr.mxu0 0.0
  %2764 = vmatpush1.xpose.msra.mxu0 %v2719
  %2765 = vmatprep.subr.mxu0 0.0
  %2766 = vmatpush1.xpose.msra.mxu0 %v2722
  %2767 = vmatprep.subr.mxu0 0.0
  %2768 = vmatpush1.xpose.msra.mxu0 %v2725
  %2769 = vmatprep.subr.mxu0 0.0
  %2770 = vmatpush1.xpose.msra.mxu0 %v2728
  %2771 = vmatprep.subr.mxu0 0.0
  %2772 = vmatpush1.xpose.msra.mxu0 %v2731
  %2773 = vmatprep.subr.mxu0 0.0
  %2774 = vmatpush1.xpose.msra.mxu0 %v2734
  %2775 = vmatprep.subr.mxu0 0.0
  %2776 = vmatpush1.xpose.msra.mxu0 %v2737
  %2777 = vmatprep.subr.mxu0 0.0
  %2778 = vmatpush1.xpose.msra.mxu0 %v2740
  %2779 = vmatprep.subr.mxu0 0.0
  %2780 = vmatpush1.xpose.msra.mxu0 %v2743
  %2781 = vmatprep.subr.mxu0 0.0
  %2782 = vmatpush1.xpose.msra.mxu0 %v2746
  %2783 = vmatprep.subr.mxu0 0.0
  %2784 = vmatpush1.xpose.msra.mxu0 %v2749
  %2785 = vmatprep.subr.mxu0 0.0
  %2786 = vmatpush1.xpose.msra.mxu0 %v2752
  %2787 = vmatprep.subr.mxu0 0.0
  %2788 = vmatpush1.xpose.msra.mxu0 %v2755
  %2789 = vmatprep.subr.mxu0 0.0
  %2790 = vmatpush1.xpose.msra.mxu0 0.0
  %2791 = vmatprep.subr.mxu0 0.0
  %2792 = vmatpush1.xpose.msra.mxu0 0.0
  %2793 = vmatprep.subr.mxu0 0.0
  %2794 = vmatpush1.xpose.msra.mxu0 0.0
  %2795 = vmatprep.subr.mxu0 0.0
  %2796 = vmatpush1.xpose.msra.mxu0 0.0
  %2797 = vmatprep.subr.mxu0 0.0
  %2798 = vmatpush1.xpose.msra.mxu0 0.0
  %2799 = vmatprep.subr.mxu0 0.0
  %2800 = vmatpush1.xpose.msra.mxu0 0.0
  %2801 = vmatprep.subr.mxu0 0.0
  %2802 = vmatpush1.xpose.msra.mxu0 0.0
  %2803 = vmatprep.subr.mxu0 0.0
  %2804 = vmatpush1.xpose.msra.mxu0 0.0
  %2805 = vmatprep.subr.mxu0 0.0
  %2806 = vmatpush1.xpose.msra.mxu0 0.0
  %2807 = vmatprep.subr.mxu0 0.0
  %2808 = vmatpush1.xpose.msra.mxu0 0.0
  %2809 = vmatprep.subr.mxu0 0.0
  %2810 = vmatpush1.xpose.msra.mxu0 0.0
  %2811 = vmatprep.subr.mxu0 0.0
  %2812 = vmatpush1.xpose.msra.mxu0 0.0
  %2813 = vmatprep.subr.mxu0 0.0
  %2814 = vmatpush1.xpose.msra.mxu0 0.0
  %2815 = vmatprep.subr.mxu0 0.0
  %2816 = vmatpush1.xpose.msra.mxu0 0.0
  %2817 = vmatprep.subr.mxu0 0.0
  %2818 = vmatpush1.xpose.msra.mxu0 0.0
  %2819 = vmatprep.subr.mxu0 0.0
  %2820 = vmatpush1.xpose.msra.mxu0 0.0
  %2821 = vmatprep.mubr.f32.mxu0 0.0
  %2822 = vmatmul.mubr.f32.gmra.mrb[0].mxu0 %v59
  %v2823 = vpop.f32.mrb[0].mxu0
  %v2824 = vadd.f32 0.0, %v2823
  %v2825 = vpop.f32.mrb[0].mxu0
  %2826 = vmatprep.mubr.f32.mxu0 0.0
  %2827 = vmatmul.mubr.f32.gmra.mrb[0].mxu0 %v62
  %v2828 = vpop.f32.mrb[0].mxu0
  %v2829 = vadd.f32 0.0, %v2828
  %v2830 = vpop.f32.mrb[0].mxu0
  %2831 = vdwg.mxu0
  %v2833 = vsel %vm57, %v2677, 0
  %v2836 = vsel %vm57, %v2678, 0
  %v2839 = vsel %vm57, %v2679, 0
  %v2842 = vsel %vm57, %v2680, 0
  %v2845 = vsel %vm57, %v2681, 0
  %v2848 = vsel %vm57, %v2682, 0
  %v2851 = vsel %vm57, %v2683, 0
  %v2854 = vsel %vm57, %v2684, 0
  %v2857 = vsel %vm57, %v2685, 0
  %v2860 = vsel %vm57, %v2686, 0
  %v2863 = vsel %vm57, %v2687, 0
  %v2866 = vsel %vm57, %v2688, 0
  %v2869 = vsel %vm57, %v2689, 0
  %v2872 = vsel %vm57, %v2690, 0
  %v2875 = vsel %vm57, %v2691, 0
  %v2878 = vsel %vm57, %v2692, 0
  %2880 = vmatprep.subr.mxu0 0.0
  %2881 = vmatpush1.xpose.msra.mxu0 %v2833
  %2882 = vmatprep.subr.mxu0 0.0
  %2883 = vmatpush1.xpose.msra.mxu0 %v2836
  %2884 = vmatprep.subr.mxu0 0.0
  %2885 = vmatpush1.xpose.msra.mxu0 %v2839
  %2886 = vmatprep.subr.mxu0 0.0
  %2887 = vmatpush1.xpose.msra.mxu0 %v2842
  %2888 = vmatprep.subr.mxu0 0.0
  %2889 = vmatpush1.xpose.msra.mxu0 %v2845
  %2890 = vmatprep.subr.mxu0 0.0
  %2891 = vmatpush1.xpose.msra.mxu0 %v2848
  %2892 = vmatprep.subr.mxu0 0.0
  %2893 = vmatpush1.xpose.msra.mxu0 %v2851
  %2894 = vmatprep.subr.mxu0 0.0
  %2895 = vmatpush1.xpose.msra.mxu0 %v2854
  %2896 = vmatprep.subr.mxu0 0.0
  %2897 = vmatpush1.xpose.msra.mxu0 %v2857
  %2898 = vmatprep.subr.mxu0 0.0
  %2899 = vmatpush1.xpose.msra.mxu0 %v2860
  %2900 = vmatprep.subr.mxu0 0.0
  %2901 = vmatpush1.xpose.msra.mxu0 %v2863
  %2902 = vmatprep.subr.mxu0 0.0
  %2903 = vmatpush1.xpose.msra.mxu0 %v2866
  %2904 = vmatprep.subr.mxu0 0.0
  %2905 = vmatpush1.xpose.msra.mxu0 %v2869
  %2906 = vmatprep.subr.mxu0 0.0
  %2907 = vmatpush1.xpose.msra.mxu0 %v2872
  %2908 = vmatprep.subr.mxu0 0.0
  %2909 = vmatpush1.xpose.msra.mxu0 %v2875
  %2910 = vmatprep.subr.mxu0 0.0
  %2911 = vmatpush1.xpose.msra.mxu0 %v2878
  %2912 = vmatprep.subr.mxu0 0.0
  %2913 = vmatpush1.xpose.msra.mxu0 0.0
  %2914 = vmatprep.subr.mxu0 0.0
  %2915 = vmatpush1.xpose.msra.mxu0 0.0
  %2916 = vmatprep.subr.mxu0 0.0
  %2917 = vmatpush1.xpose.msra.mxu0 0.0
  %2918 = vmatprep.subr.mxu0 0.0
  %2919 = vmatpush1.xpose.msra.mxu0 0.0
  %2920 = vmatprep.subr.mxu0 0.0
  %2921 = vmatpush1.xpose.msra.mxu0 0.0
  %2922 = vmatprep.subr.mxu0 0.0
  %2923 = vmatpush1.xpose.msra.mxu0 0.0
  %2924 = vmatprep.subr.mxu0 0.0
  %2925 = vmatpush1.xpose.msra.mxu0 0.0
  %2926 = vmatprep.subr.mxu0 0.0
  %2927 = vmatpush1.xpose.msra.mxu0 0.0
  %2928 = vmatprep.subr.mxu0 0.0
  %2929 = vmatpush1.xpose.msra.mxu0 0.0
  %2930 = vmatprep.subr.mxu0 0.0
  %2931 = vmatpush1.xpose.msra.mxu0 0.0
  %2932 = vmatprep.subr.mxu0 0.0
  %2933 = vmatpush1.xpose.msra.mxu0 0.0
  %2934 = vmatprep.subr.mxu0 0.0
  %2935 = vmatpush1.xpose.msra.mxu0 0.0
  %2936 = vmatprep.subr.mxu0 0.0
  %2937 = vmatpush1.xpose.msra.mxu0 0.0
  %2938 = vmatprep.subr.mxu0 0.0
  %2939 = vmatpush1.xpose.msra.mxu0 0.0
  %2940 = vmatprep.subr.mxu0 0.0
  %2941 = vmatpush1.xpose.msra.mxu0 0.0
  %2942 = vmatprep.subr.mxu0 0.0
  %2943 = vmatpush1.xpose.msra.mxu0 0.0
  %2944 = vmatprep.mubr.f32.mxu0 0.0
  %2945 = vmatmul.mubr.f32.gmra.mrb[0].mxu0 %v188
  %v2946 = vpop.f32.mrb[0].mxu0
  %v2947 = vadd.f32 %v2824, %v2946
  %v2948 = vpop.f32.mrb[0].mxu0
  %2949 = vmatprep.mubr.f32.mxu0 0.0
  %2950 = vmatmul.mubr.f32.gmra.mrb[0].mxu0 %v191
  %v2951 = vpop.f32.mrb[0].mxu0
  %v2952 = vadd.f32 %v2829, %v2951
  %v2953 = vpop.f32.mrb[0].mxu0
  %2954 = vdwg.mxu0
  %v2955 = vld [vmem:[%s0 + $0x102] sm:$0xff]
  %v2956 = vld [vmem:[%s0 + $0x10a] sm:$0xff]
  %v2957 = vld [vmem:[%s0 + $0x112] sm:$0xff]
  %v2958 = vld [vmem:[%s0 + $0x11a] sm:$0xff]
  %v2959 = vld [vmem:[%s0 + $0x122] sm:$0xff]
  %v2960 = vld [vmem:[%s0 + $0x12a] sm:$0xff]
  %v2961 = vld [vmem:[%s0 + $0x132] sm:$0xff]
  %v2962 = vld [vmem:[%s0 + $0x13a] sm:$0xff]
  %v2963 = vld [vmem:[%s0 + $0x142] sm:$0xff]
  %v2964 = vld [vmem:[%s0 + $0x14a] sm:$0xff]
  %v2965 = vld [vmem:[%s0 + $0x152] sm:$0xff]
  %v2966 = vld [vmem:[%s0 + $0x15a] sm:$0xff]
  %v2967 = vld [vmem:[%s0 + $0x162] sm:$0xff]
  %v2968 = vld [vmem:[%s0 + $0x16a] sm:$0xff]
  %v2969 = vld [vmem:[%s0 + $0x172] sm:$0xff]
  %v2970 = vld [vmem:[%s0 + $0x17a] sm:$0xff]
  %v2972 = vsel %vm57, %v2955, 0
  %v2975 = vsel %vm57, %v2956, 0
  %v2978 = vsel %vm57, %v2957, 0
  %v2981 = vsel %vm57, %v2958, 0
  %v2984 = vsel %vm57, %v2959, 0
  %v2987 = vsel %vm57, %v2960, 0
  %v2990 = vsel %vm57, %v2961, 0
  %v2993 = vsel %vm57, %v2962, 0
  %v2996 = vsel %vm57, %v2963, 0
  %v2999 = vsel %vm57, %v2964, 0
  %v3002 = vsel %vm57, %v2965, 0
  %v3005 = vsel %vm57, %v2966, 0
  %v3008 = vsel %vm57, %v2967, 0
  %v3011 = vsel %vm57, %v2968, 0
  %v3014 = vsel %vm57, %v2969, 0
  %v3017 = vsel %vm57, %v2970, 0
  %3019 = vmatprep.subr.mxu0 0.0
  %3020 = vmatpush1.xpose.msra.mxu0 %v2972
  %3021 = vmatprep.subr.mxu0 0.0
  %3022 = vmatpush1.xpose.msra.mxu0 %v2975
  %3023 = vmatprep.subr.mxu0 0.0
  %3024 = vmatpush1.xpose.msra.mxu0 %v2978
  %3025 = vmatprep.subr.mxu0 0.0
  %3026 = vmatpush1.xpose.msra.mxu0 %v2981
  %3027 = vmatprep.subr.mxu0 0.0
  %3028 = vmatpush1.xpose.msra.mxu0 %v2984
  %3029 = vmatprep.subr.mxu0 0.0
  %3030 = vmatpush1.xpose.msra.mxu0 %v2987
  %3031 = vmatprep.subr.mxu0 0.0
  %3032 = vmatpush1.xpose.msra.mxu0 %v2990
  %3033 = vmatprep.subr.mxu0 0.0
  %3034 = vmatpush1.xpose.msra.mxu0 %v2993
  %3035 = vmatprep.subr.mxu0 0.0
  %3036 = vmatpush1.xpose.msra.mxu0 %v2996
  %3037 = vmatprep.subr.mxu0 0.0
  %3038 = vmatpush1.xpose.msra.mxu0 %v2999
  %3039 = vmatprep.subr.mxu0 0.0
  %3040 = vmatpush1.xpose.msra.mxu0 %v3002
  %3041 = vmatprep.subr.mxu0 0.0
  %3042 = vmatpush1.xpose.msra.mxu0 %v3005
  %3043 = vmatprep.subr.mxu0 0.0
  %3044 = vmatpush1.xpose.msra.mxu0 %v3008
  %3045 = vmatprep.subr.mxu0 0.0
  %3046 = vmatpush1.xpose.msra.mxu0 %v3011
  %3047 = vmatprep.subr.mxu0 0.0
  %3048 = vmatpush1.xpose.msra.mxu0 %v3014
  %3049 = vmatprep.subr.mxu0 0.0
  %3050 = vmatpush1.xpose.msra.mxu0 %v3017
  %3051 = vmatprep.subr.mxu0 0.0
  %3052 = vmatpush1.xpose.msra.mxu0 0.0
  %3053 = vmatprep.subr.mxu0 0.0
  %3054 = vmatpush1.xpose.msra.mxu0 0.0
  %3055 = vmatprep.subr.mxu0 0.0
  %3056 = vmatpush1.xpose.msra.mxu0 0.0
  %3057 = vmatprep.subr.mxu0 0.0
  %3058 = vmatpush1.xpose.msra.mxu0 0.0
  %3059 = vmatprep.subr.mxu0 0.0
  %3060 = vmatpush1.xpose.msra.mxu0 0.0
  %3061 = vmatprep.subr.mxu0 0.0
  %3062 = vmatpush1.xpose.msra.mxu0 0.0
  %3063 = vmatprep.subr.mxu0 0.0
  %3064 = vmatpush1.xpose.msra.mxu0 0.0
  %3065 = vmatprep.subr.mxu0 0.0
  %3066 = vmatpush1.xpose.msra.mxu0 0.0
  %3067 = vmatprep.subr.mxu0 0.0
  %3068 = vmatpush1.xpose.msra.mxu0 0.0
  %3069 = vmatprep.subr.mxu0 0.0
  %3070 = vmatpush1.xpose.msra.mxu0 0.0
  %3071 = vmatprep.subr.mxu0 0.0
  %3072 = vmatpush1.xpose.msra.mxu0 0.0
  %3073 = vmatprep.subr.mxu0 0.0
  %3074 = vmatpush1.xpose.msra.mxu0 0.0
  %3075 = vmatprep.subr.mxu0 0.0
  %3076 = vmatpush1.xpose.msra.mxu0 0.0
  %3077 = vmatprep.subr.mxu0 0.0
  %3078 = vmatpush1.xpose.msra.mxu0 0.0
  %3079 = vmatprep.subr.mxu0 0.0
  %3080 = vmatpush1.xpose.msra.mxu0 0.0
  %3081 = vmatprep.subr.mxu0 0.0
  %3082 = vmatpush1.xpose.msra.mxu0 0.0
  %3083 = vmatprep.mubr.f32.mxu0 0.0
  %3084 = vmatmul.mubr.f32.gmra.mrb[0].mxu0 %v336
  %v3085 = vpop.f32.mrb[0].mxu0
  %v3086 = vadd.f32 0.0, %v3085
  %v3087 = vpop.f32.mrb[0].mxu0
  %3088 = vmatprep.mubr.f32.mxu0 0.0
  %3089 = vmatmul.mubr.f32.gmra.mrb[0].mxu0 %v339
  %v3090 = vpop.f32.mrb[0].mxu0
  %v3091 = vadd.f32 0.0, %v3090
  %v3092 = vpop.f32.mrb[0].mxu0
  %3093 = vdwg.mxu0
  %v3094 = vadd.f32 %v2947, %v3086
  %v3095 = vadd.f32 %v2952, %v3091
  %v3096 = vld [vmem:[%s0 + $0x110] sm:$0xff]
  %v3097 = vld [vmem:[%s0 + $0x118] sm:$0xff]
  %v3098 = vld [vmem:[%s0 + $0x120] sm:$0xff]
  %v3099 = vld [vmem:[%s0 + $0x128] sm:$0xff]
  %v3100 = vld [vmem:[%s0 + $0x130] sm:$0xff]
  %v3101 = vld [vmem:[%s0 + $0x138] sm:$0xff]
  %v3102 = vld [vmem:[%s0 + $0x140] sm:$0xff]
  %v3103 = vld [vmem:[%s0 + $0x148] sm:$0xff]
  %v3104 = vld [vmem:[%s0 + $0x150] sm:$0xff]
  %v3105 = vld [vmem:[%s0 + $0x158] sm:$0xff]
  %v3106 = vld [vmem:[%s0 + $0x160] sm:$0xff]
  %v3107 = vld [vmem:[%s0 + $0x168] sm:$0xff]
  %v3108 = vld [vmem:[%s0 + $0x170] sm:$0xff]
  %v3109 = vld [vmem:[%s0 + $0x178] sm:$0xff]
  %v3110 = vld [vmem:[%s0 + $0x180] sm:$0xff]
  %v3111 = vld [vmem:[%s0 + $0x188] sm:$0xff]
  %v3113 = vsel %vm57, %v3096, 0
  %v3116 = vsel %vm57, %v3097, 0
  %v3119 = vsel %vm57, %v3098, 0
  %v3122 = vsel %vm57, %v3099, 0
  %v3125 = vsel %vm57, %v3100, 0
  %v3128 = vsel %vm57, %v3101, 0
  %v3131 = vsel %vm57, %v3102, 0
  %v3134 = vsel %vm57, %v3103, 0
  %v3137 = vsel %vm57, %v3104, 0
  %v3140 = vsel %vm57, %v3105, 0
  %v3143 = vsel %vm57, %v3106, 0
  %v3146 = vsel %vm57, %v3107, 0
  %v3149 = vsel %vm57, %v3108, 0
  %v3152 = vsel %vm57, %v3109, 0
  %v3155 = vsel %vm57, %v3110, 0
  %v3158 = vsel %vm57, %v3111, 0
  %3160 = vmatprep.subr.mxu0 0.0
  %3161 = vmatpush1.xpose.msra.mxu0 %v3113
  %3162 = vmatprep.subr.mxu0 0.0
  %3163 = vmatpush1.xpose.msra.mxu0 %v3116
  %3164 = vmatprep.subr.mxu0 0.0
  %3165 = vmatpush1.xpose.msra.mxu0 %v3119
  %3166 = vmatprep.subr.mxu0 0.0
  %3167 = vmatpush1.xpose.msra.mxu0 %v3122
  %3168 = vmatprep.subr.mxu0 0.0
  %3169 = vmatpush1.xpose.msra.mxu0 %v3125
  %3170 = vmatprep.subr.mxu0 0.0
  %3171 = vmatpush1.xpose.msra.mxu0 %v3128
  %3172 = vmatprep.subr.mxu0 0.0
  %3173 = vmatpush1.xpose.msra.mxu0 %v3131
  %3174 = vmatprep.subr.mxu0 0.0
  %3175 = vmatpush1.xpose.msra.mxu0 %v3134
  %3176 = vmatprep.subr.mxu0 0.0
  %3177 = vmatpush1.xpose.msra.mxu0 %v3137
  %3178 = vmatprep.subr.mxu0 0.0
  %3179 = vmatpush1.xpose.msra.mxu0 %v3140
  %3180 = vmatprep.subr.mxu0 0.0
  %3181 = vmatpush1.xpose.msra.mxu0 %v3143
  %3182 = vmatprep.subr.mxu0 0.0
  %3183 = vmatpush1.xpose.msra.mxu0 %v3146
  %3184 = vmatprep.subr.mxu0 0.0
  %3185 = vmatpush1.xpose.msra.mxu0 %v3149
  %3186 = vmatprep.subr.mxu0 0.0
  %3187 = vmatpush1.xpose.msra.mxu0 %v3152
  %3188 = vmatprep.subr.mxu0 0.0
  %3189 = vmatpush1.xpose.msra.mxu0 %v3155
  %3190 = vmatprep.subr.mxu0 0.0
  %3191 = vmatpush1.xpose.msra.mxu0 %v3158
  %3192 = vmatprep.subr.mxu0 0.0
  %3193 = vmatpush1.xpose.msra.mxu0 0.0
  %3194 = vmatprep.subr.mxu0 0.0
  %3195 = vmatpush1.xpose.msra.mxu0 0.0
  %3196 = vmatprep.subr.mxu0 0.0
  %3197 = vmatpush1.xpose.msra.mxu0 0.0
  %3198 = vmatprep.subr.mxu0 0.0
  %3199 = vmatpush1.xpose.msra.mxu0 0.0
  %3200 = vmatprep.subr.mxu0 0.0
  %3201 = vmatpush1.xpose.msra.mxu0 0.0
  %3202 = vmatprep.subr.mxu0 0.0
  %3203 = vmatpush1.xpose.msra.mxu0 0.0
  %3204 = vmatprep.subr.mxu0 0.0
  %3205 = vmatpush1.xpose.msra.mxu0 0.0
  %3206 = vmatprep.subr.mxu0 0.0
  %3207 = vmatpush1.xpose.msra.mxu0 0.0
  %3208 = vmatprep.subr.mxu0 0.0
  %3209 = vmatpush1.xpose.msra.mxu0 0.0
  %3210 = vmatprep.subr.mxu0 0.0
  %3211 = vmatpush1.xpose.msra.mxu0 0.0
  %3212 = vmatprep.subr.mxu0 0.0
  %3213 = vmatpush1.xpose.msra.mxu0 0.0
  %3214 = vmatprep.subr.mxu0 0.0
  %3215 = vmatpush1.xpose.msra.mxu0 0.0
  %3216 = vmatprep.subr.mxu0 0.0
  %3217 = vmatpush1.xpose.msra.mxu0 0.0
  %3218 = vmatprep.subr.mxu0 0.0
  %3219 = vmatpush1.xpose.msra.mxu0 0.0
  %3220 = vmatprep.subr.mxu0 0.0
  %3221 = vmatpush1.xpose.msra.mxu0 0.0
  %3222 = vmatprep.subr.mxu0 0.0
  %3223 = vmatpush1.xpose.msra.mxu0 0.0
  %3224 = vmatprep.mubr.f32.mxu0 0.0
  %3225 = vmatmul.mubr.f32.gmra.mrb[0].mxu0 %v486
  %v3226 = vpop.f32.mrb[0].mxu0
  %v3227 = vadd.f32 0.0, %v3226
  %v3228 = vpop.f32.mrb[0].mxu0
  %3229 = vmatprep.mubr.f32.mxu0 0.0
  %3230 = vmatmul.mubr.f32.gmra.mrb[0].mxu0 %v489
  %v3231 = vpop.f32.mrb[0].mxu0
  %v3232 = vadd.f32 0.0, %v3231
  %v3233 = vpop.f32.mrb[0].mxu0
  %3234 = vdwg.mxu0
  %v3235 = vadd.f32 %v3094, %v3227
  %v3236 = vadd.f32 %v3095, %v3232
  %v3237 = vld [vmem:[%s0 + $0x111] sm:$0xff]
  %v3238 = vld [vmem:[%s0 + $0x119] sm:$0xff]
  %v3239 = vld [vmem:[%s0 + $0x121] sm:$0xff]
  %v3240 = vld [vmem:[%s0 + $0x129] sm:$0xff]
  %v3241 = vld [vmem:[%s0 + $0x131] sm:$0xff]
  %v3242 = vld [vmem:[%s0 + $0x139] sm:$0xff]
  %v3243 = vld [vmem:[%s0 + $0x141] sm:$0xff]
  %v3244 = vld [vmem:[%s0 + $0x149] sm:$0xff]
  %v3245 = vld [vmem:[%s0 + $0x151] sm:$0xff]
  %v3246 = vld [vmem:[%s0 + $0x159] sm:$0xff]
  %v3247 = vld [vmem:[%s0 + $0x161] sm:$0xff]
  %v3248 = vld [vmem:[%s0 + $0x169] sm:$0xff]
  %v3249 = vld [vmem:[%s0 + $0x171] sm:$0xff]
  %v3250 = vld [vmem:[%s0 + $0x179] sm:$0xff]
  %v3251 = vld [vmem:[%s0 + $0x181] sm:$0xff]
  %v3252 = vld [vmem:[%s0 + $0x189] sm:$0xff]
  %v3254 = vsel %vm57, %v3237, 0
  %v3257 = vsel %vm57, %v3238, 0
  %v3260 = vsel %vm57, %v3239, 0
  %v3263 = vsel %vm57, %v3240, 0
  %v3266 = vsel %vm57, %v3241, 0
  %v3269 = vsel %vm57, %v3242, 0
  %v3272 = vsel %vm57, %v3243, 0
  %v3275 = vsel %vm57, %v3244, 0
  %v3278 = vsel %vm57, %v3245, 0
  %v3281 = vsel %vm57, %v3246, 0
  %v3284 = vsel %vm57, %v3247, 0
  %v3287 = vsel %vm57, %v3248, 0
  %v3290 = vsel %vm57, %v3249, 0
  %v3293 = vsel %vm57, %v3250, 0
  %v3296 = vsel %vm57, %v3251, 0
  %v3299 = vsel %vm57, %v3252, 0
  %3301 = vmatprep.subr.mxu0 0.0
  %3302 = vmatpush1.xpose.msra.mxu0 %v3254
  %3303 = vmatprep.subr.mxu0 0.0
  %3304 = vmatpush1.xpose.msra.mxu0 %v3257
  %3305 = vmatprep.subr.mxu0 0.0
  %3306 = vmatpush1.xpose.msra.mxu0 %v3260
  %3307 = vmatprep.subr.mxu0 0.0
  %3308 = vmatpush1.xpose.msra.mxu0 %v3263
  %3309 = vmatprep.subr.mxu0 0.0
  %3310 = vmatpush1.xpose.msra.mxu0 %v3266
  %3311 = vmatprep.subr.mxu0 0.0
  %3312 = vmatpush1.xpose.msra.mxu0 %v3269
  %3313 = vmatprep.subr.mxu0 0.0
  %3314 = vmatpush1.xpose.msra.mxu0 %v3272
  %3315 = vmatprep.subr.mxu0 0.0
  %3316 = vmatpush1.xpose.msra.mxu0 %v3275
  %3317 = vmatprep.subr.mxu0 0.0
  %3318 = vmatpush1.xpose.msra.mxu0 %v3278
  %3319 = vmatprep.subr.mxu0 0.0
  %3320 = vmatpush1.xpose.msra.mxu0 %v3281
  %3321 = vmatprep.subr.mxu0 0.0
  %3322 = vmatpush1.xpose.msra.mxu0 %v3284
  %3323 = vmatprep.subr.mxu0 0.0
  %3324 = vmatpush1.xpose.msra.mxu0 %v3287
  %3325 = vmatprep.subr.mxu0 0.0
  %3326 = vmatpush1.xpose.msra.mxu0 %v3290
  %3327 = vmatprep.subr.mxu0 0.0
  %3328 = vmatpush1.xpose.msra.mxu0 %v3293
  %3329 = vmatprep.subr.mxu0 0.0
  %3330 = vmatpush1.xpose.msra.mxu0 %v3296
  %3331 = vmatprep.subr.mxu0 0.0
  %3332 = vmatpush1.xpose.msra.mxu0 %v3299
  %3333 = vmatprep.subr.mxu0 0.0
  %3334 = vmatpush1.xpose.msra.mxu0 0.0
  %3335 = vmatprep.subr.mxu0 0.0
  %3336 = vmatpush1.xpose.msra.mxu0 0.0
  %3337 = vmatprep.subr.mxu0 0.0
  %3338 = vmatpush1.xpose.msra.mxu0 0.0
  %3339 = vmatprep.subr.mxu0 0.0
  %3340 = vmatpush1.xpose.msra.mxu0 0.0
  %3341 = vmatprep.subr.mxu0 0.0
  %3342 = vmatpush1.xpose.msra.mxu0 0.0
  %3343 = vmatprep.subr.mxu0 0.0
  %3344 = vmatpush1.xpose.msra.mxu0 0.0
  %3345 = vmatprep.subr.mxu0 0.0
  %3346 = vmatpush1.xpose.msra.mxu0 0.0
  %3347 = vmatprep.subr.mxu0 0.0
  %3348 = vmatpush1.xpose.msra.mxu0 0.0
  %3349 = vmatprep.subr.mxu0 0.0
  %3350 = vmatpush1.xpose.msra.mxu0 0.0
  %3351 = vmatprep.subr.mxu0 0.0
  %3352 = vmatpush1.xpose.msra.mxu0 0.0
  %3353 = vmatprep.subr.mxu0 0.0
  %3354 = vmatpush1.xpose.msra.mxu0 0.0
  %3355 = vmatprep.subr.mxu0 0.0
  %3356 = vmatpush1.xpose.msra.mxu0 0.0
  %3357 = vmatprep.subr.mxu0 0.0
  %3358 = vmatpush1.xpose.msra.mxu0 0.0
  %3359 = vmatprep.subr.mxu0 0.0
  %3360 = vmatpush1.xpose.msra.mxu0 0.0
  %3361 = vmatprep.subr.mxu0 0.0
  %3362 = vmatpush1.xpose.msra.mxu0 0.0
  %3363 = vmatprep.subr.mxu0 0.0
  %3364 = vmatpush1.xpose.msra.mxu0 0.0
  %3365 = vmatprep.mubr.f32.mxu0 0.0
  %3366 = vmatmul.mubr.f32.gmra.mrb[0].mxu0 %v636
  %v3367 = vpop.f32.mrb[0].mxu0
  %v3368 = vadd.f32 0.0, %v3367
  %v3369 = vpop.f32.mrb[0].mxu0
  %3370 = vmatprep.mubr.f32.mxu0 0.0
  %3371 = vmatmul.mubr.f32.gmra.mrb[0].mxu0 %v639
  %v3372 = vpop.f32.mrb[0].mxu0
  %v3373 = vadd.f32 0.0, %v3372
  %v3374 = vpop.f32.mrb[0].mxu0
  %3375 = vdwg.mxu0
  %v3376 = vadd.f32 %v3235, %v3368
  %v3377 = vadd.f32 %v3236, %v3373
  %v3378 = vld [vmem:[%s0 + $0x112] sm:$0xff]
  %v3379 = vld [vmem:[%s0 + $0x11a] sm:$0xff]
  %v3380 = vld [vmem:[%s0 + $0x122] sm:$0xff]
  %v3381 = vld [vmem:[%s0 + $0x12a] sm:$0xff]
  %v3382 = vld [vmem:[%s0 + $0x132] sm:$0xff]
  %v3383 = vld [vmem:[%s0 + $0x13a] sm:$0xff]
  %v3384 = vld [vmem:[%s0 + $0x142] sm:$0xff]
  %v3385 = vld [vmem:[%s0 + $0x14a] sm:$0xff]
  %v3386 = vld [vmem:[%s0 + $0x152] sm:$0xff]
  %v3387 = vld [vmem:[%s0 + $0x15a] sm:$0xff]
  %v3388 = vld [vmem:[%s0 + $0x162] sm:$0xff]
  %v3389 = vld [vmem:[%s0 + $0x16a] sm:$0xff]
  %v3390 = vld [vmem:[%s0 + $0x172] sm:$0xff]
  %v3391 = vld [vmem:[%s0 + $0x17a] sm:$0xff]
  %v3392 = vld [vmem:[%s0 + $0x182] sm:$0xff]
  %v3393 = vld [vmem:[%s0 + $0x18a] sm:$0xff]
  %v3395 = vsel %vm57, %v3378, 0
  %v3398 = vsel %vm57, %v3379, 0
  %v3401 = vsel %vm57, %v3380, 0
  %v3404 = vsel %vm57, %v3381, 0
  %v3407 = vsel %vm57, %v3382, 0
  %v3410 = vsel %vm57, %v3383, 0
  %v3413 = vsel %vm57, %v3384, 0
  %v3416 = vsel %vm57, %v3385, 0
  %v3419 = vsel %vm57, %v3386, 0
  %v3422 = vsel %vm57, %v3387, 0
  %v3425 = vsel %vm57, %v3388, 0
  %v3428 = vsel %vm57, %v3389, 0
  %v3431 = vsel %vm57, %v3390, 0
  %v3434 = vsel %vm57, %v3391, 0
  %v3437 = vsel %vm57, %v3392, 0
  %v3440 = vsel %vm57, %v3393, 0
  %3442 = vmatprep.subr.mxu0 0.0
  %3443 = vmatpush1.xpose.msra.mxu0 %v3395
  %3444 = vmatprep.subr.mxu0 0.0
  %3445 = vmatpush1.xpose.msra.mxu0 %v3398
  %3446 = vmatprep.subr.mxu0 0.0
  %3447 = vmatpush1.xpose.msra.mxu0 %v3401
  %3448 = vmatprep.subr.mxu0 0.0
  %3449 = vmatpush1.xpose.msra.mxu0 %v3404
  %3450 = vmatprep.subr.mxu0 0.0
  %3451 = vmatpush1.xpose.msra.mxu0 %v3407
  %3452 = vmatprep.subr.mxu0 0.0
  %3453 = vmatpush1.xpose.msra.mxu0 %v3410
  %3454 = vmatprep.subr.mxu0 0.0
  %3455 = vmatpush1.xpose.msra.mxu0 %v3413
  %3456 = vmatprep.subr.mxu0 0.0
  %3457 = vmatpush1.xpose.msra.mxu0 %v3416
  %3458 = vmatprep.subr.mxu0 0.0
  %3459 = vmatpush1.xpose.msra.mxu0 %v3419
  %3460 = vmatprep.subr.mxu0 0.0
  %3461 = vmatpush1.xpose.msra.mxu0 %v3422
  %3462 = vmatprep.subr.mxu0 0.0
  %3463 = vmatpush1.xpose.msra.mxu0 %v3425
  %3464 = vmatprep.subr.mxu0 0.0
  %3465 = vmatpush1.xpose.msra.mxu0 %v3428
  %3466 = vmatprep.subr.mxu0 0.0
  %3467 = vmatpush1.xpose.msra.mxu0 %v3431
  %3468 = vmatprep.subr.mxu0 0.0
  %3469 = vmatpush1.xpose.msra.mxu0 %v3434
  %3470 = vmatprep.subr.mxu0 0.0
  %3471 = vmatpush1.xpose.msra.mxu0 %v3437
  %3472 = vmatprep.subr.mxu0 0.0
  %3473 = vmatpush1.xpose.msra.mxu0 %v3440
  %3474 = vmatprep.subr.mxu0 0.0
  %3475 = vmatpush1.xpose.msra.mxu0 0.0
  %3476 = vmatprep.subr.mxu0 0.0
  %3477 = vmatpush1.xpose.msra.mxu0 0.0
  %3478 = vmatprep.subr.mxu0 0.0
  %3479 = vmatpush1.xpose.msra.mxu0 0.0
  %3480 = vmatprep.subr.mxu0 0.0
  %3481 = vmatpush1.xpose.msra.mxu0 0.0
  %3482 = vmatprep.subr.mxu0 0.0
  %3483 = vmatpush1.xpose.msra.mxu0 0.0
  %3484 = vmatprep.subr.mxu0 0.0
  %3485 = vmatpush1.xpose.msra.mxu0 0.0
  %3486 = vmatprep.subr.mxu0 0.0
  %3487 = vmatpush1.xpose.msra.mxu0 0.0
  %3488 = vmatprep.subr.mxu0 0.0
  %3489 = vmatpush1.xpose.msra.mxu0 0.0
  %3490 = vmatprep.subr.mxu0 0.0
  %3491 = vmatpush1.xpose.msra.mxu0 0.0
  %3492 = vmatprep.subr.mxu0 0.0
  %3493 = vmatpush1.xpose.msra.mxu0 0.0
  %3494 = vmatprep.subr.mxu0 0.0
  %3495 = vmatpush1.xpose.msra.mxu0 0.0
  %3496 = vmatprep.subr.mxu0 0.0
  %3497 = vmatpush1.xpose.msra.mxu0 0.0
  %3498 = vmatprep.subr.mxu0 0.0
  %3499 = vmatpush1.xpose.msra.mxu0 0.0
  %3500 = vmatprep.subr.mxu0 0.0
  %3501 = vmatpush1.xpose.msra.mxu0 0.0
  %3502 = vmatprep.subr.mxu0 0.0
  %3503 = vmatpush1.xpose.msra.mxu0 0.0
  %3504 = vmatprep.subr.mxu0 0.0
  %3505 = vmatpush1.xpose.msra.mxu0 0.0
  %3506 = vmatprep.mubr.f32.mxu0 0.0
  %3507 = vmatmul.mubr.f32.gmra.mrb[0].mxu0 %v786
  %v3508 = vpop.f32.mrb[0].mxu0
  %v3509 = vadd.f32 0.0, %v3508
  %v3510 = vpop.f32.mrb[0].mxu0
  %3511 = vmatprep.mubr.f32.mxu0 0.0
  %3512 = vmatmul.mubr.f32.gmra.mrb[0].mxu0 %v789
  %v3513 = vpop.f32.mrb[0].mxu0
  %v3514 = vadd.f32 0.0, %v3513
  %v3515 = vpop.f32.mrb[0].mxu0
  %3516 = vdwg.mxu0
  %v3517 = vadd.f32 %v3376, %v3509
  %v3518 = vadd.f32 %v3377, %v3514
  %v3519 = vld [vmem:[%s0 + $0x120] sm:$0xff]
  %v3520 = vld [vmem:[%s0 + $0x128] sm:$0xff]
  %v3521 = vld [vmem:[%s0 + $0x130] sm:$0xff]
  %v3522 = vld [vmem:[%s0 + $0x138] sm:$0xff]
  %v3523 = vld [vmem:[%s0 + $0x140] sm:$0xff]
  %v3524 = vld [vmem:[%s0 + $0x148] sm:$0xff]
  %v3525 = vld [vmem:[%s0 + $0x150] sm:$0xff]
  %v3526 = vld [vmem:[%s0 + $0x158] sm:$0xff]
  %v3527 = vld [vmem:[%s0 + $0x160] sm:$0xff]
  %v3528 = vld [vmem:[%s0 + $0x168] sm:$0xff]
  %v3529 = vld [vmem:[%s0 + $0x170] sm:$0xff]
  %v3530 = vld [vmem:[%s0 + $0x178] sm:$0xff]
  %v3531 = vld [vmem:[%s0 + $0x180] sm:$0xff]
  %v3532 = vld [vmem:[%s0 + $0x188] sm:$0xff]
  %v3533 = vld [vmem:[%s0 + $0x190] sm:$0xff]
  %v3534 = vld [vmem:[%s0 + $0x198] sm:$0xff]
  %v3536 = vsel %vm57, %v3519, 0
  %v3539 = vsel %vm57, %v3520, 0
  %v3542 = vsel %vm57, %v3521, 0
  %v3545 = vsel %vm57, %v3522, 0
  %v3548 = vsel %vm57, %v3523, 0
  %v3551 = vsel %vm57, %v3524, 0
  %v3554 = vsel %vm57, %v3525, 0
  %v3557 = vsel %vm57, %v3526, 0
  %v3560 = vsel %vm57, %v3527, 0
  %v3563 = vsel %vm57, %v3528, 0
  %v3566 = vsel %vm57, %v3529, 0
  %v3569 = vsel %vm57, %v3530, 0
  %v3572 = vsel %vm57, %v3531, 0
  %v3575 = vsel %vm57, %v3532, 0
  %v3578 = vsel %vm57, %v3533, 0
  %v3581 = vsel %vm57, %v3534, 0
  %3583 = vmatprep.subr.mxu0 0.0
  %3584 = vmatpush1.xpose.msra.mxu0 %v3536
  %3585 = vmatprep.subr.mxu0 0.0
  %3586 = vmatpush1.xpose.msra.mxu0 %v3539
  %3587 = vmatprep.subr.mxu0 0.0
  %3588 = vmatpush1.xpose.msra.mxu0 %v3542
  %3589 = vmatprep.subr.mxu0 0.0
  %3590 = vmatpush1.xpose.msra.mxu0 %v3545
  %3591 = vmatprep.subr.mxu0 0.0
  %3592 = vmatpush1.xpose.msra.mxu0 %v3548
  %3593 = vmatprep.subr.mxu0 0.0
  %3594 = vmatpush1.xpose.msra.mxu0 %v3551
  %3595 = vmatprep.subr.mxu0 0.0
  %3596 = vmatpush1.xpose.msra.mxu0 %v3554
  %3597 = vmatprep.subr.mxu0 0.0
  %3598 = vmatpush1.xpose.msra.mxu0 %v3557
  %3599 = vmatprep.subr.mxu0 0.0
  %3600 = vmatpush1.xpose.msra.mxu0 %v3560
  %3601 = vmatprep.subr.mxu0 0.0
  %3602 = vmatpush1.xpose.msra.mxu0 %v3563
  %3603 = vmatprep.subr.mxu0 0.0
  %3604 = vmatpush1.xpose.msra.mxu0 %v3566
  %3605 = vmatprep.subr.mxu0 0.0
  %3606 = vmatpush1.xpose.msra.mxu0 %v3569
  %3607 = vmatprep.subr.mxu0 0.0
  %3608 = vmatpush1.xpose.msra.mxu0 %v3572
  %3609 = vmatprep.subr.mxu0 0.0
  %3610 = vmatpush1.xpose.msra.mxu0 %v3575
  %3611 = vmatprep.subr.mxu0 0.0
  %3612 = vmatpush1.xpose.msra.mxu0 %v3578
  %3613 = vmatprep.subr.mxu0 0.0
  %3614 = vmatpush1.xpose.msra.mxu0 %v3581
  %3615 = vmatprep.subr.mxu0 0.0
  %3616 = vmatpush1.xpose.msra.mxu0 0.0
  %3617 = vmatprep.subr.mxu0 0.0
  %3618 = vmatpush1.xpose.msra.mxu0 0.0
  %3619 = vmatprep.subr.mxu0 0.0
  %3620 = vmatpush1.xpose.msra.mxu0 0.0
  %3621 = vmatprep.subr.mxu0 0.0
  %3622 = vmatpush1.xpose.msra.mxu0 0.0
  %3623 = vmatprep.subr.mxu0 0.0
  %3624 = vmatpush1.xpose.msra.mxu0 0.0
  %3625 = vmatprep.subr.mxu0 0.0
  %3626 = vmatpush1.xpose.msra.mxu0 0.0
  %3627 = vmatprep.subr.mxu0 0.0
  %3628 = vmatpush1.xpose.msra.mxu0 0.0
  %3629 = vmatprep.subr.mxu0 0.0
  %3630 = vmatpush1.xpose.msra.mxu0 0.0
  %3631 = vmatprep.subr.mxu0 0.0
  %3632 = vmatpush1.xpose.msra.mxu0 0.0
  %3633 = vmatprep.subr.mxu0 0.0
  %3634 = vmatpush1.xpose.msra.mxu0 0.0
  %3635 = vmatprep.subr.mxu0 0.0
  %3636 = vmatpush1.xpose.msra.mxu0 0.0
  %3637 = vmatprep.subr.mxu0 0.0
  %3638 = vmatpush1.xpose.msra.mxu0 0.0
  %3639 = vmatprep.subr.mxu0 0.0
  %3640 = vmatpush1.xpose.msra.mxu0 0.0
  %3641 = vmatprep.subr.mxu0 0.0
  %3642 = vmatpush1.xpose.msra.mxu0 0.0
  %3643 = vmatprep.subr.mxu0 0.0
  %3644 = vmatpush1.xpose.msra.mxu0 0.0
  %3645 = vmatprep.subr.mxu0 0.0
  %3646 = vmatpush1.xpose.msra.mxu0 0.0
  %3647 = vmatprep.mubr.f32.mxu0 0.0
  %3648 = vmatmul.mubr.f32.gmra.mrb[0].mxu0 %v936
  %v3649 = vpop.f32.mrb[0].mxu0
  %v3650 = vadd.f32 0.0, %v3649
  %v3651 = vpop.f32.mrb[0].mxu0
  %3652 = vmatprep.mubr.f32.mxu0 0.0
  %3653 = vmatmul.mubr.f32.gmra.mrb[0].mxu0 %v939
  %v3654 = vpop.f32.mrb[0].mxu0
  %v3655 = vadd.f32 0.0, %v3654
  %v3656 = vpop.f32.mrb[0].mxu0
  %3657 = vdwg.mxu0
  %v3658 = vadd.f32 %v3517, %v3650
  %v3659 = vadd.f32 %v3518, %v3655
  %v3660 = vld [vmem:[%s0 + $0x121] sm:$0xff]
  %v3661 = vld [vmem:[%s0 + $0x129] sm:$0xff]
  %v3662 = vld [vmem:[%s0 + $0x131] sm:$0xff]
  %v3663 = vld [vmem:[%s0 + $0x139] sm:$0xff]
  %v3664 = vld [vmem:[%s0 + $0x141] sm:$0xff]
  %v3665 = vld [vmem:[%s0 + $0x149] sm:$0xff]
  %v3666 = vld [vmem:[%s0 + $0x151] sm:$0xff]
  %v3667 = vld [vmem:[%s0 + $0x159] sm:$0xff]
  %v3668 = vld [vmem:[%s0 + $0x161] sm:$0xff]
  %v3669 = vld [vmem:[%s0 + $0x169] sm:$0xff]
  %v3670 = vld [vmem:[%s0 + $0x171] sm:$0xff]
  %v3671 = vld [vmem:[%s0 + $0x179] sm:$0xff]
  %v3672 = vld [vmem:[%s0 + $0x181] sm:$0xff]
  %v3673 = vld [vmem:[%s0 + $0x189] sm:$0xff]
  %v3674 = vld [vmem:[%s0 + $0x191] sm:$0xff]
  %v3675 = vld [vmem:[%s0 + $0x199] sm:$0xff]
  %v3677 = vsel %vm57, %v3660, 0
  %v3680 = vsel %vm57, %v3661, 0
  %v3683 = vsel %vm57, %v3662, 0
  %v3686 = vsel %vm57, %v3663, 0
  %v3689 = vsel %vm57, %v3664, 0
  %v3692 = vsel %vm57, %v3665, 0
  %v3695 = vsel %vm57, %v3666, 0
  %v3698 = vsel %vm57, %v3667, 0
  %v3701 = vsel %vm57, %v3668, 0
  %v3704 = vsel %vm57, %v3669, 0
  %v3707 = vsel %vm57, %v3670, 0
  %v3710 = vsel %vm57, %v3671, 0
  %v3713 = vsel %vm57, %v3672, 0
  %v3716 = vsel %vm57, %v3673, 0
  %v3719 = vsel %vm57, %v3674, 0
  %v3722 = vsel %vm57, %v3675, 0
  %3724 = vmatprep.subr.mxu0 0.0
  %3725 = vmatpush1.xpose.msra.mxu0 %v3677
  %3726 = vmatprep.subr.mxu0 0.0
  %3727 = vmatpush1.xpose.msra.mxu0 %v3680
  %3728 = vmatprep.subr.mxu0 0.0
  %3729 = vmatpush1.xpose.msra.mxu0 %v3683
  %3730 = vmatprep.subr.mxu0 0.0
  %3731 = vmatpush1.xpose.msra.mxu0 %v3686
  %3732 = vmatprep.subr.mxu0 0.0
  %3733 = vmatpush1.xpose.msra.mxu0 %v3689
  %3734 = vmatprep.subr.mxu0 0.0
  %3735 = vmatpush1.xpose.msra.mxu0 %v3692
  %3736 = vmatprep.subr.mxu0 0.0
  %3737 = vmatpush1.xpose.msra.mxu0 %v3695
  %3738 = vmatprep.subr.mxu0 0.0
  %3739 = vmatpush1.xpose.msra.mxu0 %v3698
  %3740 = vmatprep.subr.mxu0 0.0
  %3741 = vmatpush1.xpose.msra.mxu0 %v3701
  %3742 = vmatprep.subr.mxu0 0.0
  %3743 = vmatpush1.xpose.msra.mxu0 %v3704
  %3744 = vmatprep.subr.mxu0 0.0
  %3745 = vmatpush1.xpose.msra.mxu0 %v3707
  %3746 = vmatprep.subr.mxu0 0.0
  %3747 = vmatpush1.xpose.msra.mxu0 %v3710
  %3748 = vmatprep.subr.mxu0 0.0
  %3749 = vmatpush1.xpose.msra.mxu0 %v3713
  %3750 = vmatprep.subr.mxu0 0.0
  %3751 = vmatpush1.xpose.msra.mxu0 %v3716
  %3752 = vmatprep.subr.mxu0 0.0
  %3753 = vmatpush1.xpose.msra.mxu0 %v3719
  %3754 = vmatprep.subr.mxu0 0.0
  %3755 = vmatpush1.xpose.msra.mxu0 %v3722
  %3756 = vmatprep.subr.mxu0 0.0
  %3757 = vmatpush1.xpose.msra.mxu0 0.0
  %3758 = vmatprep.subr.mxu0 0.0
  %3759 = vmatpush1.xpose.msra.mxu0 0.0
  %3760 = vmatprep.subr.mxu0 0.0
  %3761 = vmatpush1.xpose.msra.mxu0 0.0
  %3762 = vmatprep.subr.mxu0 0.0
  %3763 = vmatpush1.xpose.msra.mxu0 0.0
  %3764 = vmatprep.subr.mxu0 0.0
  %3765 = vmatpush1.xpose.msra.mxu0 0.0
  %3766 = vmatprep.subr.mxu0 0.0
  %3767 = vmatpush1.xpose.msra.mxu0 0.0
  %3768 = vmatprep.subr.mxu0 0.0
  %3769 = vmatpush1.xpose.msra.mxu0 0.0
  %3770 = vmatprep.subr.mxu0 0.0
  %3771 = vmatpush1.xpose.msra.mxu0 0.0
  %3772 = vmatprep.subr.mxu0 0.0
  %3773 = vmatpush1.xpose.msra.mxu0 0.0
  %3774 = vmatprep.subr.mxu0 0.0
  %3775 = vmatpush1.xpose.msra.mxu0 0.0
  %3776 = vmatprep.subr.mxu0 0.0
  %3777 = vmatpush1.xpose.msra.mxu0 0.0
  %3778 = vmatprep.subr.mxu0 0.0
  %3779 = vmatpush1.xpose.msra.mxu0 0.0
  %3780 = vmatprep.subr.mxu0 0.0
  %3781 = vmatpush1.xpose.msra.mxu0 0.0
  %3782 = vmatprep.subr.mxu0 0.0
  %3783 = vmatpush1.xpose.msra.mxu0 0.0
  %3784 = vmatprep.subr.mxu0 0.0
  %3785 = vmatpush1.xpose.msra.mxu0 0.0
  %3786 = vmatprep.subr.mxu0 0.0
  %3787 = vmatpush1.xpose.msra.mxu0 0.0
  %3788 = vmatprep.mubr.f32.mxu0 0.0
  %3789 = vmatmul.mubr.f32.gmra.mrb[0].mxu0 %v1086
  %v3790 = vpop.f32.mrb[0].mxu0
  %v3791 = vadd.f32 0.0, %v3790
  %v3792 = vpop.f32.mrb[0].mxu0
  %3793 = vmatprep.mubr.f32.mxu0 0.0
  %3794 = vmatmul.mubr.f32.gmra.mrb[0].mxu0 %v1089
  %v3795 = vpop.f32.mrb[0].mxu0
  %v3796 = vadd.f32 0.0, %v3795
  %v3797 = vpop.f32.mrb[0].mxu0
  %3798 = vdwg.mxu0
  %v3799 = vadd.f32 %v3658, %v3791
  %v3800 = vadd.f32 %v3659, %v3796
  %v3801 = vld [vmem:[%s0 + $0x122] sm:$0xff]
  %v3802 = vld [vmem:[%s0 + $0x12a] sm:$0xff]
  %v3803 = vld [vmem:[%s0 + $0x132] sm:$0xff]
  %v3804 = vld [vmem:[%s0 + $0x13a] sm:$0xff]
  %v3805 = vld [vmem:[%s0 + $0x142] sm:$0xff]
  %v3806 = vld [vmem:[%s0 + $0x14a] sm:$0xff]
  %v3807 = vld [vmem:[%s0 + $0x152] sm:$0xff]
  %v3808 = vld [vmem:[%s0 + $0x15a] sm:$0xff]
  %v3809 = vld [vmem:[%s0 + $0x162] sm:$0xff]
  %v3810 = vld [vmem:[%s0 + $0x16a] sm:$0xff]
  %v3811 = vld [vmem:[%s0 + $0x172] sm:$0xff]
  %v3812 = vld [vmem:[%s0 + $0x17a] sm:$0xff]
  %v3813 = vld [vmem:[%s0 + $0x182] sm:$0xff]
  %v3814 = vld [vmem:[%s0 + $0x18a] sm:$0xff]
  %v3815 = vld [vmem:[%s0 + $0x192] sm:$0xff]
  %v3816 = vld [vmem:[%s0 + $0x19a] sm:$0xff]
  %v3818 = vsel %vm57, %v3801, 0
  %v3821 = vsel %vm57, %v3802, 0
  %v3824 = vsel %vm57, %v3803, 0
  %v3827 = vsel %vm57, %v3804, 0
  %v3830 = vsel %vm57, %v3805, 0
  %v3833 = vsel %vm57, %v3806, 0
  %v3836 = vsel %vm57, %v3807, 0
  %v3839 = vsel %vm57, %v3808, 0
  %v3842 = vsel %vm57, %v3809, 0
  %v3845 = vsel %vm57, %v3810, 0
  %v3848 = vsel %vm57, %v3811, 0
  %v3851 = vsel %vm57, %v3812, 0
  %v3854 = vsel %vm57, %v3813, 0
  %v3857 = vsel %vm57, %v3814, 0
  %v3860 = vsel %vm57, %v3815, 0
  %v3863 = vsel %vm57, %v3816, 0
  %3865 = vmatprep.subr.mxu0 0.0
  %3866 = vmatpush1.xpose.msra.mxu0 %v3818
  %3867 = vmatprep.subr.mxu0 0.0
  %3868 = vmatpush1.xpose.msra.mxu0 %v3821
  %3869 = vmatprep.subr.mxu0 0.0
  %3870 = vmatpush1.xpose.msra.mxu0 %v3824
  %3871 = vmatprep.subr.mxu0 0.0
  %3872 = vmatpush1.xpose.msra.mxu0 %v3827
  %3873 = vmatprep.subr.mxu0 0.0
  %3874 = vmatpush1.xpose.msra.mxu0 %v3830
  %3875 = vmatprep.subr.mxu0 0.0
  %3876 = vmatpush1.xpose.msra.mxu0 %v3833
  %3877 = vmatprep.subr.mxu0 0.0
  %3878 = vmatpush1.xpose.msra.mxu0 %v3836
  %3879 = vmatprep.subr.mxu0 0.0
  %3880 = vmatpush1.xpose.msra.mxu0 %v3839
  %3881 = vmatprep.subr.mxu0 0.0
  %3882 = vmatpush1.xpose.msra.mxu0 %v3842
  %3883 = vmatprep.subr.mxu0 0.0
  %3884 = vmatpush1.xpose.msra.mxu0 %v3845
  %3885 = vmatprep.subr.mxu0 0.0
  %3886 = vmatpush1.xpose.msra.mxu0 %v3848
  %3887 = vmatprep.subr.mxu0 0.0
  %3888 = vmatpush1.xpose.msra.mxu0 %v3851
  %3889 = vmatprep.subr.mxu0 0.0
  %3890 = vmatpush1.xpose.msra.mxu0 %v3854
  %3891 = vmatprep.subr.mxu0 0.0
  %3892 = vmatpush1.xpose.msra.mxu0 %v3857
  %3893 = vmatprep.subr.mxu0 0.0
  %3894 = vmatpush1.xpose.msra.mxu0 %v3860
  %3895 = vmatprep.subr.mxu0 0.0
  %3896 = vmatpush1.xpose.msra.mxu0 %v3863
  %3897 = vmatprep.subr.mxu0 0.0
  %3898 = vmatpush1.xpose.msra.mxu0 0.0
  %3899 = vmatprep.subr.mxu0 0.0
  %3900 = vmatpush1.xpose.msra.mxu0 0.0
  %3901 = vmatprep.subr.mxu0 0.0
  %3902 = vmatpush1.xpose.msra.mxu0 0.0
  %3903 = vmatprep.subr.mxu0 0.0
  %3904 = vmatpush1.xpose.msra.mxu0 0.0
  %3905 = vmatprep.subr.mxu0 0.0
  %3906 = vmatpush1.xpose.msra.mxu0 0.0
  %3907 = vmatprep.subr.mxu0 0.0
  %3908 = vmatpush1.xpose.msra.mxu0 0.0
  %3909 = vmatprep.subr.mxu0 0.0
  %3910 = vmatpush1.xpose.msra.mxu0 0.0
  %3911 = vmatprep.subr.mxu0 0.0
  %3912 = vmatpush1.xpose.msra.mxu0 0.0
  %3913 = vmatprep.subr.mxu0 0.0
  %3914 = vmatpush1.xpose.msra.mxu0 0.0
  %3915 = vmatprep.subr.mxu0 0.0
  %3916 = vmatpush1.xpose.msra.mxu0 0.0
  %3917 = vmatprep.subr.mxu0 0.0
  %3918 = vmatpush1.xpose.msra.mxu0 0.0
  %3919 = vmatprep.subr.mxu0 0.0
  %3920 = vmatpush1.xpose.msra.mxu0 0.0
  %3921 = vmatprep.subr.mxu0 0.0
  %3922 = vmatpush1.xpose.msra.mxu0 0.0
  %3923 = vmatprep.subr.mxu0 0.0
  %3924 = vmatpush1.xpose.msra.mxu0 0.0
  %3925 = vmatprep.subr.mxu0 0.0
  %3926 = vmatpush1.xpose.msra.mxu0 0.0
  %3927 = vmatprep.subr.mxu0 0.0
  %3928 = vmatpush1.xpose.msra.mxu0 0.0
  %3929 = vmatprep.mubr.f32.mxu0 0.0
  %3930 = vmatmul.mubr.f32.gmra.mrb[0].mxu0 %v1236
  %v3931 = vpop.f32.mrb[0].mxu0
  %v3932 = vadd.f32 0.0, %v3931
  %v3933 = vpop.f32.mrb[0].mxu0
  %3934 = vmatprep.mubr.f32.mxu0 0.0
  %3935 = vmatmul.mubr.f32.gmra.mrb[0].mxu0 %v1239
  %v3936 = vpop.f32.mrb[0].mxu0
  %v3937 = vadd.f32 0.0, %v3936
  %v3938 = vpop.f32.mrb[0].mxu0
  %3939 = vdwg.mxu0
  %v3940 = vadd.f32 %v3799, %v3932
  %v3941 = vadd.f32 %v3800, %v3937
  %v3942 = vld [vmem:[%s4 + $0x2] sm:$0x1]
  %v3944 = vlaneseq
  %v3945 = vshrl.u32 %v3944, 7
  %v3946 = vsub.s32 0, %v3945
  %v3947 = vrot.slane %v3942, %v3946
  %v3949 = vmul.f32 %v3940, %v3947
  %v3950 = vmul.f32 %v3941, %v3947
  %3951 = vadd.xlane.f32.xlu0 %v3949
  %v3952 = vpop.xlane.xlu0 %3951
  %3953 = vadd.xlane.f32.xlu0 %v3950
  %v3954 = vpop.xlane.xlu0 %3953
  %v3955 = vadd.f32 %v2667, %v3952
  %v3956 = vadd.f32 %v2668, %v3954
  %v3957 = vmul.f32 %v3949, %v3940
  %v3958 = vmul.f32 %v3950, %v3941
  %3959 = vadd.xlane.f32.xlu0 %v3957
  %v3960 = vpop.xlane.xlu0 %3959
  %3961 = vadd.xlane.f32.xlu0 %v3958
  %v3962 = vpop.xlane.xlu0 %3961
  %v3963 = vadd.f32 %v2675, %v3960
  %v3964 = vadd.f32 %v2676, %v3962
  %v3965 = vld [vmem:[%s0 + $0x180] sm:$0xff]
  %v3966 = vld [vmem:[%s0 + $0x188] sm:$0xff]
  %v3967 = vld [vmem:[%s0 + $0x190] sm:$0xff]
  %v3968 = vld [vmem:[%s0 + $0x198] sm:$0xff]
  %v3969 = vld [vmem:[%s0 + $0x1a0] sm:$0xff]
  %v3970 = vld [vmem:[%s0 + $0x1a8] sm:$0xff]
  %v3971 = vld [vmem:[%s0 + $0x1b0] sm:$0xff]
  %v3972 = vld [vmem:[%s0 + $0x1b8] sm:$0xff]
  %v3973 = vld [vmem:[%s0 + $0x1c0] sm:$0xff]
  %v3974 = vld [vmem:[%s0 + $0x1c8] sm:$0xff]
  %v3975 = vld [vmem:[%s0 + $0x1d0] sm:$0xff]
  %v3976 = vld [vmem:[%s0 + $0x1d8] sm:$0xff]
  %v3977 = vld [vmem:[%s0 + $0x1e0] sm:$0xff]
  %v3978 = vld [vmem:[%s0 + $0x1e8] sm:$0xff]
  %v3979 = vld [vmem:[%s0 + $0x1f0] sm:$0xff]
  %v3980 = vld [vmem:[%s0 + $0x1f8] sm:$0xff]
  %v3981 = vld [vmem:[%s0 + $0x181] sm:$0xff]
  %v3982 = vld [vmem:[%s0 + $0x189] sm:$0xff]
  %v3983 = vld [vmem:[%s0 + $0x191] sm:$0xff]
  %v3984 = vld [vmem:[%s0 + $0x199] sm:$0xff]
  %v3985 = vld [vmem:[%s0 + $0x1a1] sm:$0xff]
  %v3986 = vld [vmem:[%s0 + $0x1a9] sm:$0xff]
  %v3987 = vld [vmem:[%s0 + $0x1b1] sm:$0xff]
  %v3988 = vld [vmem:[%s0 + $0x1b9] sm:$0xff]
  %v3989 = vld [vmem:[%s0 + $0x1c1] sm:$0xff]
  %v3990 = vld [vmem:[%s0 + $0x1c9] sm:$0xff]
  %v3991 = vld [vmem:[%s0 + $0x1d1] sm:$0xff]
  %v3992 = vld [vmem:[%s0 + $0x1d9] sm:$0xff]
  %v3993 = vld [vmem:[%s0 + $0x1e1] sm:$0xff]
  %v3994 = vld [vmem:[%s0 + $0x1e9] sm:$0xff]
  %v3995 = vld [vmem:[%s0 + $0x1f1] sm:$0xff]
  %v3996 = vld [vmem:[%s0 + $0x1f9] sm:$0xff]
  %v3998 = vsel %vm57, %v3981, 0
  %v4001 = vsel %vm57, %v3982, 0
  %v4004 = vsel %vm57, %v3983, 0
  %v4007 = vsel %vm57, %v3984, 0
  %v4010 = vsel %vm57, %v3985, 0
  %v4013 = vsel %vm57, %v3986, 0
  %v4016 = vsel %vm57, %v3987, 0
  %v4019 = vsel %vm57, %v3988, 0
  %v4022 = vsel %vm57, %v3989, 0
  %v4025 = vsel %vm57, %v3990, 0
  %v4028 = vsel %vm57, %v3991, 0
  %v4031 = vsel %vm57, %v3992, 0
  %v4034 = vsel %vm57, %v3993, 0
  %v4037 = vsel %vm57, %v3994, 0
  %v4040 = vsel %vm57, %v3995, 0
  %v4043 = vsel %vm57, %v3996, 0
  %4045 = vmatprep.subr.mxu0 0.0
  %4046 = vmatpush1.xpose.msra.mxu0 %v3998
  %4047 = vmatprep.subr.mxu0 0.0
  %4048 = vmatpush1.xpose.msra.mxu0 %v4001
  %4049 = vmatprep.subr.mxu0 0.0
  %4050 = vmatpush1.xpose.msra.mxu0 %v4004
  %4051 = vmatprep.subr.mxu0 0.0
  %4052 = vmatpush1.xpose.msra.mxu0 %v4007
  %4053 = vmatprep.subr.mxu0 0.0
  %4054 = vmatpush1.xpose.msra.mxu0 %v4010
  %4055 = vmatprep.subr.mxu0 0.0
  %4056 = vmatpush1.xpose.msra.mxu0 %v4013
  %4057 = vmatprep.subr.mxu0 0.0
  %4058 = vmatpush1.xpose.msra.mxu0 %v4016
  %4059 = vmatprep.subr.mxu0 0.0
  %4060 = vmatpush1.xpose.msra.mxu0 %v4019
  %4061 = vmatprep.subr.mxu0 0.0
  %4062 = vmatpush1.xpose.msra.mxu0 %v4022
  %4063 = vmatprep.subr.mxu0 0.0
  %4064 = vmatpush1.xpose.msra.mxu0 %v4025
  %4065 = vmatprep.subr.mxu0 0.0
  %4066 = vmatpush1.xpose.msra.mxu0 %v4028
  %4067 = vmatprep.subr.mxu0 0.0
  %4068 = vmatpush1.xpose.msra.mxu0 %v4031
  %4069 = vmatprep.subr.mxu0 0.0
  %4070 = vmatpush1.xpose.msra.mxu0 %v4034
  %4071 = vmatprep.subr.mxu0 0.0
  %4072 = vmatpush1.xpose.msra.mxu0 %v4037
  %4073 = vmatprep.subr.mxu0 0.0
  %4074 = vmatpush1.xpose.msra.mxu0 %v4040
  %4075 = vmatprep.subr.mxu0 0.0
  %4076 = vmatpush1.xpose.msra.mxu0 %v4043
  %4077 = vmatprep.subr.mxu0 0.0
  %4078 = vmatpush1.xpose.msra.mxu0 0.0
  %4079 = vmatprep.subr.mxu0 0.0
  %4080 = vmatpush1.xpose.msra.mxu0 0.0
  %4081 = vmatprep.subr.mxu0 0.0
  %4082 = vmatpush1.xpose.msra.mxu0 0.0
  %4083 = vmatprep.subr.mxu0 0.0
  %4084 = vmatpush1.xpose.msra.mxu0 0.0
  %4085 = vmatprep.subr.mxu0 0.0
  %4086 = vmatpush1.xpose.msra.mxu0 0.0
  %4087 = vmatprep.subr.mxu0 0.0
  %4088 = vmatpush1.xpose.msra.mxu0 0.0
  %4089 = vmatprep.subr.mxu0 0.0
  %4090 = vmatpush1.xpose.msra.mxu0 0.0
  %4091 = vmatprep.subr.mxu0 0.0
  %4092 = vmatpush1.xpose.msra.mxu0 0.0
  %4093 = vmatprep.subr.mxu0 0.0
  %4094 = vmatpush1.xpose.msra.mxu0 0.0
  %4095 = vmatprep.subr.mxu0 0.0
  %4096 = vmatpush1.xpose.msra.mxu0 0.0
  %4097 = vmatprep.subr.mxu0 0.0
  %4098 = vmatpush1.xpose.msra.mxu0 0.0
  %4099 = vmatprep.subr.mxu0 0.0
  %4100 = vmatpush1.xpose.msra.mxu0 0.0
  %4101 = vmatprep.subr.mxu0 0.0
  %4102 = vmatpush1.xpose.msra.mxu0 0.0
  %4103 = vmatprep.subr.mxu0 0.0
  %4104 = vmatpush1.xpose.msra.mxu0 0.0
  %4105 = vmatprep.subr.mxu0 0.0
  %4106 = vmatpush1.xpose.msra.mxu0 0.0
  %4107 = vmatprep.subr.mxu0 0.0
  %4108 = vmatpush1.xpose.msra.mxu0 0.0
  %4109 = vmatprep.mubr.f32.mxu0 0.0
  %4110 = vmatmul.mubr.f32.gmra.mrb[0].mxu0 %v59
  %v4111 = vpop.f32.mrb[0].mxu0
  %v4112 = vadd.f32 0.0, %v4111
  %v4113 = vpop.f32.mrb[0].mxu0
  %4114 = vmatprep.mubr.f32.mxu0 0.0
  %4115 = vmatmul.mubr.f32.gmra.mrb[0].mxu0 %v62
  %v4116 = vpop.f32.mrb[0].mxu0
  %v4117 = vadd.f32 0.0, %v4116
  %v4118 = vpop.f32.mrb[0].mxu0
  %4119 = vdwg.mxu0
  %v4121 = vsel %vm57, %v3965, 0
  %v4124 = vsel %vm57, %v3966, 0
  %v4127 = vsel %vm57, %v3967, 0
  %v4130 = vsel %vm57, %v3968, 0
  %v4133 = vsel %vm57, %v3969, 0
  %v4136 = vsel %vm57, %v3970, 0
  %v4139 = vsel %vm57, %v3971, 0
  %v4142 = vsel %vm57, %v3972, 0
  %v4145 = vsel %vm57, %v3973, 0
  %v4148 = vsel %vm57, %v3974, 0
  %v4151 = vsel %vm57, %v3975, 0
  %v4154 = vsel %vm57, %v3976, 0
  %v4157 = vsel %vm57, %v3977, 0
  %v4160 = vsel %vm57, %v3978, 0
  %v4163 = vsel %vm57, %v3979, 0
  %v4166 = vsel %vm57, %v3980, 0
  %4168 = vmatprep.subr.mxu0 0.0
  %4169 = vmatpush1.xpose.msra.mxu0 %v4121
  %4170 = vmatprep.subr.mxu0 0.0
  %4171 = vmatpush1.xpose.msra.mxu0 %v4124
  %4172 = vmatprep.subr.mxu0 0.0
  %4173 = vmatpush1.xpose.msra.mxu0 %v4127
  %4174 = vmatprep.subr.mxu0 0.0
  %4175 = vmatpush1.xpose.msra.mxu0 %v4130
  %4176 = vmatprep.subr.mxu0 0.0
  %4177 = vmatpush1.xpose.msra.mxu0 %v4133
  %4178 = vmatprep.subr.mxu0 0.0
  %4179 = vmatpush1.xpose.msra.mxu0 %v4136
  %4180 = vmatprep.subr.mxu0 0.0
  %4181 = vmatpush1.xpose.msra.mxu0 %v4139
  %4182 = vmatprep.subr.mxu0 0.0
  %4183 = vmatpush1.xpose.msra.mxu0 %v4142
  %4184 = vmatprep.subr.mxu0 0.0
  %4185 = vmatpush1.xpose.msra.mxu0 %v4145
  %4186 = vmatprep.subr.mxu0 0.0
  %4187 = vmatpush1.xpose.msra.mxu0 %v4148
  %4188 = vmatprep.subr.mxu0 0.0
  %4189 = vmatpush1.xpose.msra.mxu0 %v4151
  %4190 = vmatprep.subr.mxu0 0.0
  %4191 = vmatpush1.xpose.msra.mxu0 %v4154
  %4192 = vmatprep.subr.mxu0 0.0
  %4193 = vmatpush1.xpose.msra.mxu0 %v4157
  %4194 = vmatprep.subr.mxu0 0.0
  %4195 = vmatpush1.xpose.msra.mxu0 %v4160
  %4196 = vmatprep.subr.mxu0 0.0
  %4197 = vmatpush1.xpose.msra.mxu0 %v4163
  %4198 = vmatprep.subr.mxu0 0.0
  %4199 = vmatpush1.xpose.msra.mxu0 %v4166
  %4200 = vmatprep.subr.mxu0 0.0
  %4201 = vmatpush1.xpose.msra.mxu0 0.0
  %4202 = vmatprep.subr.mxu0 0.0
  %4203 = vmatpush1.xpose.msra.mxu0 0.0
  %4204 = vmatprep.subr.mxu0 0.0
  %4205 = vmatpush1.xpose.msra.mxu0 0.0
  %4206 = vmatprep.subr.mxu0 0.0
  %4207 = vmatpush1.xpose.msra.mxu0 0.0
  %4208 = vmatprep.subr.mxu0 0.0
  %4209 = vmatpush1.xpose.msra.mxu0 0.0
  %4210 = vmatprep.subr.mxu0 0.0
  %4211 = vmatpush1.xpose.msra.mxu0 0.0
  %4212 = vmatprep.subr.mxu0 0.0
  %4213 = vmatpush1.xpose.msra.mxu0 0.0
  %4214 = vmatprep.subr.mxu0 0.0
  %4215 = vmatpush1.xpose.msra.mxu0 0.0
  %4216 = vmatprep.subr.mxu0 0.0
  %4217 = vmatpush1.xpose.msra.mxu0 0.0
  %4218 = vmatprep.subr.mxu0 0.0
  %4219 = vmatpush1.xpose.msra.mxu0 0.0
  %4220 = vmatprep.subr.mxu0 0.0
  %4221 = vmatpush1.xpose.msra.mxu0 0.0
  %4222 = vmatprep.subr.mxu0 0.0
  %4223 = vmatpush1.xpose.msra.mxu0 0.0
  %4224 = vmatprep.subr.mxu0 0.0
  %4225 = vmatpush1.xpose.msra.mxu0 0.0
  %4226 = vmatprep.subr.mxu0 0.0
  %4227 = vmatpush1.xpose.msra.mxu0 0.0
  %4228 = vmatprep.subr.mxu0 0.0
  %4229 = vmatpush1.xpose.msra.mxu0 0.0
  %4230 = vmatprep.subr.mxu0 0.0
  %4231 = vmatpush1.xpose.msra.mxu0 0.0
  %4232 = vmatprep.mubr.f32.mxu0 0.0
  %4233 = vmatmul.mubr.f32.gmra.mrb[0].mxu0 %v188
  %v4234 = vpop.f32.mrb[0].mxu0
  %v4235 = vadd.f32 %v4112, %v4234
  %v4236 = vpop.f32.mrb[0].mxu0
  %4237 = vmatprep.mubr.f32.mxu0 0.0
  %4238 = vmatmul.mubr.f32.gmra.mrb[0].mxu0 %v191
  %v4239 = vpop.f32.mrb[0].mxu0
  %v4240 = vadd.f32 %v4117, %v4239
  %v4241 = vpop.f32.mrb[0].mxu0
  %4242 = vdwg.mxu0
  %v4243 = vld [vmem:[%s0 + $0x182] sm:$0xff]
  %v4244 = vld [vmem:[%s0 + $0x18a] sm:$0xff]
  %v4245 = vld [vmem:[%s0 + $0x192] sm:$0xff]
  %v4246 = vld [vmem:[%s0 + $0x19a] sm:$0xff]
  %v4247 = vld [vmem:[%s0 + $0x1a2] sm:$0xff]
  %v4248 = vld [vmem:[%s0 + $0x1aa] sm:$0xff]
  %v4249 = vld [vmem:[%s0 + $0x1b2] sm:$0xff]
  %v4250 = vld [vmem:[%s0 + $0x1ba] sm:$0xff]
  %v4251 = vld [vmem:[%s0 + $0x1c2] sm:$0xff]
  %v4252 = vld [vmem:[%s0 + $0x1ca] sm:$0xff]
  %v4253 = vld [vmem:[%s0 + $0x1d2] sm:$0xff]
  %v4254 = vld [vmem:[%s0 + $0x1da] sm:$0xff]
  %v4255 = vld [vmem:[%s0 + $0x1e2] sm:$0xff]
  %v4256 = vld [vmem:[%s0 + $0x1ea] sm:$0xff]
  %v4257 = vld [vmem:[%s0 + $0x1f2] sm:$0xff]
  %v4258 = vld [vmem:[%s0 + $0x1fa] sm:$0xff]
  %v4260 = vsel %vm57, %v4243, 0
  %v4263 = vsel %vm57, %v4244, 0
  %v4266 = vsel %vm57, %v4245, 0
  %v4269 = vsel %vm57, %v4246, 0
  %v4272 = vsel %vm57, %v4247, 0
  %v4275 = vsel %vm57, %v4248, 0
  %v4278 = vsel %vm57, %v4249, 0
  %v4281 = vsel %vm57, %v4250, 0
  %v4284 = vsel %vm57, %v4251, 0
  %v4287 = vsel %vm57, %v4252, 0
  %v4290 = vsel %vm57, %v4253, 0
  %v4293 = vsel %vm57, %v4254, 0
  %v4296 = vsel %vm57, %v4255, 0
  %v4299 = vsel %vm57, %v4256, 0
  %v4302 = vsel %vm57, %v4257, 0
  %v4305 = vsel %vm57, %v4258, 0
  %4307 = vmatprep.subr.mxu0 0.0
  %4308 = vmatpush1.xpose.msra.mxu0 %v4260
  %4309 = vmatprep.subr.mxu0 0.0
  %4310 = vmatpush1.xpose.msra.mxu0 %v4263
  %4311 = vmatprep.subr.mxu0 0.0
  %4312 = vmatpush1.xpose.msra.mxu0 %v4266
  %4313 = vmatprep.subr.mxu0 0.0
  %4314 = vmatpush1.xpose.msra.mxu0 %v4269
  %4315 = vmatprep.subr.mxu0 0.0
  %4316 = vmatpush1.xpose.msra.mxu0 %v4272
  %4317 = vmatprep.subr.mxu0 0.0
  %4318 = vmatpush1.xpose.msra.mxu0 %v4275
  %4319 = vmatprep.subr.mxu0 0.0
  %4320 = vmatpush1.xpose.msra.mxu0 %v4278
  %4321 = vmatprep.subr.mxu0 0.0
  %4322 = vmatpush1.xpose.msra.mxu0 %v4281
  %4323 = vmatprep.subr.mxu0 0.0
  %4324 = vmatpush1.xpose.msra.mxu0 %v4284
  %4325 = vmatprep.subr.mxu0 0.0
  %4326 = vmatpush1.xpose.msra.mxu0 %v4287
  %4327 = vmatprep.subr.mxu0 0.0
  %4328 = vmatpush1.xpose.msra.mxu0 %v4290
  %4329 = vmatprep.subr.mxu0 0.0
  %4330 = vmatpush1.xpose.msra.mxu0 %v4293
  %4331 = vmatprep.subr.mxu0 0.0
  %4332 = vmatpush1.xpose.msra.mxu0 %v4296
  %4333 = vmatprep.subr.mxu0 0.0
  %4334 = vmatpush1.xpose.msra.mxu0 %v4299
  %4335 = vmatprep.subr.mxu0 0.0
  %4336 = vmatpush1.xpose.msra.mxu0 %v4302
  %4337 = vmatprep.subr.mxu0 0.0
  %4338 = vmatpush1.xpose.msra.mxu0 %v4305
  %4339 = vmatprep.subr.mxu0 0.0
  %4340 = vmatpush1.xpose.msra.mxu0 0.0
  %4341 = vmatprep.subr.mxu0 0.0
  %4342 = vmatpush1.xpose.msra.mxu0 0.0
  %4343 = vmatprep.subr.mxu0 0.0
  %4344 = vmatpush1.xpose.msra.mxu0 0.0
  %4345 = vmatprep.subr.mxu0 0.0
  %4346 = vmatpush1.xpose.msra.mxu0 0.0
  %4347 = vmatprep.subr.mxu0 0.0
  %4348 = vmatpush1.xpose.msra.mxu0 0.0
  %4349 = vmatprep.subr.mxu0 0.0
  %4350 = vmatpush1.xpose.msra.mxu0 0.0
  %4351 = vmatprep.subr.mxu0 0.0
  %4352 = vmatpush1.xpose.msra.mxu0 0.0
  %4353 = vmatprep.subr.mxu0 0.0
  %4354 = vmatpush1.xpose.msra.mxu0 0.0
  %4355 = vmatprep.subr.mxu0 0.0
  %4356 = vmatpush1.xpose.msra.mxu0 0.0
  %4357 = vmatprep.subr.mxu0 0.0
  %4358 = vmatpush1.xpose.msra.mxu0 0.0
  %4359 = vmatprep.subr.mxu0 0.0
  %4360 = vmatpush1.xpose.msra.mxu0 0.0
  %4361 = vmatprep.subr.mxu0 0.0
  %4362 = vmatpush1.xpose.msra.mxu0 0.0
  %4363 = vmatprep.subr.mxu0 0.0
  %4364 = vmatpush1.xpose.msra.mxu0 0.0
  %4365 = vmatprep.subr.mxu0 0.0
  %4366 = vmatpush1.xpose.msra.mxu0 0.0
  %4367 = vmatprep.subr.mxu0 0.0
  %4368 = vmatpush1.xpose.msra.mxu0 0.0
  %4369 = vmatprep.subr.mxu0 0.0
  %4370 = vmatpush1.xpose.msra.mxu0 0.0
  %4371 = vmatprep.mubr.f32.mxu0 0.0
  %4372 = vmatmul.mubr.f32.gmra.mrb[0].mxu0 %v336
  %v4373 = vpop.f32.mrb[0].mxu0
  %v4374 = vadd.f32 0.0, %v4373
  %v4375 = vpop.f32.mrb[0].mxu0
  %4376 = vmatprep.mubr.f32.mxu0 0.0
  %4377 = vmatmul.mubr.f32.gmra.mrb[0].mxu0 %v339
  %v4378 = vpop.f32.mrb[0].mxu0
  %v4379 = vadd.f32 0.0, %v4378
  %v4380 = vpop.f32.mrb[0].mxu0
  %4381 = vdwg.mxu0
  %v4382 = vadd.f32 %v4235, %v4374
  %v4383 = vadd.f32 %v4240, %v4379
  %v4384 = vld [vmem:[%s0 + $0x190] sm:$0xff]
  %v4385 = vld [vmem:[%s0 + $0x198] sm:$0xff]
  %v4386 = vld [vmem:[%s0 + $0x1a0] sm:$0xff]
  %v4387 = vld [vmem:[%s0 + $0x1a8] sm:$0xff]
  %v4388 = vld [vmem:[%s0 + $0x1b0] sm:$0xff]
  %v4389 = vld [vmem:[%s0 + $0x1b8] sm:$0xff]
  %v4390 = vld [vmem:[%s0 + $0x1c0] sm:$0xff]
  %v4391 = vld [vmem:[%s0 + $0x1c8] sm:$0xff]
  %v4392 = vld [vmem:[%s0 + $0x1d0] sm:$0xff]
  %v4393 = vld [vmem:[%s0 + $0x1d8] sm:$0xff]
  %v4394 = vld [vmem:[%s0 + $0x1e0] sm:$0xff]
  %v4395 = vld [vmem:[%s0 + $0x1e8] sm:$0xff]
  %v4396 = vld [vmem:[%s0 + $0x1f0] sm:$0xff]
  %v4397 = vld [vmem:[%s0 + $0x1f8] sm:$0xff]
  %v4398 = vld [vmem:[%s0 + $0x200] sm:$0xff]
  %v4399 = vld [vmem:[%s0 + $0x208] sm:$0xff]
  %v4401 = vsel %vm57, %v4384, 0
  %v4404 = vsel %vm57, %v4385, 0
  %v4407 = vsel %vm57, %v4386, 0
  %v4410 = vsel %vm57, %v4387, 0
  %v4413 = vsel %vm57, %v4388, 0
  %v4416 = vsel %vm57, %v4389, 0
  %v4419 = vsel %vm57, %v4390, 0
  %v4422 = vsel %vm57, %v4391, 0
  %v4425 = vsel %vm57, %v4392, 0
  %v4428 = vsel %vm57, %v4393, 0
  %v4431 = vsel %vm57, %v4394, 0
  %v4434 = vsel %vm57, %v4395, 0
  %v4437 = vsel %vm57, %v4396, 0
  %v4440 = vsel %vm57, %v4397, 0
  %v4443 = vsel %vm57, %v4398, 0
  %v4446 = vsel %vm57, %v4399, 0
  %4448 = vmatprep.subr.mxu0 0.0
  %4449 = vmatpush1.xpose.msra.mxu0 %v4401
  %4450 = vmatprep.subr.mxu0 0.0
  %4451 = vmatpush1.xpose.msra.mxu0 %v4404
  %4452 = vmatprep.subr.mxu0 0.0
  %4453 = vmatpush1.xpose.msra.mxu0 %v4407
  %4454 = vmatprep.subr.mxu0 0.0
  %4455 = vmatpush1.xpose.msra.mxu0 %v4410
  %4456 = vmatprep.subr.mxu0 0.0
  %4457 = vmatpush1.xpose.msra.mxu0 %v4413
  %4458 = vmatprep.subr.mxu0 0.0
  %4459 = vmatpush1.xpose.msra.mxu0 %v4416
  %4460 = vmatprep.subr.mxu0 0.0
  %4461 = vmatpush1.xpose.msra.mxu0 %v4419
  %4462 = vmatprep.subr.mxu0 0.0
  %4463 = vmatpush1.xpose.msra.mxu0 %v4422
  %4464 = vmatprep.subr.mxu0 0.0
  %4465 = vmatpush1.xpose.msra.mxu0 %v4425
  %4466 = vmatprep.subr.mxu0 0.0
  %4467 = vmatpush1.xpose.msra.mxu0 %v4428
  %4468 = vmatprep.subr.mxu0 0.0
  %4469 = vmatpush1.xpose.msra.mxu0 %v4431
  %4470 = vmatprep.subr.mxu0 0.0
  %4471 = vmatpush1.xpose.msra.mxu0 %v4434
  %4472 = vmatprep.subr.mxu0 0.0
  %4473 = vmatpush1.xpose.msra.mxu0 %v4437
  %4474 = vmatprep.subr.mxu0 0.0
  %4475 = vmatpush1.xpose.msra.mxu0 %v4440
  %4476 = vmatprep.subr.mxu0 0.0
  %4477 = vmatpush1.xpose.msra.mxu0 %v4443
  %4478 = vmatprep.subr.mxu0 0.0
  %4479 = vmatpush1.xpose.msra.mxu0 %v4446
  %4480 = vmatprep.subr.mxu0 0.0
  %4481 = vmatpush1.xpose.msra.mxu0 0.0
  %4482 = vmatprep.subr.mxu0 0.0
  %4483 = vmatpush1.xpose.msra.mxu0 0.0
  %4484 = vmatprep.subr.mxu0 0.0
  %4485 = vmatpush1.xpose.msra.mxu0 0.0
  %4486 = vmatprep.subr.mxu0 0.0
  %4487 = vmatpush1.xpose.msra.mxu0 0.0
  %4488 = vmatprep.subr.mxu0 0.0
  %4489 = vmatpush1.xpose.msra.mxu0 0.0
  %4490 = vmatprep.subr.mxu0 0.0
  %4491 = vmatpush1.xpose.msra.mxu0 0.0
  %4492 = vmatprep.subr.mxu0 0.0
  %4493 = vmatpush1.xpose.msra.mxu0 0.0
  %4494 = vmatprep.subr.mxu0 0.0
  %4495 = vmatpush1.xpose.msra.mxu0 0.0
  %4496 = vmatprep.subr.mxu0 0.0
  %4497 = vmatpush1.xpose.msra.mxu0 0.0
  %4498 = vmatprep.subr.mxu0 0.0
  %4499 = vmatpush1.xpose.msra.mxu0 0.0
  %4500 = vmatprep.subr.mxu0 0.0
  %4501 = vmatpush1.xpose.msra.mxu0 0.0
  %4502 = vmatprep.subr.mxu0 0.0
  %4503 = vmatpush1.xpose.msra.mxu0 0.0
  %4504 = vmatprep.subr.mxu0 0.0
  %4505 = vmatpush1.xpose.msra.mxu0 0.0
  %4506 = vmatprep.subr.mxu0 0.0
  %4507 = vmatpush1.xpose.msra.mxu0 0.0
  %4508 = vmatprep.subr.mxu0 0.0
  %4509 = vmatpush1.xpose.msra.mxu0 0.0
  %4510 = vmatprep.subr.mxu0 0.0
  %4511 = vmatpush1.xpose.msra.mxu0 0.0
  %4512 = vmatprep.mubr.f32.mxu0 0.0
  %4513 = vmatmul.mubr.f32.gmra.mrb[0].mxu0 %v486
  %v4514 = vpop.f32.mrb[0].mxu0
  %v4515 = vadd.f32 0.0, %v4514
  %v4516 = vpop.f32.mrb[0].mxu0
  %4517 = vmatprep.mubr.f32.mxu0 0.0
  %4518 = vmatmul.mubr.f32.gmra.mrb[0].mxu0 %v489
  %v4519 = vpop.f32.mrb[0].mxu0
  %v4520 = vadd.f32 0.0, %v4519
  %v4521 = vpop.f32.mrb[0].mxu0
  %4522 = vdwg.mxu0
  %v4523 = vadd.f32 %v4382, %v4515
  %v4524 = vadd.f32 %v4383, %v4520
  %v4525 = vld [vmem:[%s0 + $0x191] sm:$0xff]
  %v4526 = vld [vmem:[%s0 + $0x199] sm:$0xff]
  %v4527 = vld [vmem:[%s0 + $0x1a1] sm:$0xff]
  %v4528 = vld [vmem:[%s0 + $0x1a9] sm:$0xff]
  %v4529 = vld [vmem:[%s0 + $0x1b1] sm:$0xff]
  %v4530 = vld [vmem:[%s0 + $0x1b9] sm:$0xff]
  %v4531 = vld [vmem:[%s0 + $0x1c1] sm:$0xff]
  %v4532 = vld [vmem:[%s0 + $0x1c9] sm:$0xff]
  %v4533 = vld [vmem:[%s0 + $0x1d1] sm:$0xff]
  %v4534 = vld [vmem:[%s0 + $0x1d9] sm:$0xff]
  %v4535 = vld [vmem:[%s0 + $0x1e1] sm:$0xff]
  %v4536 = vld [vmem:[%s0 + $0x1e9] sm:$0xff]
  %v4537 = vld [vmem:[%s0 + $0x1f1] sm:$0xff]
  %v4538 = vld [vmem:[%s0 + $0x1f9] sm:$0xff]
  %v4539 = vld [vmem:[%s0 + $0x201] sm:$0xff]
  %v4540 = vld [vmem:[%s0 + $0x209] sm:$0xff]
  %v4542 = vsel %vm57, %v4525, 0
  %v4545 = vsel %vm57, %v4526, 0
  %v4548 = vsel %vm57, %v4527, 0
  %v4551 = vsel %vm57, %v4528, 0
  %v4554 = vsel %vm57, %v4529, 0
  %v4557 = vsel %vm57, %v4530, 0
  %v4560 = vsel %vm57, %v4531, 0
  %v4563 = vsel %vm57, %v4532, 0
  %v4566 = vsel %vm57, %v4533, 0
  %v4569 = vsel %vm57, %v4534, 0
  %v4572 = vsel %vm57, %v4535, 0
  %v4575 = vsel %vm57, %v4536, 0
  %v4578 = vsel %vm57, %v4537, 0
  %v4581 = vsel %vm57, %v4538, 0
  %v4584 = vsel %vm57, %v4539, 0
  %v4587 = vsel %vm57, %v4540, 0
  %4589 = vmatprep.subr.mxu0 0.0
  %4590 = vmatpush1.xpose.msra.mxu0 %v4542
  %4591 = vmatprep.subr.mxu0 0.0
  %4592 = vmatpush1.xpose.msra.mxu0 %v4545
  %4593 = vmatprep.subr.mxu0 0.0
  %4594 = vmatpush1.xpose.msra.mxu0 %v4548
  %4595 = vmatprep.subr.mxu0 0.0
  %4596 = vmatpush1.xpose.msra.mxu0 %v4551
  %4597 = vmatprep.subr.mxu0 0.0
  %4598 = vmatpush1.xpose.msra.mxu0 %v4554
  %4599 = vmatprep.subr.mxu0 0.0
  %4600 = vmatpush1.xpose.msra.mxu0 %v4557
  %4601 = vmatprep.subr.mxu0 0.0
  %4602 = vmatpush1.xpose.msra.mxu0 %v4560
  %4603 = vmatprep.subr.mxu0 0.0
  %4604 = vmatpush1.xpose.msra.mxu0 %v4563
  %4605 = vmatprep.subr.mxu0 0.0
  %4606 = vmatpush1.xpose.msra.mxu0 %v4566
  %4607 = vmatprep.subr.mxu0 0.0
  %4608 = vmatpush1.xpose.msra.mxu0 %v4569
  %4609 = vmatprep.subr.mxu0 0.0
  %4610 = vmatpush1.xpose.msra.mxu0 %v4572
  %4611 = vmatprep.subr.mxu0 0.0
  %4612 = vmatpush1.xpose.msra.mxu0 %v4575
  %4613 = vmatprep.subr.mxu0 0.0
  %4614 = vmatpush1.xpose.msra.mxu0 %v4578
  %4615 = vmatprep.subr.mxu0 0.0
  %4616 = vmatpush1.xpose.msra.mxu0 %v4581
  %4617 = vmatprep.subr.mxu0 0.0
  %4618 = vmatpush1.xpose.msra.mxu0 %v4584
  %4619 = vmatprep.subr.mxu0 0.0
  %4620 = vmatpush1.xpose.msra.mxu0 %v4587
  %4621 = vmatprep.subr.mxu0 0.0
  %4622 = vmatpush1.xpose.msra.mxu0 0.0
  %4623 = vmatprep.subr.mxu0 0.0
  %4624 = vmatpush1.xpose.msra.mxu0 0.0
  %4625 = vmatprep.subr.mxu0 0.0
  %4626 = vmatpush1.xpose.msra.mxu0 0.0
  %4627 = vmatprep.subr.mxu0 0.0
  %4628 = vmatpush1.xpose.msra.mxu0 0.0
  %4629 = vmatprep.subr.mxu0 0.0
  %4630 = vmatpush1.xpose.msra.mxu0 0.0
  %4631 = vmatprep.subr.mxu0 0.0
  %4632 = vmatpush1.xpose.msra.mxu0 0.0
  %4633 = vmatprep.subr.mxu0 0.0
  %4634 = vmatpush1.xpose.msra.mxu0 0.0
  %4635 = vmatprep.subr.mxu0 0.0
  %4636 = vmatpush1.xpose.msra.mxu0 0.0
  %4637 = vmatprep.subr.mxu0 0.0
  %4638 = vmatpush1.xpose.msra.mxu0 0.0
  %4639 = vmatprep.subr.mxu0 0.0
  %4640 = vmatpush1.xpose.msra.mxu0 0.0
  %4641 = vmatprep.subr.mxu0 0.0
  %4642 = vmatpush1.xpose.msra.mxu0 0.0
  %4643 = vmatprep.subr.mxu0 0.0
  %4644 = vmatpush1.xpose.msra.mxu0 0.0
  %4645 = vmatprep.subr.mxu0 0.0
  %4646 = vmatpush1.xpose.msra.mxu0 0.0
  %4647 = vmatprep.subr.mxu0 0.0
  %4648 = vmatpush1.xpose.msra.mxu0 0.0
  %4649 = vmatprep.subr.mxu0 0.0
  %4650 = vmatpush1.xpose.msra.mxu0 0.0
  %4651 = vmatprep.subr.mxu0 0.0
  %4652 = vmatpush1.xpose.msra.mxu0 0.0
  %4653 = vmatprep.mubr.f32.mxu0 0.0
  %4654 = vmatmul.mubr.f32.gmra.mrb[0].mxu0 %v636
  %v4655 = vpop.f32.mrb[0].mxu0
  %v4656 = vadd.f32 0.0, %v4655
  %v4657 = vpop.f32.mrb[0].mxu0
  %4658 = vmatprep.mubr.f32.mxu0 0.0
  %4659 = vmatmul.mubr.f32.gmra.mrb[0].mxu0 %v639
  %v4660 = vpop.f32.mrb[0].mxu0
  %v4661 = vadd.f32 0.0, %v4660
  %v4662 = vpop.f32.mrb[0].mxu0
  %4663 = vdwg.mxu0
  %v4664 = vadd.f32 %v4523, %v4656
  %v4665 = vadd.f32 %v4524, %v4661
  %v4666 = vld [vmem:[%s0 + $0x192] sm:$0xff]
  %v4667 = vld [vmem:[%s0 + $0x19a] sm:$0xff]
  %v4668 = vld [vmem:[%s0 + $0x1a2] sm:$0xff]
  %v4669 = vld [vmem:[%s0 + $0x1aa] sm:$0xff]
  %v4670 = vld [vmem:[%s0 + $0x1b2] sm:$0xff]
  %v4671 = vld [vmem:[%s0 + $0x1ba] sm:$0xff]
  %v4672 = vld [vmem:[%s0 + $0x1c2] sm:$0xff]
  %v4673 = vld [vmem:[%s0 + $0x1ca] sm:$0xff]
  %v4674 = vld [vmem:[%s0 + $0x1d2] sm:$0xff]
  %v4675 = vld [vmem:[%s0 + $0x1da] sm:$0xff]
  %v4676 = vld [vmem:[%s0 + $0x1e2] sm:$0xff]
  %v4677 = vld [vmem:[%s0 + $0x1ea] sm:$0xff]
  %v4678 = vld [vmem:[%s0 + $0x1f2] sm:$0xff]
  %v4679 = vld [vmem:[%s0 + $0x1fa] sm:$0xff]
  %v4680 = vld [vmem:[%s0 + $0x202] sm:$0xff]
  %v4681 = vld [vmem:[%s0 + $0x20a] sm:$0xff]
  %v4683 = vsel %vm57, %v4666, 0
  %v4686 = vsel %vm57, %v4667, 0
  %v4689 = vsel %vm57, %v4668, 0
  %v4692 = vsel %vm57, %v4669, 0
  %v4695 = vsel %vm57, %v4670, 0
  %v4698 = vsel %vm57, %v4671, 0
  %v4701 = vsel %vm57, %v4672, 0
  %v4704 = vsel %vm57, %v4673, 0
  %v4707 = vsel %vm57, %v4674, 0
  %v4710 = vsel %vm57, %v4675, 0
  %v4713 = vsel %vm57, %v4676, 0
  %v4716 = vsel %vm57, %v4677, 0
  %v4719 = vsel %vm57, %v4678, 0
  %v4722 = vsel %vm57, %v4679, 0
  %v4725 = vsel %vm57, %v4680, 0
  %v4728 = vsel %vm57, %v4681, 0
  %4730 = vmatprep.subr.mxu0 0.0
  %4731 = vmatpush1.xpose.msra.mxu0 %v4683
  %4732 = vmatprep.subr.mxu0 0.0
  %4733 = vmatpush1.xpose.msra.mxu0 %v4686
  %4734 = vmatprep.subr.mxu0 0.0
  %4735 = vmatpush1.xpose.msra.mxu0 %v4689
  %4736 = vmatprep.subr.mxu0 0.0
  %4737 = vmatpush1.xpose.msra.mxu0 %v4692
  %4738 = vmatprep.subr.mxu0 0.0
  %4739 = vmatpush1.xpose.msra.mxu0 %v4695
  %4740 = vmatprep.subr.mxu0 0.0
  %4741 = vmatpush1.xpose.msra.mxu0 %v4698
  %4742 = vmatprep.subr.mxu0 0.0
  %4743 = vmatpush1.xpose.msra.mxu0 %v4701
  %4744 = vmatprep.subr.mxu0 0.0
  %4745 = vmatpush1.xpose.msra.mxu0 %v4704
  %4746 = vmatprep.subr.mxu0 0.0
  %4747 = vmatpush1.xpose.msra.mxu0 %v4707
  %4748 = vmatprep.subr.mxu0 0.0
  %4749 = vmatpush1.xpose.msra.mxu0 %v4710
  %4750 = vmatprep.subr.mxu0 0.0
  %4751 = vmatpush1.xpose.msra.mxu0 %v4713
  %4752 = vmatprep.subr.mxu0 0.0
  %4753 = vmatpush1.xpose.msra.mxu0 %v4716
  %4754 = vmatprep.subr.mxu0 0.0
  %4755 = vmatpush1.xpose.msra.mxu0 %v4719
  %4756 = vmatprep.subr.mxu0 0.0
  %4757 = vmatpush1.xpose.msra.mxu0 %v4722
  %4758 = vmatprep.subr.mxu0 0.0
  %4759 = vmatpush1.xpose.msra.mxu0 %v4725
  %4760 = vmatprep.subr.mxu0 0.0
  %4761 = vmatpush1.xpose.msra.mxu0 %v4728
  %4762 = vmatprep.subr.mxu0 0.0
  %4763 = vmatpush1.xpose.msra.mxu0 0.0
  %4764 = vmatprep.subr.mxu0 0.0
  %4765 = vmatpush1.xpose.msra.mxu0 0.0
  %4766 = vmatprep.subr.mxu0 0.0
  %4767 = vmatpush1.xpose.msra.mxu0 0.0
  %4768 = vmatprep.subr.mxu0 0.0
  %4769 = vmatpush1.xpose.msra.mxu0 0.0
  %4770 = vmatprep.subr.mxu0 0.0
  %4771 = vmatpush1.xpose.msra.mxu0 0.0
  %4772 = vmatprep.subr.mxu0 0.0
  %4773 = vmatpush1.xpose.msra.mxu0 0.0
  %4774 = vmatprep.subr.mxu0 0.0
  %4775 = vmatpush1.xpose.msra.mxu0 0.0
  %4776 = vmatprep.subr.mxu0 0.0
  %4777 = vmatpush1.xpose.msra.mxu0 0.0
  %4778 = vmatprep.subr.mxu0 0.0
  %4779 = vmatpush1.xpose.msra.mxu0 0.0
  %4780 = vmatprep.subr.mxu0 0.0
  %4781 = vmatpush1.xpose.msra.mxu0 0.0
  %4782 = vmatprep.subr.mxu0 0.0
  %4783 = vmatpush1.xpose.msra.mxu0 0.0
  %4784 = vmatprep.subr.mxu0 0.0
  %4785 = vmatpush1.xpose.msra.mxu0 0.0
  %4786 = vmatprep.subr.mxu0 0.0
  %4787 = vmatpush1.xpose.msra.mxu0 0.0
  %4788 = vmatprep.subr.mxu0 0.0
  %4789 = vmatpush1.xpose.msra.mxu0 0.0
  %4790 = vmatprep.subr.mxu0 0.0
  %4791 = vmatpush1.xpose.msra.mxu0 0.0
  %4792 = vmatprep.subr.mxu0 0.0
  %4793 = vmatpush1.xpose.msra.mxu0 0.0
  %4794 = vmatprep.mubr.f32.mxu0 0.0
  %4795 = vmatmul.mubr.f32.gmra.mrb[0].mxu0 %v786
  %v4796 = vpop.f32.mrb[0].mxu0
  %v4797 = vadd.f32 0.0, %v4796
  %v4798 = vpop.f32.mrb[0].mxu0
  %4799 = vmatprep.mubr.f32.mxu0 0.0
  %4800 = vmatmul.mubr.f32.gmra.mrb[0].mxu0 %v789
  %v4801 = vpop.f32.mrb[0].mxu0
  %v4802 = vadd.f32 0.0, %v4801
  %v4803 = vpop.f32.mrb[0].mxu0
  %4804 = vdwg.mxu0
  %v4805 = vadd.f32 %v4664, %v4797
  %v4806 = vadd.f32 %v4665, %v4802
  %v4807 = vld [vmem:[%s0 + $0x1a0] sm:$0xff]
  %v4808 = vld [vmem:[%s0 + $0x1a8] sm:$0xff]
  %v4809 = vld [vmem:[%s0 + $0x1b0] sm:$0xff]
  %v4810 = vld [vmem:[%s0 + $0x1b8] sm:$0xff]
  %v4811 = vld [vmem:[%s0 + $0x1c0] sm:$0xff]
  %v4812 = vld [vmem:[%s0 + $0x1c8] sm:$0xff]
  %v4813 = vld [vmem:[%s0 + $0x1d0] sm:$0xff]
  %v4814 = vld [vmem:[%s0 + $0x1d8] sm:$0xff]
  %v4815 = vld [vmem:[%s0 + $0x1e0] sm:$0xff]
  %v4816 = vld [vmem:[%s0 + $0x1e8] sm:$0xff]
  %v4817 = vld [vmem:[%s0 + $0x1f0] sm:$0xff]
  %v4818 = vld [vmem:[%s0 + $0x1f8] sm:$0xff]
  %v4819 = vld [vmem:[%s0 + $0x200] sm:$0xff]
  %v4820 = vld [vmem:[%s0 + $0x208] sm:$0xff]
  %v4821 = vld [vmem:[%s0 + $0x210] sm:$0xff]
  %v4822 = vld [vmem:[%s0 + $0x218] sm:$0xff]
  %v4824 = vsel %vm57, %v4807, 0
  %v4827 = vsel %vm57, %v4808, 0
  %v4830 = vsel %vm57, %v4809, 0
  %v4833 = vsel %vm57, %v4810, 0
  %v4836 = vsel %vm57, %v4811, 0
  %v4839 = vsel %vm57, %v4812, 0
  %v4842 = vsel %vm57, %v4813, 0
  %v4845 = vsel %vm57, %v4814, 0
  %v4848 = vsel %vm57, %v4815, 0
  %v4851 = vsel %vm57, %v4816, 0
  %v4854 = vsel %vm57, %v4817, 0
  %v4857 = vsel %vm57, %v4818, 0
  %v4860 = vsel %vm57, %v4819, 0
  %v4863 = vsel %vm57, %v4820, 0
  %v4866 = vsel %vm57, %v4821, 0
  %v4869 = vsel %vm57, %v4822, 0
  %4871 = vmatprep.subr.mxu0 0.0
  %4872 = vmatpush1.xpose.msra.mxu0 %v4824
  %4873 = vmatprep.subr.mxu0 0.0
  %4874 = vmatpush1.xpose.msra.mxu0 %v4827
  %4875 = vmatprep.subr.mxu0 0.0
  %4876 = vmatpush1.xpose.msra.mxu0 %v4830
  %4877 = vmatprep.subr.mxu0 0.0
  %4878 = vmatpush1.xpose.msra.mxu0 %v4833
  %4879 = vmatprep.subr.mxu0 0.0
  %4880 = vmatpush1.xpose.msra.mxu0 %v4836
  %4881 = vmatprep.subr.mxu0 0.0
  %4882 = vmatpush1.xpose.msra.mxu0 %v4839
  %4883 = vmatprep.subr.mxu0 0.0
  %4884 = vmatpush1.xpose.msra.mxu0 %v4842
  %4885 = vmatprep.subr.mxu0 0.0
  %4886 = vmatpush1.xpose.msra.mxu0 %v4845
  %4887 = vmatprep.subr.mxu0 0.0
  %4888 = vmatpush1.xpose.msra.mxu0 %v4848
  %4889 = vmatprep.subr.mxu0 0.0
  %4890 = vmatpush1.xpose.msra.mxu0 %v4851
  %4891 = vmatprep.subr.mxu0 0.0
  %4892 = vmatpush1.xpose.msra.mxu0 %v4854
  %4893 = vmatprep.subr.mxu0 0.0
  %4894 = vmatpush1.xpose.msra.mxu0 %v4857
  %4895 = vmatprep.subr.mxu0 0.0
  %4896 = vmatpush1.xpose.msra.mxu0 %v4860
  %4897 = vmatprep.subr.mxu0 0.0
  %4898 = vmatpush1.xpose.msra.mxu0 %v4863
  %4899 = vmatprep.subr.mxu0 0.0
  %4900 = vmatpush1.xpose.msra.mxu0 %v4866
  %4901 = vmatprep.subr.mxu0 0.0
  %4902 = vmatpush1.xpose.msra.mxu0 %v4869
  %4903 = vmatprep.subr.mxu0 0.0
  %4904 = vmatpush1.xpose.msra.mxu0 0.0
  %4905 = vmatprep.subr.mxu0 0.0
  %4906 = vmatpush1.xpose.msra.mxu0 0.0
  %4907 = vmatprep.subr.mxu0 0.0
  %4908 = vmatpush1.xpose.msra.mxu0 0.0
  %4909 = vmatprep.subr.mxu0 0.0
  %4910 = vmatpush1.xpose.msra.mxu0 0.0
  %4911 = vmatprep.subr.mxu0 0.0
  %4912 = vmatpush1.xpose.msra.mxu0 0.0
  %4913 = vmatprep.subr.mxu0 0.0
  %4914 = vmatpush1.xpose.msra.mxu0 0.0
  %4915 = vmatprep.subr.mxu0 0.0
  %4916 = vmatpush1.xpose.msra.mxu0 0.0
  %4917 = vmatprep.subr.mxu0 0.0
  %4918 = vmatpush1.xpose.msra.mxu0 0.0
  %4919 = vmatprep.subr.mxu0 0.0
  %4920 = vmatpush1.xpose.msra.mxu0 0.0
  %4921 = vmatprep.subr.mxu0 0.0
  %4922 = vmatpush1.xpose.msra.mxu0 0.0
  %4923 = vmatprep.subr.mxu0 0.0
  %4924 = vmatpush1.xpose.msra.mxu0 0.0
  %4925 = vmatprep.subr.mxu0 0.0
  %4926 = vmatpush1.xpose.msra.mxu0 0.0
  %4927 = vmatprep.subr.mxu0 0.0
  %4928 = vmatpush1.xpose.msra.mxu0 0.0
  %4929 = vmatprep.subr.mxu0 0.0
  %4930 = vmatpush1.xpose.msra.mxu0 0.0
  %4931 = vmatprep.subr.mxu0 0.0
  %4932 = vmatpush1.xpose.msra.mxu0 0.0
  %4933 = vmatprep.subr.mxu0 0.0
  %4934 = vmatpush1.xpose.msra.mxu0 0.0
  %4935 = vmatprep.mubr.f32.mxu0 0.0
  %4936 = vmatmul.mubr.f32.gmra.mrb[0].mxu0 %v936
  %v4937 = vpop.f32.mrb[0].mxu0
  %v4938 = vadd.f32 0.0, %v4937
  %v4939 = vpop.f32.mrb[0].mxu0
  %4940 = vmatprep.mubr.f32.mxu0 0.0
  %4941 = vmatmul.mubr.f32.gmra.mrb[0].mxu0 %v939
  %v4942 = vpop.f32.mrb[0].mxu0
  %v4943 = vadd.f32 0.0, %v4942
  %v4944 = vpop.f32.mrb[0].mxu0
  %4945 = vdwg.mxu0
  %v4946 = vadd.f32 %v4805, %v4938
  %v4947 = vadd.f32 %v4806, %v4943
  %v4948 = vld [vmem:[%s0 + $0x1a1] sm:$0xff]
  %v4949 = vld [vmem:[%s0 + $0x1a9] sm:$0xff]
  %v4950 = vld [vmem:[%s0 + $0x1b1] sm:$0xff]
  %v4951 = vld [vmem:[%s0 + $0x1b9] sm:$0xff]
  %v4952 = vld [vmem:[%s0 + $0x1c1] sm:$0xff]
  %v4953 = vld [vmem:[%s0 + $0x1c9] sm:$0xff]
  %v4954 = vld [vmem:[%s0 + $0x1d1] sm:$0xff]
  %v4955 = vld [vmem:[%s0 + $0x1d9] sm:$0xff]
  %v4956 = vld [vmem:[%s0 + $0x1e1] sm:$0xff]
  %v4957 = vld [vmem:[%s0 + $0x1e9] sm:$0xff]
  %v4958 = vld [vmem:[%s0 + $0x1f1] sm:$0xff]
  %v4959 = vld [vmem:[%s0 + $0x1f9] sm:$0xff]
  %v4960 = vld [vmem:[%s0 + $0x201] sm:$0xff]
  %v4961 = vld [vmem:[%s0 + $0x209] sm:$0xff]
  %v4962 = vld [vmem:[%s0 + $0x211] sm:$0xff]
  %v4963 = vld [vmem:[%s0 + $0x219] sm:$0xff]
  %v4965 = vsel %vm57, %v4948, 0
  %v4968 = vsel %vm57, %v4949, 0
  %v4971 = vsel %vm57, %v4950, 0
  %v4974 = vsel %vm57, %v4951, 0
  %v4977 = vsel %vm57, %v4952, 0
  %v4980 = vsel %vm57, %v4953, 0
  %v4983 = vsel %vm57, %v4954, 0
  %v4986 = vsel %vm57, %v4955, 0
  %v4989 = vsel %vm57, %v4956, 0
  %v4992 = vsel %vm57, %v4957, 0
  %v4995 = vsel %vm57, %v4958, 0
  %v4998 = vsel %vm57, %v4959, 0
  %v5001 = vsel %vm57, %v4960, 0
  %v5004 = vsel %vm57, %v4961, 0
  %v5007 = vsel %vm57, %v4962, 0
  %v5010 = vsel %vm57, %v4963, 0
  %5012 = vmatprep.subr.mxu0 0.0
  %5013 = vmatpush1.xpose.msra.mxu0 %v4965
  %5014 = vmatprep.subr.mxu0 0.0
  %5015 = vmatpush1.xpose.msra.mxu0 %v4968
  %5016 = vmatprep.subr.mxu0 0.0
  %5017 = vmatpush1.xpose.msra.mxu0 %v4971
  %5018 = vmatprep.subr.mxu0 0.0
  %5019 = vmatpush1.xpose.msra.mxu0 %v4974
  %5020 = vmatprep.subr.mxu0 0.0
  %5021 = vmatpush1.xpose.msra.mxu0 %v4977
  %5022 = vmatprep.subr.mxu0 0.0
  %5023 = vmatpush1.xpose.msra.mxu0 %v4980
  %5024 = vmatprep.subr.mxu0 0.0
  %5025 = vmatpush1.xpose.msra.mxu0 %v4983
  %5026 = vmatprep.subr.mxu0 0.0
  %5027 = vmatpush1.xpose.msra.mxu0 %v4986
  %5028 = vmatprep.subr.mxu0 0.0
  %5029 = vmatpush1.xpose.msra.mxu0 %v4989
  %5030 = vmatprep.subr.mxu0 0.0
  %5031 = vmatpush1.xpose.msra.mxu0 %v4992
  %5032 = vmatprep.subr.mxu0 0.0
  %5033 = vmatpush1.xpose.msra.mxu0 %v4995
  %5034 = vmatprep.subr.mxu0 0.0
  %5035 = vmatpush1.xpose.msra.mxu0 %v4998
  %5036 = vmatprep.subr.mxu0 0.0
  %5037 = vmatpush1.xpose.msra.mxu0 %v5001
  %5038 = vmatprep.subr.mxu0 0.0
  %5039 = vmatpush1.xpose.msra.mxu0 %v5004
  %5040 = vmatprep.subr.mxu0 0.0
  %5041 = vmatpush1.xpose.msra.mxu0 %v5007
  %5042 = vmatprep.subr.mxu0 0.0
  %5043 = vmatpush1.xpose.msra.mxu0 %v5010
  %5044 = vmatprep.subr.mxu0 0.0
  %5045 = vmatpush1.xpose.msra.mxu0 0.0
  %5046 = vmatprep.subr.mxu0 0.0
  %5047 = vmatpush1.xpose.msra.mxu0 0.0
  %5048 = vmatprep.subr.mxu0 0.0
  %5049 = vmatpush1.xpose.msra.mxu0 0.0
  %5050 = vmatprep.subr.mxu0 0.0
  %5051 = vmatpush1.xpose.msra.mxu0 0.0
  %5052 = vmatprep.subr.mxu0 0.0
  %5053 = vmatpush1.xpose.msra.mxu0 0.0
  %5054 = vmatprep.subr.mxu0 0.0
  %5055 = vmatpush1.xpose.msra.mxu0 0.0
  %5056 = vmatprep.subr.mxu0 0.0
  %5057 = vmatpush1.xpose.msra.mxu0 0.0
  %5058 = vmatprep.subr.mxu0 0.0
  %5059 = vmatpush1.xpose.msra.mxu0 0.0
  %5060 = vmatprep.subr.mxu0 0.0
  %5061 = vmatpush1.xpose.msra.mxu0 0.0
  %5062 = vmatprep.subr.mxu0 0.0
  %5063 = vmatpush1.xpose.msra.mxu0 0.0
  %5064 = vmatprep.subr.mxu0 0.0
  %5065 = vmatpush1.xpose.msra.mxu0 0.0
  %5066 = vmatprep.subr.mxu0 0.0
  %5067 = vmatpush1.xpose.msra.mxu0 0.0
  %5068 = vmatprep.subr.mxu0 0.0
  %5069 = vmatpush1.xpose.msra.mxu0 0.0
  %5070 = vmatprep.subr.mxu0 0.0
  %5071 = vmatpush1.xpose.msra.mxu0 0.0
  %5072 = vmatprep.subr.mxu0 0.0
  %5073 = vmatpush1.xpose.msra.mxu0 0.0
  %5074 = vmatprep.subr.mxu0 0.0
  %5075 = vmatpush1.xpose.msra.mxu0 0.0
  %5076 = vmatprep.mubr.f32.mxu0 0.0
  %5077 = vmatmul.mubr.f32.gmra.mrb[0].mxu0 %v1086
  %v5078 = vpop.f32.mrb[0].mxu0
  %v5079 = vadd.f32 0.0, %v5078
  %v5080 = vpop.f32.mrb[0].mxu0
  %5081 = vmatprep.mubr.f32.mxu0 0.0
  %5082 = vmatmul.mubr.f32.gmra.mrb[0].mxu0 %v1089
  %v5083 = vpop.f32.mrb[0].mxu0
  %v5084 = vadd.f32 0.0, %v5083
  %v5085 = vpop.f32.mrb[0].mxu0
  %5086 = vdwg.mxu0
  %v5087 = vadd.f32 %v4946, %v5079
  %v5088 = vadd.f32 %v4947, %v5084
  %v5089 = vld [vmem:[%s0 + $0x1a2] sm:$0xff]
  %v5090 = vld [vmem:[%s0 + $0x1aa] sm:$0xff]
  %v5091 = vld [vmem:[%s0 + $0x1b2] sm:$0xff]
  %v5092 = vld [vmem:[%s0 + $0x1ba] sm:$0xff]
  %v5093 = vld [vmem:[%s0 + $0x1c2] sm:$0xff]
  %v5094 = vld [vmem:[%s0 + $0x1ca] sm:$0xff]
  %v5095 = vld [vmem:[%s0 + $0x1d2] sm:$0xff]
  %v5096 = vld [vmem:[%s0 + $0x1da] sm:$0xff]
  %v5097 = vld [vmem:[%s0 + $0x1e2] sm:$0xff]
  %v5098 = vld [vmem:[%s0 + $0x1ea] sm:$0xff]
  %v5099 = vld [vmem:[%s0 + $0x1f2] sm:$0xff]
  %v5100 = vld [vmem:[%s0 + $0x1fa] sm:$0xff]
  %v5101 = vld [vmem:[%s0 + $0x202] sm:$0xff]
  %v5102 = vld [vmem:[%s0 + $0x20a] sm:$0xff]
  %v5103 = vld [vmem:[%s0 + $0x212] sm:$0xff]
  %v5104 = vld [vmem:[%s0 + $0x21a] sm:$0xff]
  %v5106 = vsel %vm57, %v5089, 0
  %v5109 = vsel %vm57, %v5090, 0
  %v5112 = vsel %vm57, %v5091, 0
  %v5115 = vsel %vm57, %v5092, 0
  %v5118 = vsel %vm57, %v5093, 0
  %v5121 = vsel %vm57, %v5094, 0
  %v5124 = vsel %vm57, %v5095, 0
  %v5127 = vsel %vm57, %v5096, 0
  %v5130 = vsel %vm57, %v5097, 0
  %v5133 = vsel %vm57, %v5098, 0
  %v5136 = vsel %vm57, %v5099, 0
  %v5139 = vsel %vm57, %v5100, 0
  %v5142 = vsel %vm57, %v5101, 0
  %v5145 = vsel %vm57, %v5102, 0
  %v5148 = vsel %vm57, %v5103, 0
  %v5151 = vsel %vm57, %v5104, 0
  %5153 = vmatprep.subr.mxu0 0.0
  %5154 = vmatpush1.xpose.msra.mxu0 %v5106
  %5155 = vmatprep.subr.mxu0 0.0
  %5156 = vmatpush1.xpose.msra.mxu0 %v5109
  %5157 = vmatprep.subr.mxu0 0.0
  %5158 = vmatpush1.xpose.msra.mxu0 %v5112
  %5159 = vmatprep.subr.mxu0 0.0
  %5160 = vmatpush1.xpose.msra.mxu0 %v5115
  %5161 = vmatprep.subr.mxu0 0.0
  %5162 = vmatpush1.xpose.msra.mxu0 %v5118
  %5163 = vmatprep.subr.mxu0 0.0
  %5164 = vmatpush1.xpose.msra.mxu0 %v5121
  %5165 = vmatprep.subr.mxu0 0.0
  %5166 = vmatpush1.xpose.msra.mxu0 %v5124
  %5167 = vmatprep.subr.mxu0 0.0
  %5168 = vmatpush1.xpose.msra.mxu0 %v5127
  %5169 = vmatprep.subr.mxu0 0.0
  %5170 = vmatpush1.xpose.msra.mxu0 %v5130
  %5171 = vmatprep.subr.mxu0 0.0
  %5172 = vmatpush1.xpose.msra.mxu0 %v5133
  %5173 = vmatprep.subr.mxu0 0.0
  %5174 = vmatpush1.xpose.msra.mxu0 %v5136
  %5175 = vmatprep.subr.mxu0 0.0
  %5176 = vmatpush1.xpose.msra.mxu0 %v5139
  %5177 = vmatprep.subr.mxu0 0.0
  %5178 = vmatpush1.xpose.msra.mxu0 %v5142
  %5179 = vmatprep.subr.mxu0 0.0
  %5180 = vmatpush1.xpose.msra.mxu0 %v5145
  %5181 = vmatprep.subr.mxu0 0.0
  %5182 = vmatpush1.xpose.msra.mxu0 %v5148
  %5183 = vmatprep.subr.mxu0 0.0
  %5184 = vmatpush1.xpose.msra.mxu0 %v5151
  %5185 = vmatprep.subr.mxu0 0.0
  %5186 = vmatpush1.xpose.msra.mxu0 0.0
  %5187 = vmatprep.subr.mxu0 0.0
  %5188 = vmatpush1.xpose.msra.mxu0 0.0
  %5189 = vmatprep.subr.mxu0 0.0
  %5190 = vmatpush1.xpose.msra.mxu0 0.0
  %5191 = vmatprep.subr.mxu0 0.0
  %5192 = vmatpush1.xpose.msra.mxu0 0.0
  %5193 = vmatprep.subr.mxu0 0.0
  %5194 = vmatpush1.xpose.msra.mxu0 0.0
  %5195 = vmatprep.subr.mxu0 0.0
  %5196 = vmatpush1.xpose.msra.mxu0 0.0
  %5197 = vmatprep.subr.mxu0 0.0
  %5198 = vmatpush1.xpose.msra.mxu0 0.0
  %5199 = vmatprep.subr.mxu0 0.0
  %5200 = vmatpush1.xpose.msra.mxu0 0.0
  %5201 = vmatprep.subr.mxu0 0.0
  %5202 = vmatpush1.xpose.msra.mxu0 0.0
  %5203 = vmatprep.subr.mxu0 0.0
  %5204 = vmatpush1.xpose.msra.mxu0 0.0
  %5205 = vmatprep.subr.mxu0 0.0
  %5206 = vmatpush1.xpose.msra.mxu0 0.0
  %5207 = vmatprep.subr.mxu0 0.0
  %5208 = vmatpush1.xpose.msra.mxu0 0.0
  %5209 = vmatprep.subr.mxu0 0.0
  %5210 = vmatpush1.xpose.msra.mxu0 0.0
  %5211 = vmatprep.subr.mxu0 0.0
  %5212 = vmatpush1.xpose.msra.mxu0 0.0
  %5213 = vmatprep.subr.mxu0 0.0
  %5214 = vmatpush1.xpose.msra.mxu0 0.0
  %5215 = vmatprep.subr.mxu0 0.0
  %5216 = vmatpush1.xpose.msra.mxu0 0.0
  %5217 = vmatprep.mubr.f32.mxu0 0.0
  %5218 = vmatmul.mubr.f32.gmra.mrb[0].mxu0 %v1236
  %v5219 = vpop.f32.mrb[0].mxu0
  %v5220 = vadd.f32 0.0, %v5219
  %v5221 = vpop.f32.mrb[0].mxu0
  %5222 = vmatprep.mubr.f32.mxu0 0.0
  %5223 = vmatmul.mubr.f32.gmra.mrb[0].mxu0 %v1239
  %v5224 = vpop.f32.mrb[0].mxu0
  %v5225 = vadd.f32 0.0, %v5224
  %v5226 = vpop.f32.mrb[0].mxu0
  %5227 = vdwg.mxu0
  %v5228 = vadd.f32 %v5087, %v5220
  %v5229 = vadd.f32 %v5088, %v5225
  %v5230 = vld [vmem:[%s4 + $0x3] sm:$0x1]
  %v5232 = vlaneseq
  %v5233 = vshrl.u32 %v5232, 7
  %v5234 = vsub.s32 0, %v5233
  %v5235 = vrot.slane %v5230, %v5234
  %v5237 = vmul.f32 %v5228, %v5235
  %v5238 = vmul.f32 %v5229, %v5235
  %5239 = vadd.xlane.f32.xlu0 %v5237
  %v5240 = vpop.xlane.xlu0 %5239
  %5241 = vadd.xlane.f32.xlu0 %v5238
  %v5242 = vpop.xlane.xlu0 %5241
  %v5243 = vadd.f32 %v3955, %v5240
  %v5244 = vadd.f32 %v3956, %v5242
  %v5245 = vmul.f32 %v5237, %v5228
  %v5246 = vmul.f32 %v5238, %v5229
  %5247 = vadd.xlane.f32.xlu0 %v5245
  %v5248 = vpop.xlane.xlu0 %5247
  %5249 = vadd.xlane.f32.xlu0 %v5246
  %v5250 = vpop.xlane.xlu0 %5249
  %v5251 = vadd.f32 %v3963, %v5248
  %v5252 = vadd.f32 %v3964, %v5250
  %v5253 = vmul.f32 %v5243, 0.0025510204
  %v5254 = vmul.f32 %v5244, 0.0025510204
  %v5255 = vmul.f32 %v5251, 0.0025510204
  %v5256 = vmul.f32 %v5252, 0.0025510204
  %v5257 = vmul.f32 %v5253, %v5253
  %v5258 = vmul.f32 %v5254, %v5254
  %v5259 = vsub.f32 %v5255, %v5257
  %v5260 = vsub.f32 %v5256, %v5258
  %v5261 = vmax.f32 %v5259, 0.0
  %v5262 = vmax.f32 %v5260, 0.0
  %v5263 = vld [vmem:[%s2] sm:$0xff]
  %v5264 = vld [vmem:[%s2 + $0x8] sm:$0xff]
  %v5265 = vadd.f32 %v5261, 1e-05
  %v5266 = vadd.f32 %v5262, 1e-05
  %v5267 = vrsqrt.pop %v5265
  %v5268 = vrsqrt.pop %v5266
  %v5269 = vmul.f32 %v5263, %v5267
  %v5270 = vmul.f32 %v5264, %v5268
  %v5271 = vld [vmem:[%s3] sm:$0xff]
  %v5272 = vld [vmem:[%s3 + $0x8] sm:$0xff]
  %v5273 = vmul.f32 %v5253, %v5269
  %v5274 = vmul.f32 %v5254, %v5270
  %v5275 = vsub.f32 %v5271, %v5273
  %v5276 = vsub.f32 %v5272, %v5274
  %5278 = vset.pattern.permute.xlu0 0
  %5279 = vperm.xlu0 %5278, %v5269
  %v5280 = vpop.permute.xlu0 %5279
  %5283 = vset.pattern.permute.xlu0 0
  %5284 = vperm.xlu0 %5283, %v5270
  %v5285 = vpop.permute.xlu0 %5284
  %v5287 = vmul.f32 %v1364, %v5280
  %v5288 = vmul.f32 %v1365, %v5285
  %5290 = vset.pattern.permute.xlu0 0
  %5291 = vperm.xlu0 %5290, %v5275
  %v5292 = vpop.permute.xlu0 %5291
  %5295 = vset.pattern.permute.xlu0 0
  %5296 = vperm.xlu0 %5295, %v5276
  %v5297 = vpop.permute.xlu0 %5296
  %v5299 = vadd.f32 %v5287, %v5292
  %v5300 = vadd.f32 %v5288, %v5297
  %v5301 = vmax.f32 %v5299, 0.0
  %v5302 = vmax.f32 %v5300, 0.0
  %5303 = vst [vmem:[%s5] sm:$0xff] %v5301
  %5304 = vst [vmem:[%s5 + $0x20] sm:$0xff] %v5302
  %v5305 = vmul.f32 %v2652, %v5280
  %v5306 = vmul.f32 %v2653, %v5285
  %v5307 = vadd.f32 %v5305, %v5292
  %v5308 = vadd.f32 %v5306, %v5297
  %v5309 = vmax.f32 %v5307, 0.0
  %v5310 = vmax.f32 %v5308, 0.0
  %5311 = vst [vmem:[%s5 + $0x8] sm:$0xff] %v5309
  %5312 = vst [vmem:[%s5 + $0x28] sm:$0xff] %v5310
  %v5313 = vmul.f32 %v3940, %v5280
  %v5314 = vmul.f32 %v3941, %v5285
  %v5315 = vadd.f32 %v5313, %v5292
  %v5316 = vadd.f32 %v5314, %v5297
  %v5317 = vmax.f32 %v5315, 0.0
  %v5318 = vmax.f32 %v5316, 0.0
  %5319 = vst [vmem:[%s5 + $0x10] sm:$0xff] %v5317
  %5320 = vst [vmem:[%s5 + $0x30] sm:$0xff] %v5318
  %v5321 = vmul.f32 %v5228, %v5280
  %v5322 = vmul.f32 %v5229, %v5285
  %v5323 = vadd.f32 %v5321, %v5292
  %v5324 = vadd.f32 %v5322, %v5297
  %v5325 = vmax.f32 %v5323, 0.0
  %v5326 = vmax.f32 %v5324, 0.0
  %5327 = vst [vmem:[%s5 + $0x18] sm:$0xff] %v5325
  %5328 = vst [vmem:[%s5 + $0x38] sm:$0xff] %v5326
  // Predicated region
  $region22: #{conv_bn_relu.1} parent=0 // pred_check
    _
  $region23: #{conv_bn_relu.1} parent=0 // pred_check_branch
    %5330 = sbr.rel (0) target = $region25
  $region24: #{conv_bn_relu.1} parent=0 // pred_region
    _
  $region25: #{conv_bn_relu.1} parent=0 // pred_fallthru
    _
  // Predicated region
  $region26: #{conv_bn_relu.1} parent=0 // pred_check
    _
  $region27: #{conv_bn_relu.1} parent=0 // pred_check_branch
    %5332 = sbr.rel (0) target = $region29
  $region28: #{conv_bn_relu.1} parent=0 // pred_region
    _
  $region29: #{conv_bn_relu.1} parent=0 // pred_fallthru
    _

</llo_original>
